<compile_context>
chip_gen: v5e
topology: v5e:2x2
jax: 0.10.0
libtpu: 0.0.40
codegen_flags: <defaults>
</compile_context>

<pallas_src>
import functools

import jax
import jax.numpy as jnp
from jax.experimental import pallas as pl
from jax.experimental.pallas import tpu as pltpu


# -----------------------------------------------------------------------------
# Fused TemporalBlock kernel: one grid step == one batch element.
# -----------------------------------------------------------------------------
def _temporal_block_kernel(*refs, dilation, K, num_heads, has_downsample):
    if has_downsample:
        (x_ref, w1_ref, b1_ref, w2_ref, b2_ref, wd_ref, bd_ref,
         wqT_ref, wkT_ref, wvT_ref, bq_ref, bk_ref, bv_ref, woT_ref, bo_ref,
         o_ref, cat1_ref, cat2_ref, ctx_ref) = refs
    else:
        (x_ref, w1_ref, b1_ref, w2_ref, b2_ref,
         wqT_ref, wkT_ref, wvT_ref, bq_ref, bk_ref, bv_ref, woT_ref, bo_ref,
         o_ref, cat1_ref, cat2_ref, ctx_ref) = refs
        wd_ref = bd_ref = None

    Nb, L, Cin = x_ref.shape              # Nb == 1 (one batch element per grid step)
    Cout = o_ref.shape[2]
    hd = Cout // num_heads
    scale = 1.0 / float(hd) ** 0.5

    # --- causal dilated conv collapsed into a single MXU dot ------------------
    # cat[:, t, k*C:(k+1)*C] = src[:, t - (K-1-k)*dilation, :]  (zero when t < shift)
    # which is exactly Conv1d(padding=(K-1)*dilation) followed by Chomp.
    def pack_taps(cat_ref, src_3d, C):
        cat_ref[...] = jnp.zeros(cat_ref.shape, cat_ref.dtype)
        for k in range(K):                               # K is tiny and static
            shift = (K - 1 - k) * dilation
            if shift < L:
                cat_ref[:, shift:, k * C:(k + 1) * C] = (
                    src_3d[:, :L - shift, :].astype(cat_ref.dtype))

    def conv_matmul(cat_ref, w_ref, b_ref):
        lhs = cat_ref[...].reshape(Nb * L, cat_ref.shape[2]).astype(jnp.bfloat16)
        acc = jnp.dot(lhs, w_ref[...], preferred_element_type=jnp.float32)
        return acc + b_ref[...].astype(jnp.float32)      # (L, Cout) f32

    x = x_ref[...].astype(jnp.float32)                   # (1, L, Cin)

    # conv1 -> chomp -> ReLU   (dropout == identity at inference)
    pack_taps(cat1_ref, x, Cin)
    h = jnp.maximum(conv_matmul(cat1_ref, w1_ref, b1_ref), 0.0)      # (L, Cout)

    # conv2 -> chomp -> ReLU
    pack_taps(cat2_ref, h.reshape(Nb, L, Cout), Cout)
    h = jnp.maximum(conv_matmul(cat2_ref, w2_ref, b2_ref), 0.0)      # (L, Cout)

    # --- residual path ---------------------------------------------------------
    if has_downsample:
        res = jnp.dot(x.reshape(Nb * L, Cin).astype(jnp.bfloat16), wd_ref[...],
                      preferred_element_type=jnp.float32)
        res = res + bd_ref[...].astype(jnp.float32)
    else:
        res = x.reshape(Nb * L, Cin)                     # Cin == Cout here

    # --- multi-head self-attention (q = k = v = h) ------------------------------
    hb = h.astype(jnp.bfloat16)
    q = jnp.dot(hb, wqT_ref[...], preferred_element_type=jnp.float32)
    q = (q + bq_ref[...].astype(jnp.float32)) * scale
    k = jnp.dot(hb, wkT_ref[...], preferred_element_type=jnp.float32)
    k = k + bk_ref[...].astype(jnp.float32)
    v = jnp.dot(hb, wvT_ref[...], preferred_element_type=jnp.float32)
    v = v + bv_ref[...].astype(jnp.float32)
    q3 = q.reshape(Nb, L, Cout)
    k3 = k.reshape(Nb, L, Cout)
    v3 = v.reshape(Nb, L, Cout)

    # TODO(synk): for long sequences, tile this over key/value blocks with an
    # online softmax so the (L, L) score matrix never fully materializes
    # (required to stay inside v7x's 64 MiB VMEM at large L).
    for hi in range(num_heads):                          # static, small head loop
        sl = slice(hi * hd, (hi + 1) * hd)
        qh = q3[:, :, sl].astype(jnp.bfloat16)
        kh = k3[:, :, sl].astype(jnp.bfloat16)
        vh = v3[:, :, sl].astype(jnp.bfloat16)
        scores = jnp.einsum('nld,nmd->nlm', qh, kh,
                            preferred_element_type=jnp.float32)      # (1, L, L) f32
        m = jnp.max(scores, axis=-1, keepdims=True)
        e = jnp.exp(scores - m)
        denom = jnp.sum(e, axis=-1, keepdims=True)
        p = e * pl.reciprocal(denom, approx=True)                    # EUP, not VALU
        ctx = jnp.einsum('nlm,nmd->nld', p.astype(jnp.bfloat16), vh,
                         preferred_element_type=jnp.float32)         # (1, L, hd)
        ctx_ref[:, :, sl] = ctx.astype(ctx_ref.dtype)

    # single full-width out-projection over all heads (heads are contiguous in C)
    attn = jnp.dot(ctx_ref[...].reshape(Nb * L, Cout).astype(jnp.bfloat16),
                   woT_ref[...], preferred_element_type=jnp.float32)
    attn = attn + bo_ref[...].astype(jnp.float32)

    out = jnp.maximum(attn + res, 0.0)
    o_ref[...] = out.reshape(Nb, L, Cout).astype(o_ref.dtype)


# -----------------------------------------------------------------------------
# Wrapper: one fused pallas_call per TemporalBlock, gridded over the batch.
# -----------------------------------------------------------------------------
def temporal_block(x_nlc, p, *, dilation, num_heads, kernel_size):
    """x_nlc: (N, L, Cin); returns (N, L, Cout)."""
    N, L, Cin = x_nlc.shape
    K = kernel_size
    Cout = p['b1'].shape[-1]
    has_ds = p['wd'] is not None
    bf16 = jnp.bfloat16

    # Flatten conv weights to (K*Cin, Cout) and pre-cast all matmul weights to bf16.
    w1f = p['w1'].reshape(K * Cin, Cout).astype(bf16)
    w2f = p['w2'].reshape(K * Cout, Cout).astype(bf16)

    inputs = [x_nlc, w1f, p['b1'], w2f, p['b2']]
    if has_ds:
        inputs += [p['wd'].reshape(Cin, Cout).astype(bf16), p['bd']]
    inputs += [p['wqT'].astype(bf16), p['wkT'].astype(bf16), p['wvT'].astype(bf16),
               p['bq'], p['bk'], p['bv'], p['woT'].astype(bf16), p['bo']]

    def resident(a):  # full-array block, same block every grid step -> stays in VMEM
        nd = a.ndim
        return pl.BlockSpec(a.shape, lambda n, _nd=nd: (0,) * _nd)

    in_specs = [pl.BlockSpec((1, L, Cin), lambda n: (n, 0, 0))]
    in_specs += [resident(a) for a in inputs[1:]]

    kernel = functools.partial(
        _temporal_block_kernel, dilation=dilation, K=K,
        num_heads=num_heads, has_downsample=has_ds)

    return pl.pallas_call(
        kernel,
        out_shape=jax.ShapeDtypeStruct((N, L, Cout), x_nlc.dtype),
        grid=(N,),
        in_specs=in_specs,
        out_specs=pl.BlockSpec((1, L, Cout), lambda n: (n, 0, 0)),
        scratch_shapes=[
            pltpu.VMEM((1, L, K * Cin), jnp.float32),    # conv1 packed taps (causal pad)
            pltpu.VMEM((1, L, K * Cout), jnp.float32),   # conv2 packed taps
            pltpu.VMEM((1, L, Cout), jnp.float32),       # attention context, all heads
        ],
        compiler_params=pltpu.CompilerParams(
            dimension_semantics=("parallel",)),          # shard batch across TCs (v7x)
    )(*inputs)


def temporal_conv_net(x_ncl, params, *, num_heads=4, kernel_size=2):
    # x_ncl: PyTorch layout (N, C, L)
    x = jnp.transpose(x_ncl, (0, 2, 1))                  # -> (N, L, C)
    for i, p in enumerate(params):
        x = temporal_block(x, p, dilation=2 ** i,
                           num_heads=num_heads, kernel_size=kernel_size)
    return jnp.transpose(x, (0, 2, 1))                   # -> (N, C, L)


# -----------------------------------------------------------------------------
# Deterministic synthetic parameters; shapes mirror the nn.Module's own.
# -----------------------------------------------------------------------------
def init_params(key, num_inputs, num_channels, kernel_size=2):
    params = []
    for i, cout in enumerate(num_channels):
        cin = num_inputs if i == 0 else num_channels[i - 1]
        key, *ks = jax.random.split(key, 11)
        p = {}
        # Conv1d weights: torch (Cout, Cin, K) stored here as (K, Cin, Cout).
        p['w1'] = jax.random.normal(ks[0], (kernel_size, cin, cout), jnp.float32) * 0.3
        p['b1'] = jax.random.normal(ks[1], (1, cout), jnp.float32) * 0.05
        p['w2'] = jax.random.normal(ks[2], (kernel_size, cout, cout), jnp.float32) * 0.3
        p['b2'] = jax.random.normal(ks[3], (1, cout), jnp.float32) * 0.05
        # MultiheadAttention: in_proj_weight (3C, C), in_proj_bias (3C,),
        # out_proj weight (C, C), bias (C,).  Pre-transposed for h @ W^T matmuls.
        in_w = jax.random.normal(ks[4], (3 * cout, cout), jnp.float32) * 0.2
        in_b = jax.random.normal(ks[5], (3 * cout,), jnp.float32) * 0.05
        wo = jax.random.normal(ks[6], (cout, cout), jnp.float32) * 0.2
        bo = jax.random.normal(ks[7], (cout,), jnp.float32) * 0.05
        p['wqT'] = in_w[:cout].T
        p['wkT'] = in_w[cout:2 * cout].T
        p['wvT'] = in_w[2 * cout:].T
        p['bq'] = in_b[:cout].reshape(1, cout)
        p['bk'] = in_b[cout:2 * cout].reshape(1, cout)
        p['bv'] = in_b[2 * cout:].reshape(1, cout)
        p['woT'] = wo.T
        p['bo'] = bo.reshape(1, cout)
        # downsample 1x1 conv only when channel counts differ
        if cin != cout:
            p['wd'] = jax.random.normal(ks[8], (1, cin, cout), jnp.float32) * 0.3
            p['bd'] = jax.random.normal(ks[9], (1, cout), jnp.float32) * 0.05
        else:
            p['wd'] = None
            p['bd'] = None
        params.append(p)
    return params


if __name__ == "__main__":
    key = jax.random.PRNGKey(0)
    kx, kp = jax.random.split(key)

    # Small shapes consistent with the module: batch=2, num_inputs=4, seq=16,
    # num_channels=[16, 16] (embed_dim must be divisible by num_heads=4).
    N, C_in, L = 2, 4, 16
    num_channels = [16, 16]

    x = jax.random.normal(kx, (N, C_in, L), jnp.float32)   # PyTorch NCL layout
    params = init_params(kp, C_in, num_channels, kernel_size=2)

    # TODO(synk): nn.Dropout (p=0.2) is implemented as identity (inference mode);
    # training-time random masking is not reproduced.
    fwd = jax.jit(functools.partial(temporal_conv_net, num_heads=4, kernel_size=2))
    out = fwd(x, params)
    out = jax.block_until_ready(out)
    assert out.shape == (N, num_channels[-1], L), out.shape
    assert bool(jnp.all(jnp.isfinite(out)))
    print("KERNEL_OK")
</pallas_src>

<mosaic_0001>
module attributes {stable_mosaic.version = 11 : i64} {
  func.func @_temporal_block_kernel(%arg0: i32, %arg1: memref<1x16x16xf32, #tpu.memory_space<vmem>>, %arg2: memref<32x16xbf16, #tpu.memory_space<vmem>>, %arg3: memref<1x16xf32, #tpu.memory_space<vmem>>, %arg4: memref<32x16xbf16, #tpu.memory_space<vmem>>, %arg5: memref<1x16xf32, #tpu.memory_space<vmem>>, %arg6: memref<16x16xbf16, #tpu.memory_space<vmem>>, %arg7: memref<16x16xbf16, #tpu.memory_space<vmem>>, %arg8: memref<16x16xbf16, #tpu.memory_space<vmem>>, %arg9: memref<1x16xf32, #tpu.memory_space<vmem>>, %arg10: memref<1x16xf32, #tpu.memory_space<vmem>>, %arg11: memref<1x16xf32, #tpu.memory_space<vmem>>, %arg12: memref<16x16xbf16, #tpu.memory_space<vmem>>, %arg13: memref<1x16xf32, #tpu.memory_space<vmem>>, %arg14: memref<1x16x16xf32, #tpu.memory_space<vmem>>, %arg15: memref<1x16x32xf32, #tpu.memory_space<vmem>>, %arg16: memref<1x16x32xf32, #tpu.memory_space<vmem>>, %arg17: memref<1x16x16xf32, #tpu.memory_space<vmem>>) attributes {dimension_semantics = [#tpu.dimension_semantics<parallel>], iteration_bounds = array<i64: 2>, scalar_prefetch = 0 : i64, scratch_operands = 3 : i64, tpu.core_type = #tpu.core_type<tc>, window_params = [{transform_indices = @transform_0, window_bounds = array<i64: 1, 16, 16>}, {pipeline_mode = #tpu.pipeline_mode<synchronous>, transform_indices = @transform_1, window_bounds = array<i64: 32, 16>}, {pipeline_mode = #tpu.pipeline_mode<synchronous>, transform_indices = @transform_2, window_bounds = array<i64: 1, 16>}, {pipeline_mode = #tpu.pipeline_mode<synchronous>, transform_indices = @transform_3, window_bounds = array<i64: 32, 16>}, {pipeline_mode = #tpu.pipeline_mode<synchronous>, transform_indices = @transform_4, window_bounds = array<i64: 1, 16>}, {pipeline_mode = #tpu.pipeline_mode<synchronous>, transform_indices = @transform_5, window_bounds = array<i64: 16, 16>}, {pipeline_mode = #tpu.pipeline_mode<synchronous>, transform_indices = @transform_6, window_bounds = array<i64: 16, 16>}, {pipeline_mode = #tpu.pipeline_mode<synchronous>, transform_indices = @transform_7, window_bounds = array<i64: 16, 16>}, {pipeline_mode = #tpu.pipeline_mode<synchronous>, transform_indices = @transform_8, window_bounds = array<i64: 1, 16>}, {pipeline_mode = #tpu.pipeline_mode<synchronous>, transform_indices = @transform_9, window_bounds = array<i64: 1, 16>}, {pipeline_mode = #tpu.pipeline_mode<synchronous>, transform_indices = @transform_10, window_bounds = array<i64: 1, 16>}, {pipeline_mode = #tpu.pipeline_mode<synchronous>, transform_indices = @transform_11, window_bounds = array<i64: 16, 16>}, {pipeline_mode = #tpu.pipeline_mode<synchronous>, transform_indices = @transform_12, window_bounds = array<i64: 1, 16>}, {transform_indices = @transform_13, window_bounds = array<i64: 1, 16, 16>}]} {
    %c0 = arith.constant 0 : index
    %c0_0 = arith.constant 0 : index
    %c0_1 = arith.constant 0 : index
    %0 = vector.load %arg1[%c0, %c0_0, %c0_1] : memref<1x16x16xf32, #tpu.memory_space<vmem>>, vector<1x16x16xf32>
    %cst = arith.constant 0.000000e+00 : f32
    %1 = vector.broadcast %cst : f32 to vector<1x16x32xf32>
    %c0_2 = arith.constant 0 : index
    %c0_3 = arith.constant 0 : index
    %c0_4 = arith.constant 0 : index
    %2 = vector.load %arg15[%c0_2, %c0_3, %c0_4] : memref<1x16x32xf32, #tpu.memory_space<vmem>>, vector<1x16x32xf32>
    tpu.vector_store %arg15[%c0_2, %c0_3, %c0_4], %1 {strides = array<i32>} : memref<1x16x32xf32, #tpu.memory_space<vmem>>, vector<1x16x32xf32>,
    %3 = vector.extract_strided_slice %0 {offsets = [0, 0, 0], sizes = [1, 14, 16], strides = [1, 1, 1]} : vector<1x16x16xf32> to vector<1x14x16xf32>
    %c0_5 = arith.constant 0 : index
    %c2 = arith.constant 2 : index
    %c0_6 = arith.constant 0 : index
    %4 = vector.load %arg15[%c0_5, %c2, %c0_6] : memref<1x16x32xf32, #tpu.memory_space<vmem>>, vector<1x14x16xf32>
    tpu.vector_store %arg15[%c0_5, %c2, %c0_6], %3 {strides = array<i32>} : memref<1x16x32xf32, #tpu.memory_space<vmem>>, vector<1x14x16xf32>,
    %c0_7 = arith.constant 0 : index
    %c0_8 = arith.constant 0 : index
    %c16 = arith.constant 16 : index
    %5 = vector.load %arg15[%c0_7, %c0_8, %c16] : memref<1x16x32xf32, #tpu.memory_space<vmem>>, vector<1x16x16xf32>
    tpu.vector_store %arg15[%c0_7, %c0_8, %c16], %0 {strides = array<i32>} : memref<1x16x32xf32, #tpu.memory_space<vmem>>, vector<1x16x16xf32>,
    %c0_9 = arith.constant 0 : index
    %c0_10 = arith.constant 0 : index
    %c0_11 = arith.constant 0 : index
    %6 = vector.load %arg15[%c0_9, %c0_10, %c0_11] : memref<1x16x32xf32, #tpu.memory_space<vmem>>, vector<1x16x32xf32>
    %7 = vector.shape_cast %6 : vector<1x16x32xf32> to vector<16x32xf32>
    %8 = arith.truncf %7 : vector<16x32xf32> to vector<16x32xbf16>
    %c0_12 = arith.constant 0 : index
    %c0_13 = arith.constant 0 : index
    %9 = vector.load %arg2[%c0_12, %c0_13] : memref<32x16xbf16, #tpu.memory_space<vmem>>, vector<32x16xbf16>
    %cst_14 = arith.constant dense<0.000000e+00> : vector<16x16xf32>
    %10 = tpu.matmul %8, %9, %cst_14 {dimension_numbers = #tpu.dot_dimension_numbers<[1], [0], [0], [1], [0, 0, 1, 1], [], []>} : vector<16x32xbf16>, vector<32x16xbf16>, vector<16x16xf32> -> vector<16x16xf32>
    %c0_15 = arith.constant 0 : index
    %c0_16 = arith.constant 0 : index
    %11 = vector.load %arg3[%c0_15, %c0_16] : memref<1x16xf32, #tpu.memory_space<vmem>>, vector<1x16xf32>
    %12 = vector.broadcast %11 : vector<1x16xf32> to vector<16x16xf32>
    %13 = arith.addf %10, %12 : vector<16x16xf32>
    %cst_17 = arith.constant 0.000000e+00 : f32
    %14 = vector.broadcast %cst_17 : f32 to vector<16x16xf32>
    %15 = arith.maximumf %13, %14 : vector<16x16xf32>
    %16 = vector.shape_cast %15 : vector<16x16xf32> to vector<1x16x16xf32>
    %cst_18 = arith.constant 0.000000e+00 : f32
    %17 = vector.broadcast %cst_18 : f32 to vector<1x16x32xf32>
    %c0_19 = arith.constant 0 : index
    %c0_20 = arith.constant 0 : index
    %c0_21 = arith.constant 0 : index
    %18 = vector.load %arg16[%c0_19, %c0_20, %c0_21] : memref<1x16x32xf32, #tpu.memory_space<vmem>>, vector<1x16x32xf32>
    tpu.vector_store %arg16[%c0_19, %c0_20, %c0_21], %17 {strides = array<i32>} : memref<1x16x32xf32, #tpu.memory_space<vmem>>, vector<1x16x32xf32>,
    %19 = vector.extract_strided_slice %16 {offsets = [0, 0, 0], sizes = [1, 14, 16], strides = [1, 1, 1]} : vector<1x16x16xf32> to vector<1x14x16xf32>
    %c0_22 = arith.constant 0 : index
    %c2_23 = arith.constant 2 : index
    %c0_24 = arith.constant 0 : index
    %20 = vector.load %arg16[%c0_22, %c2_23, %c0_24] : memref<1x16x32xf32, #tpu.memory_space<vmem>>, vector<1x14x16xf32>
    tpu.vector_store %arg16[%c0_22, %c2_23, %c0_24], %19 {strides = array<i32>} : memref<1x16x32xf32, #tpu.memory_space<vmem>>, vector<1x14x16xf32>,
    %c0_25 = arith.constant 0 : index
    %c0_26 = arith.constant 0 : index
    %c16_27 = arith.constant 16 : index
    %21 = vector.load %arg16[%c0_25, %c0_26, %c16_27] : memref<1x16x32xf32, #tpu.memory_space<vmem>>, vector<1x16x16xf32>
    tpu.vector_store %arg16[%c0_25, %c0_26, %c16_27], %16 {strides = array<i32>} : memref<1x16x32xf32, #tpu.memory_space<vmem>>, vector<1x16x16xf32>,
    %c0_28 = arith.constant 0 : index
    %c0_29 = arith.constant 0 : index
    %c0_30 = arith.constant 0 : index
    %22 = vector.load %arg16[%c0_28, %c0_29, %c0_30] : memref<1x16x32xf32, #tpu.memory_space<vmem>>, vector<1x16x32xf32>
    %23 = vector.shape_cast %22 : vector<1x16x32xf32> to vector<16x32xf32>
    %24 = arith.truncf %23 : vector<16x32xf32> to vector<16x32xbf16>
    %c0_31 = arith.constant 0 : index
    %c0_32 = arith.constant 0 : index
    %25 = vector.load %arg4[%c0_31, %c0_32] : memref<32x16xbf16, #tpu.memory_space<vmem>>, vector<32x16xbf16>
    %cst_33 = arith.constant dense<0.000000e+00> : vector<16x16xf32>
    %26 = tpu.matmul %24, %25, %cst_33 {dimension_numbers = #tpu.dot_dimension_numbers<[1], [0], [0], [1], [0, 0, 1, 1], [], []>} : vector<16x32xbf16>, vector<32x16xbf16>, vector<16x16xf32> -> vector<16x16xf32>
    %c0_34 = arith.constant 0 : index
    %c0_35 = arith.constant 0 : index
    %27 = vector.load %arg5[%c0_34, %c0_35] : memref<1x16xf32, #tpu.memory_space<vmem>>, vector<1x16xf32>
    %28 = vector.broadcast %27 : vector<1x16xf32> to vector<16x16xf32>
    %29 = arith.addf %26, %28 : vector<16x16xf32>
    %cst_36 = arith.constant 0.000000e+00 : f32
    %30 = vector.broadcast %cst_36 : f32 to vector<16x16xf32>
    %31 = arith.maximumf %29, %30 : vector<16x16xf32>
    %32 = vector.shape_cast %0 : vector<1x16x16xf32> to vector<16x16xf32>
    %33 = arith.truncf %31 : vector<16x16xf32> to vector<16x16xbf16>
    %c0_37 = arith.constant 0 : index
    %c0_38 = arith.constant 0 : index
    %34 = vector.load %arg6[%c0_37, %c0_38] : memref<16x16xbf16, #tpu.memory_space<vmem>>, vector<16x16xbf16>
    %cst_39 = arith.constant dense<0.000000e+00> : vector<16x16xf32>
    %35 = tpu.matmul %33, %34, %cst_39 {dimension_numbers = #tpu.dot_dimension_numbers<[1], [0], [0], [1], [0, 0, 1, 1], [], []>} : vector<16x16xbf16>, vector<16x16xbf16>, vector<16x16xf32> -> vector<16x16xf32>
    %c0_40 = arith.constant 0 : index
    %c0_41 = arith.constant 0 : index
    %36 = vector.load %arg9[%c0_40, %c0_41] : memref<1x16xf32, #tpu.memory_space<vmem>>, vector<1x16xf32>
    %37 = vector.broadcast %36 : vector<1x16xf32> to vector<16x16xf32>
    %38 = arith.addf %35, %37 : vector<16x16xf32>
    %cst_42 = arith.constant 5.000000e-01 : f32
    %39 = vector.broadcast %cst_42 : f32 to vector<16x16xf32>
    %40 = arith.mulf %38, %39 : vector<16x16xf32>
    %c0_43 = arith.constant 0 : index
    %c0_44 = arith.constant 0 : index
    %41 = vector.load %arg7[%c0_43, %c0_44] : memref<16x16xbf16, #tpu.memory_space<vmem>>, vector<16x16xbf16>
    %cst_45 = arith.constant dense<0.000000e+00> : vector<16x16xf32>
    %42 = tpu.matmul %33, %41, %cst_45 {dimension_numbers = #tpu.dot_dimension_numbers<[1], [0], [0], [1], [0, 0, 1, 1], [], []>} : vector<16x16xbf16>, vector<16x16xbf16>, vector<16x16xf32> -> vector<16x16xf32>
    %c0_46 = arith.constant 0 : index
    %c0_47 = arith.constant 0 : index
    %43 = vector.load %arg10[%c0_46, %c0_47] : memref<1x16xf32, #tpu.memory_space<vmem>>, vector<1x16xf32>
    %44 = vector.broadcast %43 : vector<1x16xf32> to vector<16x16xf32>
    %45 = arith.addf %42, %44 : vector<16x16xf32>
    %c0_48 = arith.constant 0 : index
    %c0_49 = arith.constant 0 : index
    %46 = vector.load %arg8[%c0_48, %c0_49] : memref<16x16xbf16, #tpu.memory_space<vmem>>, vector<16x16xbf16>
    %cst_50 = arith.constant dense<0.000000e+00> : vector<16x16xf32>
    %47 = tpu.matmul %33, %46, %cst_50 {dimension_numbers = #tpu.dot_dimension_numbers<[1], [0], [0], [1], [0, 0, 1, 1], [], []>} : vector<16x16xbf16>, vector<16x16xbf16>, vector<16x16xf32> -> vector<16x16xf32>
    %c0_51 = arith.constant 0 : index
    %c0_52 = arith.constant 0 : index
    %48 = vector.load %arg11[%c0_51, %c0_52] : memref<1x16xf32, #tpu.memory_space<vmem>>, vector<1x16xf32>
    %49 = vector.broadcast %48 : vector<1x16xf32> to vector<16x16xf32>
    %50 = arith.addf %47, %49 : vector<16x16xf32>
    %51 = vector.shape_cast %40 : vector<16x16xf32> to vector<1x16x16xf32>
    %52 = vector.shape_cast %45 : vector<16x16xf32> to vector<1x16x16xf32>
    %53 = vector.shape_cast %50 : vector<16x16xf32> to vector<1x16x16xf32>
    %54 = vector.extract_strided_slice %51 {offsets = [0, 0, 0], sizes = [1, 16, 4], strides = [1, 1, 1]} : vector<1x16x16xf32> to vector<1x16x4xf32>
    %55 = arith.truncf %54 : vector<1x16x4xf32> to vector<1x16x4xbf16>
    %56 = vector.extract_strided_slice %52 {offsets = [0, 0, 0], sizes = [1, 16, 4], strides = [1, 1, 1]} : vector<1x16x16xf32> to vector<1x16x4xf32>
    %57 = arith.truncf %56 : vector<1x16x4xf32> to vector<1x16x4xbf16>
    %58 = vector.extract_strided_slice %53 {offsets = [0, 0, 0], sizes = [1, 16, 4], strides = [1, 1, 1]} : vector<1x16x16xf32> to vector<1x16x4xf32>
    %59 = arith.truncf %58 : vector<1x16x4xf32> to vector<1x16x4xbf16>
    "tpu.trace_start"() <{level = 10 : i32, message = "nld,nmd->nlm"}> : () -> ()
    %cst_53 = arith.constant dense<0.000000e+00> : vector<1x16x16xf32>
    %60 = tpu.matmul %55, %57, %cst_53 {dimension_numbers = #tpu.dot_dimension_numbers<[2], [2], [1], [1], [0, 0, 0, 1, 1, 1], [0], [0]>} : vector<1x16x4xbf16>, vector<1x16x4xbf16>, vector<1x16x16xf32> -> vector<1x16x16xf32>
    "tpu.trace_stop"() : () -> ()
    %cst_54 = arith.constant dense<0xFF800000> : vector<1x16xf32>
    %61 = vector.multi_reduction <maximumf>, %60, %cst_54 [2] : vector<1x16x16xf32> to vector<1x16xf32>
    %62 = vector.shape_cast %61 : vector<1x16xf32> to vector<1x16x1xf32>
    %63 = vector.broadcast %62 : vector<1x16x1xf32> to vector<1x16x16xf32>
    %64 = arith.subf %60, %63 : vector<1x16x16xf32>
    %65 = math.exp %64 : vector<1x16x16xf32>
    %cst_55 = arith.constant dense<0.000000e+00> : vector<1x16xf32>
    %66 = vector.multi_reduction <add>, %65, %cst_55 [2] : vector<1x16x16xf32> to vector<1x16xf32>
    %67 = vector.shape_cast %66 : vector<1x16xf32> to vector<1x16x1xf32>
    %68 = tpu.reciprocal %67 {approx = true} : vector<1x16x1xf32> -> vector<1x16x1xf32>
    %69 = vector.broadcast %68 : vector<1x16x1xf32> to vector<1x16x16xf32>
    %70 = arith.mulf %65, %69 : vector<1x16x16xf32>
    %71 = arith.truncf %70 : vector<1x16x16xf32> to vector<1x16x16xbf16>
    "tpu.trace_start"() <{level = 10 : i32, message = "nlm,nmd->nld"}> : () -> ()
    %cst_56 = arith.constant dense<0.000000e+00> : vector<1x16x4xf32>
    %72 = tpu.matmul %71, %59, %cst_56 {dimension_numbers = #tpu.dot_dimension_numbers<[2], [1], [1], [2], [0, 0, 0, 1, 1, 2], [0], [0]>} : vector<1x16x16xbf16>, vector<1x16x4xbf16>, vector<1x16x4xf32> -> vector<1x16x4xf32>
    "tpu.trace_stop"() : () -> ()
    %c0_57 = arith.constant 0 : index
    %c0_58 = arith.constant 0 : index
    %c0_59 = arith.constant 0 : index
    %73 = vector.load %arg17[%c0_57, %c0_58, %c0_59] : memref<1x16x16xf32, #tpu.memory_space<vmem>>, vector<1x16x4xf32>
    tpu.vector_store %arg17[%c0_57, %c0_58, %c0_59], %72 {strides = array<i32>} : memref<1x16x16xf32, #tpu.memory_space<vmem>>, vector<1x16x4xf32>,
    %74 = vector.extract_strided_slice %51 {offsets = [0, 0, 4], sizes = [1, 16, 4], strides = [1, 1, 1]} : vector<1x16x16xf32> to vector<1x16x4xf32>
    %75 = arith.truncf %74 : vector<1x16x4xf32> to vector<1x16x4xbf16>
    %76 = vector.extract_strided_slice %52 {offsets = [0, 0, 4], sizes = [1, 16, 4], strides = [1, 1, 1]} : vector<1x16x16xf32> to vector<1x16x4xf32>
    %77 = arith.truncf %76 : vector<1x16x4xf32> to vector<1x16x4xbf16>
    %78 = vector.extract_strided_slice %53 {offsets = [0, 0, 4], sizes = [1, 16, 4], strides = [1, 1, 1]} : vector<1x16x16xf32> to vector<1x16x4xf32>
    %79 = arith.truncf %78 : vector<1x16x4xf32> to vector<1x16x4xbf16>
    "tpu.trace_start"() <{level = 10 : i32, message = "nld,nmd->nlm"}> : () -> ()
    %cst_60 = arith.constant dense<0.000000e+00> : vector<1x16x16xf32>
    %80 = tpu.matmul %75, %77, %cst_60 {dimension_numbers = #tpu.dot_dimension_numbers<[2], [2], [1], [1], [0, 0, 0, 1, 1, 1], [0], [0]>} : vector<1x16x4xbf16>, vector<1x16x4xbf16>, vector<1x16x16xf32> -> vector<1x16x16xf32>
    "tpu.trace_stop"() : () -> ()
    %cst_61 = arith.constant dense<0xFF800000> : vector<1x16xf32>
    %81 = vector.multi_reduction <maximumf>, %80, %cst_61 [2] : vector<1x16x16xf32> to vector<1x16xf32>
    %82 = vector.shape_cast %81 : vector<1x16xf32> to vector<1x16x1xf32>
    %83 = vector.broadcast %82 : vector<1x16x1xf32> to vector<1x16x16xf32>
    %84 = arith.subf %80, %83 : vector<1x16x16xf32>
    %85 = math.exp %84 : vector<1x16x16xf32>
    %cst_62 = arith.constant dense<0.000000e+00> : vector<1x16xf32>
    %86 = vector.multi_reduction <add>, %85, %cst_62 [2] : vector<1x16x16xf32> to vector<1x16xf32>
    %87 = vector.shape_cast %86 : vector<1x16xf32> to vector<1x16x1xf32>
    %88 = tpu.reciprocal %87 {approx = true} : vector<1x16x1xf32> -> vector<1x16x1xf32>
    %89 = vector.broadcast %88 : vector<1x16x1xf32> to vector<1x16x16xf32>
    %90 = arith.mulf %85, %89 : vector<1x16x16xf32>
    %91 = arith.truncf %90 : vector<1x16x16xf32> to vector<1x16x16xbf16>
    "tpu.trace_start"() <{level = 10 : i32, message = "nlm,nmd->nld"}> : () -> ()
    %cst_63 = arith.constant dense<0.000000e+00> : vector<1x16x4xf32>
    %92 = tpu.matmul %91, %79, %cst_63 {dimension_numbers = #tpu.dot_dimension_numbers<[2], [1], [1], [2], [0, 0, 0, 1, 1, 2], [0], [0]>} : vector<1x16x16xbf16>, vector<1x16x4xbf16>, vector<1x16x4xf32> -> vector<1x16x4xf32>
    "tpu.trace_stop"() : () -> ()
    %c0_64 = arith.constant 0 : index
    %c0_65 = arith.constant 0 : index
    %c4 = arith.constant 4 : index
    %93 = vector.load %arg17[%c0_64, %c0_65, %c4] : memref<1x16x16xf32, #tpu.memory_space<vmem>>, vector<1x16x4xf32>
    tpu.vector_store %arg17[%c0_64, %c0_65, %c4], %92 {strides = array<i32>} : memref<1x16x16xf32, #tpu.memory_space<vmem>>, vector<1x16x4xf32>,
    %94 = vector.extract_strided_slice %51 {offsets = [0, 0, 8], sizes = [1, 16, 4], strides = [1, 1, 1]} : vector<1x16x16xf32> to vector<1x16x4xf32>
    %95 = arith.truncf %94 : vector<1x16x4xf32> to vector<1x16x4xbf16>
    %96 = vector.extract_strided_slice %52 {offsets = [0, 0, 8], sizes = [1, 16, 4], strides = [1, 1, 1]} : vector<1x16x16xf32> to vector<1x16x4xf32>
    %97 = arith.truncf %96 : vector<1x16x4xf32> to vector<1x16x4xbf16>
    %98 = vector.extract_strided_slice %53 {offsets = [0, 0, 8], sizes = [1, 16, 4], strides = [1, 1, 1]} : vector<1x16x16xf32> to vector<1x16x4xf32>
    %99 = arith.truncf %98 : vector<1x16x4xf32> to vector<1x16x4xbf16>
    "tpu.trace_start"() <{level = 10 : i32, message = "nld,nmd->nlm"}> : () -> ()
    %cst_66 = arith.constant dense<0.000000e+00> : vector<1x16x16xf32>
    %100 = tpu.matmul %95, %97, %cst_66 {dimension_numbers = #tpu.dot_dimension_numbers<[2], [2], [1], [1], [0, 0, 0, 1, 1, 1], [0], [0]>} : vector<1x16x4xbf16>, vector<1x16x4xbf16>, vector<1x16x16xf32> -> vector<1x16x16xf32>
    "tpu.trace_stop"() : () -> ()
    %cst_67 = arith.constant dense<0xFF800000> : vector<1x16xf32>
    %101 = vector.multi_reduction <maximumf>, %100, %cst_67 [2] : vector<1x16x16xf32> to vector<1x16xf32>
    %102 = vector.shape_cast %101 : vector<1x16xf32> to vector<1x16x1xf32>
    %103 = vector.broadcast %102 : vector<1x16x1xf32> to vector<1x16x16xf32>
    %104 = arith.subf %100, %103 : vector<1x16x16xf32>
    %105 = math.exp %104 : vector<1x16x16xf32>
    %cst_68 = arith.constant dense<0.000000e+00> : vector<1x16xf32>
    %106 = vector.multi_reduction <add>, %105, %cst_68 [2] : vector<1x16x16xf32> to vector<1x16xf32>
    %107 = vector.shape_cast %106 : vector<1x16xf32> to vector<1x16x1xf32>
    %108 = tpu.reciprocal %107 {approx = true} : vector<1x16x1xf32> -> vector<1x16x1xf32>
    %109 = vector.broadcast %108 : vector<1x16x1xf32> to vector<1x16x16xf32>
    %110 = arith.mulf %105, %109 : vector<1x16x16xf32>
    %111 = arith.truncf %110 : vector<1x16x16xf32> to vector<1x16x16xbf16>
    "tpu.trace_start"() <{level = 10 : i32, message = "nlm,nmd->nld"}> : () -> ()
    %cst_69 = arith.constant dense<0.000000e+00> : vector<1x16x4xf32>
    %112 = tpu.matmul %111, %99, %cst_69 {dimension_numbers = #tpu.dot_dimension_numbers<[2], [1], [1], [2], [0, 0, 0, 1, 1, 2], [0], [0]>} : vector<1x16x16xbf16>, vector<1x16x4xbf16>, vector<1x16x4xf32> -> vector<1x16x4xf32>
    "tpu.trace_stop"() : () -> ()
    %c0_70 = arith.constant 0 : index
    %c0_71 = arith.constant 0 : index
    %c8 = arith.constant 8 : index
    %113 = vector.load %arg17[%c0_70, %c0_71, %c8] : memref<1x16x16xf32, #tpu.memory_space<vmem>>, vector<1x16x4xf32>
    tpu.vector_store %arg17[%c0_70, %c0_71, %c8], %112 {strides = array<i32>} : memref<1x16x16xf32, #tpu.memory_space<vmem>>, vector<1x16x4xf32>,
    %114 = vector.extract_strided_slice %51 {offsets = [0, 0, 12], sizes = [1, 16, 4], strides = [1, 1, 1]} : vector<1x16x16xf32> to vector<1x16x4xf32>
    %115 = arith.truncf %114 : vector<1x16x4xf32> to vector<1x16x4xbf16>
    %116 = vector.extract_strided_slice %52 {offsets = [0, 0, 12], sizes = [1, 16, 4], strides = [1, 1, 1]} : vector<1x16x16xf32> to vector<1x16x4xf32>
    %117 = arith.truncf %116 : vector<1x16x4xf32> to vector<1x16x4xbf16>
    %118 = vector.extract_strided_slice %53 {offsets = [0, 0, 12], sizes = [1, 16, 4], strides = [1, 1, 1]} : vector<1x16x16xf32> to vector<1x16x4xf32>
    %119 = arith.truncf %118 : vector<1x16x4xf32> to vector<1x16x4xbf16>
    "tpu.trace_start"() <{level = 10 : i32, message = "nld,nmd->nlm"}> : () -> ()
    %cst_72 = arith.constant dense<0.000000e+00> : vector<1x16x16xf32>
    %120 = tpu.matmul %115, %117, %cst_72 {dimension_numbers = #tpu.dot_dimension_numbers<[2], [2], [1], [1], [0, 0, 0, 1, 1, 1], [0], [0]>} : vector<1x16x4xbf16>, vector<1x16x4xbf16>, vector<1x16x16xf32> -> vector<1x16x16xf32>
    "tpu.trace_stop"() : () -> ()
    %cst_73 = arith.constant dense<0xFF800000> : vector<1x16xf32>
    %121 = vector.multi_reduction <maximumf>, %120, %cst_73 [2] : vector<1x16x16xf32> to vector<1x16xf32>
    %122 = vector.shape_cast %121 : vector<1x16xf32> to vector<1x16x1xf32>
    %123 = vector.broadcast %122 : vector<1x16x1xf32> to vector<1x16x16xf32>
    %124 = arith.subf %120, %123 : vector<1x16x16xf32>
    %125 = math.exp %124 : vector<1x16x16xf32>
    %cst_74 = arith.constant dense<0.000000e+00> : vector<1x16xf32>
    %126 = vector.multi_reduction <add>, %125, %cst_74 [2] : vector<1x16x16xf32> to vector<1x16xf32>
    %127 = vector.shape_cast %126 : vector<1x16xf32> to vector<1x16x1xf32>
    %128 = tpu.reciprocal %127 {approx = true} : vector<1x16x1xf32> -> vector<1x16x1xf32>
    %129 = vector.broadcast %128 : vector<1x16x1xf32> to vector<1x16x16xf32>
    %130 = arith.mulf %125, %129 : vector<1x16x16xf32>
    %131 = arith.truncf %130 : vector<1x16x16xf32> to vector<1x16x16xbf16>
    "tpu.trace_start"() <{level = 10 : i32, message = "nlm,nmd->nld"}> : () -> ()
    %cst_75 = arith.constant dense<0.000000e+00> : vector<1x16x4xf32>
    %132 = tpu.matmul %131, %119, %cst_75 {dimension_numbers = #tpu.dot_dimension_numbers<[2], [1], [1], [2], [0, 0, 0, 1, 1, 2], [0], [0]>} : vector<1x16x16xbf16>, vector<1x16x4xbf16>, vector<1x16x4xf32> -> vector<1x16x4xf32>
    "tpu.trace_stop"() : () -> ()
    %c0_76 = arith.constant 0 : index
    %c0_77 = arith.constant 0 : index
    %c12 = arith.constant 12 : index
    %133 = vector.load %arg17[%c0_76, %c0_77, %c12] : memref<1x16x16xf32, #tpu.memory_space<vmem>>, vector<1x16x4xf32>
    tpu.vector_store %arg17[%c0_76, %c0_77, %c12], %132 {strides = array<i32>} : memref<1x16x16xf32, #tpu.memory_space<vmem>>, vector<1x16x4xf32>,
    %c0_78 = arith.constant 0 : index
    %c0_79 = arith.constant 0 : index
    %c0_80 = arith.constant 0 : index
    %134 = vector.load %arg17[%c0_78, %c0_79, %c0_80] : memref<1x16x16xf32, #tpu.memory_space<vmem>>, vector<1x16x16xf32>
    %135 = vector.shape_cast %134 : vector<1x16x16xf32> to vector<16x16xf32>
    %136 = arith.truncf %135 : vector<16x16xf32> to vector<16x16xbf16>
    %c0_81 = arith.constant 0 : index
    %c0_82 = arith.constant 0 : index
    %137 = vector.load %arg12[%c0_81, %c0_82] : memref<16x16xbf16, #tpu.memory_space<vmem>>, vector<16x16xbf16>
    %cst_83 = arith.constant dense<0.000000e+00> : vector<16x16xf32>
    %138 = tpu.matmul %136, %137, %cst_83 {dimension_numbers = #tpu.dot_dimension_numbers<[1], [0], [0], [1], [0, 0, 1, 1], [], []>} : vector<16x16xbf16>, vector<16x16xbf16>, vector<16x16xf32> -> vector<16x16xf32>
    %c0_84 = arith.constant 0 : index
    %c0_85 = arith.constant 0 : index
    %139 = vector.load %arg13[%c0_84, %c0_85] : memref<1x16xf32, #tpu.memory_space<vmem>>, vector<1x16xf32>
    %140 = vector.broadcast %139 : vector<1x16xf32> to vector<16x16xf32>
    %141 = arith.addf %138, %140 : vector<16x16xf32>
    %142 = arith.addf %141, %32 : vector<16x16xf32>
    %cst_86 = arith.constant 0.000000e+00 : f32
    %143 = vector.broadcast %cst_86 : f32 to vector<16x16xf32>
    %144 = arith.maximumf %142, %143 : vector<16x16xf32>
    %145 = vector.shape_cast %144 : vector<16x16xf32> to vector<1x16x16xf32>
    %c0_87 = arith.constant 0 : index
    %c0_88 = arith.constant 0 : index
    %c0_89 = arith.constant 0 : index
    %146 = vector.load %arg14[%c0_87, %c0_88, %c0_89] : memref<1x16x16xf32, #tpu.memory_space<vmem>>, vector<1x16x16xf32>
    tpu.vector_store %arg14[%c0_87, %c0_88, %c0_89], %145 {strides = array<i32>} : memref<1x16x16xf32, #tpu.memory_space<vmem>>, vector<1x16x16xf32>,
    return
  }
  func.func @transform_0(%arg0: i32) -> (i32, i32, i32) {
    %c0_i32 = arith.constant 0 : i32
    %c0_i32_0 = arith.constant 0 : i32
    %c0_i32_1 = arith.constant 0 : i32
    return %arg0, %c0_i32, %c0_i32_0 : i32, i32, i32
  }
  func.func @transform_1(%arg0: i32) -> (i32, i32) {
    %c0_i32 = arith.constant 0 : i32
    %c0_i32_0 = arith.constant 0 : i32
    %c0_i32_1 = arith.constant 0 : i32
    return %c0_i32, %c0_i32_0 : i32, i32
  }
  func.func @transform_2(%arg0: i32) -> (i32, i32) {
    %c0_i32 = arith.constant 0 : i32
    %c0_i32_0 = arith.constant 0 : i32
    %c0_i32_1 = arith.constant 0 : i32
    return %c0_i32, %c0_i32_0 : i32, i32
  }
  func.func @transform_3(%arg0: i32) -> (i32, i32) {
    %c0_i32 = arith.constant 0 : i32
    %c0_i32_0 = arith.constant 0 : i32
    %c0_i32_1 = arith.constant 0 : i32
    return %c0_i32, %c0_i32_0 : i32, i32
  }
  func.func @transform_4(%arg0: i32) -> (i32, i32) {
    %c0_i32 = arith.constant 0 : i32
    %c0_i32_0 = arith.constant 0 : i32
    %c0_i32_1 = arith.constant 0 : i32
    return %c0_i32, %c0_i32_0 : i32, i32
  }
  func.func @transform_5(%arg0: i32) -> (i32, i32) {
    %c0_i32 = arith.constant 0 : i32
    %c0_i32_0 = arith.constant 0 : i32
    %c0_i32_1 = arith.constant 0 : i32
    return %c0_i32, %c0_i32_0 : i32, i32
  }
  func.func @transform_6(%arg0: i32) -> (i32, i32) {
    %c0_i32 = arith.constant 0 : i32
    %c0_i32_0 = arith.constant 0 : i32
    %c0_i32_1 = arith.constant 0 : i32
    return %c0_i32, %c0_i32_0 : i32, i32
  }
  func.func @transform_7(%arg0: i32) -> (i32, i32) {
    %c0_i32 = arith.constant 0 : i32
    %c0_i32_0 = arith.constant 0 : i32
    %c0_i32_1 = arith.constant 0 : i32
    return %c0_i32, %c0_i32_0 : i32, i32
  }
  func.func @transform_8(%arg0: i32) -> (i32, i32) {
    %c0_i32 = arith.constant 0 : i32
    %c0_i32_0 = arith.constant 0 : i32
    %c0_i32_1 = arith.constant 0 : i32
    return %c0_i32, %c0_i32_0 : i32, i32
  }
  func.func @transform_9(%arg0: i32) -> (i32, i32) {
    %c0_i32 = arith.constant 0 : i32
    %c0_i32_0 = arith.constant 0 : i32
    %c0_i32_1 = arith.constant 0 : i32
    return %c0_i32, %c0_i32_0 : i32, i32
  }
  func.func @transform_10(%arg0: i32) -> (i32, i32) {
    %c0_i32 = arith.constant 0 : i32
    %c0_i32_0 = arith.constant 0 : i32
    %c0_i32_1 = arith.constant 0 : i32
    return %c0_i32, %c0_i32_0 : i32, i32
  }
  func.func @transform_11(%arg0: i32) -> (i32, i32) {
    %c0_i32 = arith.constant 0 : i32
    %c0_i32_0 = arith.constant 0 : i32
    %c0_i32_1 = arith.constant 0 : i32
    return %c0_i32, %c0_i32_0 : i32, i32
  }
  func.func @transform_12(%arg0: i32) -> (i32, i32) {
    %c0_i32 = arith.constant 0 : i32
    %c0_i32_0 = arith.constant 0 : i32
    %c0_i32_1 = arith.constant 0 : i32
    return %c0_i32, %c0_i32_0 : i32, i32
  }
  func.func @transform_13(%arg0: i32) -> (i32, i32, i32) {
    %c0_i32 = arith.constant 0 : i32
    %c0_i32_0 = arith.constant 0 : i32
    %c0_i32_1 = arith.constant 0 : i32
    return %arg0, %c0_i32, %c0_i32_0 : i32, i32, i32
  }
}

module attributes {stable_mosaic.version = 11 : i64} {
  func.func @_temporal_block_kernel(%arg0: i32, %arg1: memref<1x16x4xf32, #tpu.memory_space<vmem>>, %arg2: memref<8x16xbf16, #tpu.memory_space<vmem>>, %arg3: memref<1x16xf32, #tpu.memory_space<vmem>>, %arg4: memref<32x16xbf16, #tpu.memory_space<vmem>>, %arg5: memref<1x16xf32, #tpu.memory_space<vmem>>, %arg6: memref<4x16xbf16, #tpu.memory_space<vmem>>, %arg7: memref<1x16xf32, #tpu.memory_space<vmem>>, %arg8: memref<16x16xbf16, #tpu.memory_space<vmem>>, %arg9: memref<16x16xbf16, #tpu.memory_space<vmem>>, %arg10: memref<16x16xbf16, #tpu.memory_space<vmem>>, %arg11: memref<1x16xf32, #tpu.memory_space<vmem>>, %arg12: memref<1x16xf32, #tpu.memory_space<vmem>>, %arg13: memref<1x16xf32, #tpu.memory_space<vmem>>, %arg14: memref<16x16xbf16, #tpu.memory_space<vmem>>, %arg15: memref<1x16xf32, #tpu.memory_space<vmem>>, %arg16: memref<1x16x16xf32, #tpu.memory_space<vmem>>, %arg17: memref<1x16x8xf32, #tpu.memory_space<vmem>>, %arg18: memref<1x16x32xf32, #tpu.memory_space<vmem>>, %arg19: memref<1x16x16xf32, #tpu.memory_space<vmem>>) attributes {dimension_semantics = [#tpu.dimension_semantics<parallel>], iteration_bounds = array<i64: 2>, scalar_prefetch = 0 : i64, scratch_operands = 3 : i64, tpu.core_type = #tpu.core_type<tc>, window_params = [{transform_indices = @transform_0, window_bounds = array<i64: 1, 16, 4>}, {pipeline_mode = #tpu.pipeline_mode<synchronous>, transform_indices = @transform_1, window_bounds = array<i64: 8, 16>}, {pipeline_mode = #tpu.pipeline_mode<synchronous>, transform_indices = @transform_2, window_bounds = array<i64: 1, 16>}, {pipeline_mode = #tpu.pipeline_mode<synchronous>, transform_indices = @transform_3, window_bounds = array<i64: 32, 16>}, {pipeline_mode = #tpu.pipeline_mode<synchronous>, transform_indices = @transform_4, window_bounds = array<i64: 1, 16>}, {pipeline_mode = #tpu.pipeline_mode<synchronous>, transform_indices = @transform_5, window_bounds = array<i64: 4, 16>}, {pipeline_mode = #tpu.pipeline_mode<synchronous>, transform_indices = @transform_6, window_bounds = array<i64: 1, 16>}, {pipeline_mode = #tpu.pipeline_mode<synchronous>, transform_indices = @transform_7, window_bounds = array<i64: 16, 16>}, {pipeline_mode = #tpu.pipeline_mode<synchronous>, transform_indices = @transform_8, window_bounds = array<i64: 16, 16>}, {pipeline_mode = #tpu.pipeline_mode<synchronous>, transform_indices = @transform_9, window_bounds = array<i64: 16, 16>}, {pipeline_mode = #tpu.pipeline_mode<synchronous>, transform_indices = @transform_10, window_bounds = array<i64: 1, 16>}, {pipeline_mode = #tpu.pipeline_mode<synchronous>, transform_indices = @transform_11, window_bounds = array<i64: 1, 16>}, {pipeline_mode = #tpu.pipeline_mode<synchronous>, transform_indices = @transform_12, window_bounds = array<i64: 1, 16>}, {pipeline_mode = #tpu.pipeline_mode<synchronous>, transform_indices = @transform_13, window_bounds = array<i64: 16, 16>}, {pipeline_mode = #tpu.pipeline_mode<synchronous>, transform_indices = @transform_14, window_bounds = array<i64: 1, 16>}, {transform_indices = @transform_15, window_bounds = array<i64: 1, 16, 16>}]} {
    %c0 = arith.constant 0 : index
    %c0_0 = arith.constant 0 : index
    %c0_1 = arith.constant 0 : index
    %0 = vector.load %arg1[%c0, %c0_0, %c0_1] : memref<1x16x4xf32, #tpu.memory_space<vmem>>, vector<1x16x4xf32>
    %cst = arith.constant 0.000000e+00 : f32
    %1 = vector.broadcast %cst : f32 to vector<1x16x8xf32>
    %c0_2 = arith.constant 0 : index
    %c0_3 = arith.constant 0 : index
    %c0_4 = arith.constant 0 : index
    %2 = vector.load %arg17[%c0_2, %c0_3, %c0_4] : memref<1x16x8xf32, #tpu.memory_space<vmem>>, vector<1x16x8xf32>
    tpu.vector_store %arg17[%c0_2, %c0_3, %c0_4], %1 {strides = array<i32>} : memref<1x16x8xf32, #tpu.memory_space<vmem>>, vector<1x16x8xf32>,
    %3 = vector.extract_strided_slice %0 {offsets = [0, 0, 0], sizes = [1, 15, 4], strides = [1, 1, 1]} : vector<1x16x4xf32> to vector<1x15x4xf32>
    %c0_5 = arith.constant 0 : index
    %c1 = arith.constant 1 : index
    %c0_6 = arith.constant 0 : index
    %4 = vector.load %arg17[%c0_5, %c1, %c0_6] : memref<1x16x8xf32, #tpu.memory_space<vmem>>, vector<1x15x4xf32>
    tpu.vector_store %arg17[%c0_5, %c1, %c0_6], %3 {strides = array<i32>} : memref<1x16x8xf32, #tpu.memory_space<vmem>>, vector<1x15x4xf32>,
    %c0_7 = arith.constant 0 : index
    %c0_8 = arith.constant 0 : index
    %c4 = arith.constant 4 : index
    %5 = vector.load %arg17[%c0_7, %c0_8, %c4] : memref<1x16x8xf32, #tpu.memory_space<vmem>>, vector<1x16x4xf32>
    tpu.vector_store %arg17[%c0_7, %c0_8, %c4], %0 {strides = array<i32>} : memref<1x16x8xf32, #tpu.memory_space<vmem>>, vector<1x16x4xf32>,
    %c0_9 = arith.constant 0 : index
    %c0_10 = arith.constant 0 : index
    %c0_11 = arith.constant 0 : index
    %6 = vector.load %arg17[%c0_9, %c0_10, %c0_11] : memref<1x16x8xf32, #tpu.memory_space<vmem>>, vector<1x16x8xf32>
    %7 = vector.shape_cast %6 : vector<1x16x8xf32> to vector<16x8xf32>
    %8 = arith.truncf %7 : vector<16x8xf32> to vector<16x8xbf16>
    %c0_12 = arith.constant 0 : index
    %c0_13 = arith.constant 0 : index
    %9 = vector.load %arg2[%c0_12, %c0_13] : memref<8x16xbf16, #tpu.memory_space<vmem>>, vector<8x16xbf16>
    %cst_14 = arith.constant dense<0.000000e+00> : vector<16x16xf32>
    %10 = tpu.matmul %8, %9, %cst_14 {dimension_numbers = #tpu.dot_dimension_numbers<[1], [0], [0], [1], [0, 0, 1, 1], [], []>} : vector<16x8xbf16>, vector<8x16xbf16>, vector<16x16xf32> -> vector<16x16xf32>
    %c0_15 = arith.constant 0 : index
    %c0_16 = arith.constant 0 : index
    %11 = vector.load %arg3[%c0_15, %c0_16] : memref<1x16xf32, #tpu.memory_space<vmem>>, vector<1x16xf32>
    %12 = vector.broadcast %11 : vector<1x16xf32> to vector<16x16xf32>
    %13 = arith.addf %10, %12 : vector<16x16xf32>
    %cst_17 = arith.constant 0.000000e+00 : f32
    %14 = vector.broadcast %cst_17 : f32 to vector<16x16xf32>
    %15 = arith.maximumf %13, %14 : vector<16x16xf32>
    %16 = vector.shape_cast %15 : vector<16x16xf32> to vector<1x16x16xf32>
    %cst_18 = arith.constant 0.000000e+00 : f32
    %17 = vector.broadcast %cst_18 : f32 to vector<1x16x32xf32>
    %c0_19 = arith.constant 0 : index
    %c0_20 = arith.constant 0 : index
    %c0_21 = arith.constant 0 : index
    %18 = vector.load %arg18[%c0_19, %c0_20, %c0_21] : memref<1x16x32xf32, #tpu.memory_space<vmem>>, vector<1x16x32xf32>
    tpu.vector_store %arg18[%c0_19, %c0_20, %c0_21], %17 {strides = array<i32>} : memref<1x16x32xf32, #tpu.memory_space<vmem>>, vector<1x16x32xf32>,
    %19 = vector.extract_strided_slice %16 {offsets = [0, 0, 0], sizes = [1, 15, 16], strides = [1, 1, 1]} : vector<1x16x16xf32> to vector<1x15x16xf32>
    %c0_22 = arith.constant 0 : index
    %c1_23 = arith.constant 1 : index
    %c0_24 = arith.constant 0 : index
    %20 = vector.load %arg18[%c0_22, %c1_23, %c0_24] : memref<1x16x32xf32, #tpu.memory_space<vmem>>, vector<1x15x16xf32>
    tpu.vector_store %arg18[%c0_22, %c1_23, %c0_24], %19 {strides = array<i32>} : memref<1x16x32xf32, #tpu.memory_space<vmem>>, vector<1x15x16xf32>,
    %c0_25 = arith.constant 0 : index
    %c0_26 = arith.constant 0 : index
    %c16 = arith.constant 16 : index
    %21 = vector.load %arg18[%c0_25, %c0_26, %c16] : memref<1x16x32xf32, #tpu.memory_space<vmem>>, vector<1x16x16xf32>
    tpu.vector_store %arg18[%c0_25, %c0_26, %c16], %16 {strides = array<i32>} : memref<1x16x32xf32, #tpu.memory_space<vmem>>, vector<1x16x16xf32>,
    %c0_27 = arith.constant 0 : index
    %c0_28 = arith.constant 0 : index
    %c0_29 = arith.constant 0 : index
    %22 = vector.load %arg18[%c0_27, %c0_28, %c0_29] : memref<1x16x32xf32, #tpu.memory_space<vmem>>, vector<1x16x32xf32>
    %23 = vector.shape_cast %22 : vector<1x16x32xf32> to vector<16x32xf32>
    %24 = arith.truncf %23 : vector<16x32xf32> to vector<16x32xbf16>
    %c0_30 = arith.constant 0 : index
    %c0_31 = arith.constant 0 : index
    %25 = vector.load %arg4[%c0_30, %c0_31] : memref<32x16xbf16, #tpu.memory_space<vmem>>, vector<32x16xbf16>
    %cst_32 = arith.constant dense<0.000000e+00> : vector<16x16xf32>
    %26 = tpu.matmul %24, %25, %cst_32 {dimension_numbers = #tpu.dot_dimension_numbers<[1], [0], [0], [1], [0, 0, 1, 1], [], []>} : vector<16x32xbf16>, vector<32x16xbf16>, vector<16x16xf32> -> vector<16x16xf32>
    %c0_33 = arith.constant 0 : index
    %c0_34 = arith.constant 0 : index
    %27 = vector.load %arg5[%c0_33, %c0_34] : memref<1x16xf32, #tpu.memory_space<vmem>>, vector<1x16xf32>
    %28 = vector.broadcast %27 : vector<1x16xf32> to vector<16x16xf32>
    %29 = arith.addf %26, %28 : vector<16x16xf32>
    %cst_35 = arith.constant 0.000000e+00 : f32
    %30 = vector.broadcast %cst_35 : f32 to vector<16x16xf32>
    %31 = arith.maximumf %29, %30 : vector<16x16xf32>
    %32 = vector.shape_cast %0 : vector<1x16x4xf32> to vector<16x4xf32>
    %33 = arith.truncf %32 : vector<16x4xf32> to vector<16x4xbf16>
    %c0_36 = arith.constant 0 : index
    %c0_37 = arith.constant 0 : index
    %34 = vector.load %arg6[%c0_36, %c0_37] : memref<4x16xbf16, #tpu.memory_space<vmem>>, vector<4x16xbf16>
    %cst_38 = arith.constant dense<0.000000e+00> : vector<16x16xf32>
    %35 = tpu.matmul %33, %34, %cst_38 {dimension_numbers = #tpu.dot_dimension_numbers<[1], [0], [0], [1], [0, 0, 1, 1], [], []>} : vector<16x4xbf16>, vector<4x16xbf16>, vector<16x16xf32> -> vector<16x16xf32>
    %c0_39 = arith.constant 0 : index
    %c0_40 = arith.constant 0 : index
    %36 = vector.load %arg7[%c0_39, %c0_40] : memref<1x16xf32, #tpu.memory_space<vmem>>, vector<1x16xf32>
    %37 = vector.broadcast %36 : vector<1x16xf32> to vector<16x16xf32>
    %38 = arith.addf %35, %37 : vector<16x16xf32>
    %39 = arith.truncf %31 : vector<16x16xf32> to vector<16x16xbf16>
    %c0_41 = arith.constant 0 : index
    %c0_42 = arith.constant 0 : index
    %40 = vector.load %arg8[%c0_41, %c0_42] : memref<16x16xbf16, #tpu.memory_space<vmem>>, vector<16x16xbf16>
    %cst_43 = arith.constant dense<0.000000e+00> : vector<16x16xf32>
    %41 = tpu.matmul %39, %40, %cst_43 {dimension_numbers = #tpu.dot_dimension_numbers<[1], [0], [0], [1], [0, 0, 1, 1], [], []>} : vector<16x16xbf16>, vector<16x16xbf16>, vector<16x16xf32> -> vector<16x16xf32>
    %c0_44 = arith.constant 0 : index
    %c0_45 = arith.constant 0 : index
    %42 = vector.load %arg11[%c0_44, %c0_45] : memref<1x16xf32, #tpu.memory_space<vmem>>, vector<1x16xf32>
    %43 = vector.broadcast %42 : vector<1x16xf32> to vector<16x16xf32>
    %44 = arith.addf %41, %43 : vector<16x16xf32>
    %cst_46 = arith.constant 5.000000e-01 : f32
    %45 = vector.broadcast %cst_46 : f32 to vector<16x16xf32>
    %46 = arith.mulf %44, %45 : vector<16x16xf32>
    %c0_47 = arith.constant 0 : index
    %c0_48 = arith.constant 0 : index
    %47 = vector.load %arg9[%c0_47, %c0_48] : memref<16x16xbf16, #tpu.memory_space<vmem>>, vector<16x16xbf16>
    %cst_49 = arith.constant dense<0.000000e+00> : vector<16x16xf32>
    %48 = tpu.matmul %39, %47, %cst_49 {dimension_numbers = #tpu.dot_dimension_numbers<[1], [0], [0], [1], [0, 0, 1, 1], [], []>} : vector<16x16xbf16>, vector<16x16xbf16>, vector<16x16xf32> -> vector<16x16xf32>
    %c0_50 = arith.constant 0 : index
    %c0_51 = arith.constant 0 : index
    %49 = vector.load %arg12[%c0_50, %c0_51] : memref<1x16xf32, #tpu.memory_space<vmem>>, vector<1x16xf32>
    %50 = vector.broadcast %49 : vector<1x16xf32> to vector<16x16xf32>
    %51 = arith.addf %48, %50 : vector<16x16xf32>
    %c0_52 = arith.constant 0 : index
    %c0_53 = arith.constant 0 : index
    %52 = vector.load %arg10[%c0_52, %c0_53] : memref<16x16xbf16, #tpu.memory_space<vmem>>, vector<16x16xbf16>
    %cst_54 = arith.constant dense<0.000000e+00> : vector<16x16xf32>
    %53 = tpu.matmul %39, %52, %cst_54 {dimension_numbers = #tpu.dot_dimension_numbers<[1], [0], [0], [1], [0, 0, 1, 1], [], []>} : vector<16x16xbf16>, vector<16x16xbf16>, vector<16x16xf32> -> vector<16x16xf32>
    %c0_55 = arith.constant 0 : index
    %c0_56 = arith.constant 0 : index
    %54 = vector.load %arg13[%c0_55, %c0_56] : memref<1x16xf32, #tpu.memory_space<vmem>>, vector<1x16xf32>
    %55 = vector.broadcast %54 : vector<1x16xf32> to vector<16x16xf32>
    %56 = arith.addf %53, %55 : vector<16x16xf32>
    %57 = vector.shape_cast %46 : vector<16x16xf32> to vector<1x16x16xf32>
    %58 = vector.shape_cast %51 : vector<16x16xf32> to vector<1x16x16xf32>
    %59 = vector.shape_cast %56 : vector<16x16xf32> to vector<1x16x16xf32>
    %60 = vector.extract_strided_slice %57 {offsets = [0, 0, 0], sizes = [1, 16, 4], strides = [1, 1, 1]} : vector<1x16x16xf32> to vector<1x16x4xf32>
    %61 = arith.truncf %60 : vector<1x16x4xf32> to vector<1x16x4xbf16>
    %62 = vector.extract_strided_slice %58 {offsets = [0, 0, 0], sizes = [1, 16, 4], strides = [1, 1, 1]} : vector<1x16x16xf32> to vector<1x16x4xf32>
    %63 = arith.truncf %62 : vector<1x16x4xf32> to vector<1x16x4xbf16>
    %64 = vector.extract_strided_slice %59 {offsets = [0, 0, 0], sizes = [1, 16, 4], strides = [1, 1, 1]} : vector<1x16x16xf32> to vector<1x16x4xf32>
    %65 = arith.truncf %64 : vector<1x16x4xf32> to vector<1x16x4xbf16>
    "tpu.trace_start"() <{level = 10 : i32, message = "nld,nmd->nlm"}> : () -> ()
    %cst_57 = arith.constant dense<0.000000e+00> : vector<1x16x16xf32>
    %66 = tpu.matmul %61, %63, %cst_57 {dimension_numbers = #tpu.dot_dimension_numbers<[2], [2], [1], [1], [0, 0, 0, 1, 1, 1], [0], [0]>} : vector<1x16x4xbf16>, vector<1x16x4xbf16>, vector<1x16x16xf32> -> vector<1x16x16xf32>
    "tpu.trace_stop"() : () -> ()
    %cst_58 = arith.constant dense<0xFF800000> : vector<1x16xf32>
    %67 = vector.multi_reduction <maximumf>, %66, %cst_58 [2] : vector<1x16x16xf32> to vector<1x16xf32>
    %68 = vector.shape_cast %67 : vector<1x16xf32> to vector<1x16x1xf32>
    %69 = vector.broadcast %68 : vector<1x16x1xf32> to vector<1x16x16xf32>
    %70 = arith.subf %66, %69 : vector<1x16x16xf32>
    %71 = math.exp %70 : vector<1x16x16xf32>
    %cst_59 = arith.constant dense<0.000000e+00> : vector<1x16xf32>
    %72 = vector.multi_reduction <add>, %71, %cst_59 [2] : vector<1x16x16xf32> to vector<1x16xf32>
    %73 = vector.shape_cast %72 : vector<1x16xf32> to vector<1x16x1xf32>
    %74 = tpu.reciprocal %73 {approx = true} : vector<1x16x1xf32> -> vector<1x16x1xf32>
    %75 = vector.broadcast %74 : vector<1x16x1xf32> to vector<1x16x16xf32>
    %76 = arith.mulf %71, %75 : vector<1x16x16xf32>
    %77 = arith.truncf %76 : vector<1x16x16xf32> to vector<1x16x16xbf16>
    "tpu.trace_start"() <{level = 10 : i32, message = "nlm,nmd->nld"}> : () -> ()
    %cst_60 = arith.constant dense<0.000000e+00> : vector<1x16x4xf32>
    %78 = tpu.matmul %77, %65, %cst_60 {dimension_numbers = #tpu.dot_dimension_numbers<[2], [1], [1], [2], [0, 0, 0, 1, 1, 2], [0], [0]>} : vector<1x16x16xbf16>, vector<1x16x4xbf16>, vector<1x16x4xf32> -> vector<1x16x4xf32>
    "tpu.trace_stop"() : () -> ()
    %c0_61 = arith.constant 0 : index
    %c0_62 = arith.constant 0 : index
    %c0_63 = arith.constant 0 : index
    %79 = vector.load %arg19[%c0_61, %c0_62, %c0_63] : memref<1x16x16xf32, #tpu.memory_space<vmem>>, vector<1x16x4xf32>
    tpu.vector_store %arg19[%c0_61, %c0_62, %c0_63], %78 {strides = array<i32>} : memref<1x16x16xf32, #tpu.memory_space<vmem>>, vector<1x16x4xf32>,
    %80 = vector.extract_strided_slice %57 {offsets = [0, 0, 4], sizes = [1, 16, 4], strides = [1, 1, 1]} : vector<1x16x16xf32> to vector<1x16x4xf32>
    %81 = arith.truncf %80 : vector<1x16x4xf32> to vector<1x16x4xbf16>
    %82 = vector.extract_strided_slice %58 {offsets = [0, 0, 4], sizes = [1, 16, 4], strides = [1, 1, 1]} : vector<1x16x16xf32> to vector<1x16x4xf32>
    %83 = arith.truncf %82 : vector<1x16x4xf32> to vector<1x16x4xbf16>
    %84 = vector.extract_strided_slice %59 {offsets = [0, 0, 4], sizes = [1, 16, 4], strides = [1, 1, 1]} : vector<1x16x16xf32> to vector<1x16x4xf32>
    %85 = arith.truncf %84 : vector<1x16x4xf32> to vector<1x16x4xbf16>
    "tpu.trace_start"() <{level = 10 : i32, message = "nld,nmd->nlm"}> : () -> ()
    %cst_64 = arith.constant dense<0.000000e+00> : vector<1x16x16xf32>
    %86 = tpu.matmul %81, %83, %cst_64 {dimension_numbers = #tpu.dot_dimension_numbers<[2], [2], [1], [1], [0, 0, 0, 1, 1, 1], [0], [0]>} : vector<1x16x4xbf16>, vector<1x16x4xbf16>, vector<1x16x16xf32> -> vector<1x16x16xf32>
    "tpu.trace_stop"() : () -> ()
    %cst_65 = arith.constant dense<0xFF800000> : vector<1x16xf32>
    %87 = vector.multi_reduction <maximumf>, %86, %cst_65 [2] : vector<1x16x16xf32> to vector<1x16xf32>
    %88 = vector.shape_cast %87 : vector<1x16xf32> to vector<1x16x1xf32>
    %89 = vector.broadcast %88 : vector<1x16x1xf32> to vector<1x16x16xf32>
    %90 = arith.subf %86, %89 : vector<1x16x16xf32>
    %91 = math.exp %90 : vector<1x16x16xf32>
    %cst_66 = arith.constant dense<0.000000e+00> : vector<1x16xf32>
    %92 = vector.multi_reduction <add>, %91, %cst_66 [2] : vector<1x16x16xf32> to vector<1x16xf32>
    %93 = vector.shape_cast %92 : vector<1x16xf32> to vector<1x16x1xf32>
    %94 = tpu.reciprocal %93 {approx = true} : vector<1x16x1xf32> -> vector<1x16x1xf32>
    %95 = vector.broadcast %94 : vector<1x16x1xf32> to vector<1x16x16xf32>
    %96 = arith.mulf %91, %95 : vector<1x16x16xf32>
    %97 = arith.truncf %96 : vector<1x16x16xf32> to vector<1x16x16xbf16>
    "tpu.trace_start"() <{level = 10 : i32, message = "nlm,nmd->nld"}> : () -> ()
    %cst_67 = arith.constant dense<0.000000e+00> : vector<1x16x4xf32>
    %98 = tpu.matmul %97, %85, %cst_67 {dimension_numbers = #tpu.dot_dimension_numbers<[2], [1], [1], [2], [0, 0, 0, 1, 1, 2], [0], [0]>} : vector<1x16x16xbf16>, vector<1x16x4xbf16>, vector<1x16x4xf32> -> vector<1x16x4xf32>
    "tpu.trace_stop"() : () -> ()
    %c0_68 = arith.constant 0 : index
    %c0_69 = arith.constant 0 : index
    %c4_70 = arith.constant 4 : index
    %99 = vector.load %arg19[%c0_68, %c0_69, %c4_70] : memref<1x16x16xf32, #tpu.memory_space<vmem>>, vector<1x16x4xf32>
    tpu.vector_store %arg19[%c0_68, %c0_69, %c4_70], %98 {strides = array<i32>} : memref<1x16x16xf32, #tpu.memory_space<vmem>>, vector<1x16x4xf32>,
    %100 = vector.extract_strided_slice %57 {offsets = [0, 0, 8], sizes = [1, 16, 4], strides = [1, 1, 1]} : vector<1x16x16xf32> to vector<1x16x4xf32>
    %101 = arith.truncf %100 : vector<1x16x4xf32> to vector<1x16x4xbf16>
    %102 = vector.extract_strided_slice %58 {offsets = [0, 0, 8], sizes = [1, 16, 4], strides = [1, 1, 1]} : vector<1x16x16xf32> to vector<1x16x4xf32>
    %103 = arith.truncf %102 : vector<1x16x4xf32> to vector<1x16x4xbf16>
    %104 = vector.extract_strided_slice %59 {offsets = [0, 0, 8], sizes = [1, 16, 4], strides = [1, 1, 1]} : vector<1x16x16xf32> to vector<1x16x4xf32>
    %105 = arith.truncf %104 : vector<1x16x4xf32> to vector<1x16x4xbf16>
    "tpu.trace_start"() <{level = 10 : i32, message = "nld,nmd->nlm"}> : () -> ()
    %cst_71 = arith.constant dense<0.000000e+00> : vector<1x16x16xf32>
    %106 = tpu.matmul %101, %103, %cst_71 {dimension_numbers = #tpu.dot_dimension_numbers<[2], [2], [1], [1], [0, 0, 0, 1, 1, 1], [0], [0]>} : vector<1x16x4xbf16>, vector<1x16x4xbf16>, vector<1x16x16xf32> -> vector<1x16x16xf32>
    "tpu.trace_stop"() : () -> ()
    %cst_72 = arith.constant dense<0xFF800000> : vector<1x16xf32>
    %107 = vector.multi_reduction <maximumf>, %106, %cst_72 [2] : vector<1x16x16xf32> to vector<1x16xf32>
    %108 = vector.shape_cast %107 : vector<1x16xf32> to vector<1x16x1xf32>
    %109 = vector.broadcast %108 : vector<1x16x1xf32> to vector<1x16x16xf32>
    %110 = arith.subf %106, %109 : vector<1x16x16xf32>
    %111 = math.exp %110 : vector<1x16x16xf32>
    %cst_73 = arith.constant dense<0.000000e+00> : vector<1x16xf32>
    %112 = vector.multi_reduction <add>, %111, %cst_73 [2] : vector<1x16x16xf32> to vector<1x16xf32>
    %113 = vector.shape_cast %112 : vector<1x16xf32> to vector<1x16x1xf32>
    %114 = tpu.reciprocal %113 {approx = true} : vector<1x16x1xf32> -> vector<1x16x1xf32>
    %115 = vector.broadcast %114 : vector<1x16x1xf32> to vector<1x16x16xf32>
    %116 = arith.mulf %111, %115 : vector<1x16x16xf32>
    %117 = arith.truncf %116 : vector<1x16x16xf32> to vector<1x16x16xbf16>
    "tpu.trace_start"() <{level = 10 : i32, message = "nlm,nmd->nld"}> : () -> ()
    %cst_74 = arith.constant dense<0.000000e+00> : vector<1x16x4xf32>
    %118 = tpu.matmul %117, %105, %cst_74 {dimension_numbers = #tpu.dot_dimension_numbers<[2], [1], [1], [2], [0, 0, 0, 1, 1, 2], [0], [0]>} : vector<1x16x16xbf16>, vector<1x16x4xbf16>, vector<1x16x4xf32> -> vector<1x16x4xf32>
    "tpu.trace_stop"() : () -> ()
    %c0_75 = arith.constant 0 : index
    %c0_76 = arith.constant 0 : index
    %c8 = arith.constant 8 : index
    %119 = vector.load %arg19[%c0_75, %c0_76, %c8] : memref<1x16x16xf32, #tpu.memory_space<vmem>>, vector<1x16x4xf32>
    tpu.vector_store %arg19[%c0_75, %c0_76, %c8], %118 {strides = array<i32>} : memref<1x16x16xf32, #tpu.memory_space<vmem>>, vector<1x16x4xf32>,
    %120 = vector.extract_strided_slice %57 {offsets = [0, 0, 12], sizes = [1, 16, 4], strides = [1, 1, 1]} : vector<1x16x16xf32> to vector<1x16x4xf32>
    %121 = arith.truncf %120 : vector<1x16x4xf32> to vector<1x16x4xbf16>
    %122 = vector.extract_strided_slice %58 {offsets = [0, 0, 12], sizes = [1, 16, 4], strides = [1, 1, 1]} : vector<1x16x16xf32> to vector<1x16x4xf32>
    %123 = arith.truncf %122 : vector<1x16x4xf32> to vector<1x16x4xbf16>
    %124 = vector.extract_strided_slice %59 {offsets = [0, 0, 12], sizes = [1, 16, 4], strides = [1, 1, 1]} : vector<1x16x16xf32> to vector<1x16x4xf32>
    %125 = arith.truncf %124 : vector<1x16x4xf32> to vector<1x16x4xbf16>
    "tpu.trace_start"() <{level = 10 : i32, message = "nld,nmd->nlm"}> : () -> ()
    %cst_77 = arith.constant dense<0.000000e+00> : vector<1x16x16xf32>
    %126 = tpu.matmul %121, %123, %cst_77 {dimension_numbers = #tpu.dot_dimension_numbers<[2], [2], [1], [1], [0, 0, 0, 1, 1, 1], [0], [0]>} : vector<1x16x4xbf16>, vector<1x16x4xbf16>, vector<1x16x16xf32> -> vector<1x16x16xf32>
    "tpu.trace_stop"() : () -> ()
    %cst_78 = arith.constant dense<0xFF800000> : vector<1x16xf32>
    %127 = vector.multi_reduction <maximumf>, %126, %cst_78 [2] : vector<1x16x16xf32> to vector<1x16xf32>
    %128 = vector.shape_cast %127 : vector<1x16xf32> to vector<1x16x1xf32>
    %129 = vector.broadcast %128 : vector<1x16x1xf32> to vector<1x16x16xf32>
    %130 = arith.subf %126, %129 : vector<1x16x16xf32>
    %131 = math.exp %130 : vector<1x16x16xf32>
    %cst_79 = arith.constant dense<0.000000e+00> : vector<1x16xf32>
    %132 = vector.multi_reduction <add>, %131, %cst_79 [2] : vector<1x16x16xf32> to vector<1x16xf32>
    %133 = vector.shape_cast %132 : vector<1x16xf32> to vector<1x16x1xf32>
    %134 = tpu.reciprocal %133 {approx = true} : vector<1x16x1xf32> -> vector<1x16x1xf32>
    %135 = vector.broadcast %134 : vector<1x16x1xf32> to vector<1x16x16xf32>
    %136 = arith.mulf %131, %135 : vector<1x16x16xf32>
    %137 = arith.truncf %136 : vector<1x16x16xf32> to vector<1x16x16xbf16>
    "tpu.trace_start"() <{level = 10 : i32, message = "nlm,nmd->nld"}> : () -> ()
    %cst_80 = arith.constant dense<0.000000e+00> : vector<1x16x4xf32>
    %138 = tpu.matmul %137, %125, %cst_80 {dimension_numbers = #tpu.dot_dimension_numbers<[2], [1], [1], [2], [0, 0, 0, 1, 1, 2], [0], [0]>} : vector<1x16x16xbf16>, vector<1x16x4xbf16>, vector<1x16x4xf32> -> vector<1x16x4xf32>
    "tpu.trace_stop"() : () -> ()
    %c0_81 = arith.constant 0 : index
    %c0_82 = arith.constant 0 : index
    %c12 = arith.constant 12 : index
    %139 = vector.load %arg19[%c0_81, %c0_82, %c12] : memref<1x16x16xf32, #tpu.memory_space<vmem>>, vector<1x16x4xf32>
    tpu.vector_store %arg19[%c0_81, %c0_82, %c12], %138 {strides = array<i32>} : memref<1x16x16xf32, #tpu.memory_space<vmem>>, vector<1x16x4xf32>,
    %c0_83 = arith.constant 0 : index
    %c0_84 = arith.constant 0 : index
    %c0_85 = arith.constant 0 : index
    %140 = vector.load %arg19[%c0_83, %c0_84, %c0_85] : memref<1x16x16xf32, #tpu.memory_space<vmem>>, vector<1x16x16xf32>
    %141 = vector.shape_cast %140 : vector<1x16x16xf32> to vector<16x16xf32>
    %142 = arith.truncf %141 : vector<16x16xf32> to vector<16x16xbf16>
    %c0_86 = arith.constant 0 : index
    %c0_87 = arith.constant 0 : index
    %143 = vector.load %arg14[%c0_86, %c0_87] : memref<16x16xbf16, #tpu.memory_space<vmem>>, vector<16x16xbf16>
    %cst_88 = arith.constant dense<0.000000e+00> : vector<16x16xf32>
    %144 = tpu.matmul %142, %143, %cst_88 {dimension_numbers = #tpu.dot_dimension_numbers<[1], [0], [0], [1], [0, 0, 1, 1], [], []>} : vector<16x16xbf16>, vector<16x16xbf16>, vector<16x16xf32> -> vector<16x16xf32>
    %c0_89 = arith.constant 0 : index
    %c0_90 = arith.constant 0 : index
    %145 = vector.load %arg15[%c0_89, %c0_90] : memref<1x16xf32, #tpu.memory_space<vmem>>, vector<1x16xf32>
    %146 = vector.broadcast %145 : vector<1x16xf32> to vector<16x16xf32>
    %147 = arith.addf %144, %146 : vector<16x16xf32>
    %148 = arith.addf %147, %38 : vector<16x16xf32>
    %cst_91 = arith.constant 0.000000e+00 : f32
    %149 = vector.broadcast %cst_91 : f32 to vector<16x16xf32>
    %150 = arith.maximumf %148, %149 : vector<16x16xf32>
    %151 = vector.shape_cast %150 : vector<16x16xf32> to vector<1x16x16xf32>
    %c0_92 = arith.constant 0 : index
    %c0_93 = arith.constant 0 : index
    %c0_94 = arith.constant 0 : index
    %152 = vector.load %arg16[%c0_92, %c0_93, %c0_94] : memref<1x16x16xf32, #tpu.memory_space<vmem>>, vector<1x16x16xf32>
    tpu.vector_store %arg16[%c0_92, %c0_93, %c0_94], %151 {strides = array<i32>} : memref<1x16x16xf32, #tpu.memory_space<vmem>>, vector<1x16x16xf32>,
    return
  }
  func.func @transform_0(%arg0: i32) -> (i32, i32, i32) {
    %c0_i32 = arith.constant 0 : i32
    %c0_i32_0 = arith.constant 0 : i32
    %c0_i32_1 = arith.constant 0 : i32
    return %arg0, %c0_i32, %c0_i32_0 : i32, i32, i32
  }
  func.func @transform_1(%arg0: i32) -> (i32, i32) {
    %c0_i32 = arith.constant 0 : i32
    %c0_i32_0 = arith.constant 0 : i32
    %c0_i32_1 = arith.constant 0 : i32
    return %c0_i32, %c0_i32_0 : i32, i32
  }
  func.func @transform_2(%arg0: i32) -> (i32, i32) {
    %c0_i32 = arith.constant 0 : i32
    %c0_i32_0 = arith.constant 0 : i32
    %c0_i32_1 = arith.constant 0 : i32
    return %c0_i32, %c0_i32_0 : i32, i32
  }
  func.func @transform_3(%arg0: i32) -> (i32, i32) {
    %c0_i32 = arith.constant 0 : i32
    %c0_i32_0 = arith.constant 0 : i32
    %c0_i32_1 = arith.constant 0 : i32
    return %c0_i32, %c0_i32_0 : i32, i32
  }
  func.func @transform_4(%arg0: i32) -> (i32, i32) {
    %c0_i32 = arith.constant 0 : i32
    %c0_i32_0 = arith.constant 0 : i32
    %c0_i32_1 = arith.constant 0 : i32
    return %c0_i32, %c0_i32_0 : i32, i32
  }
  func.func @transform_5(%arg0: i32) -> (i32, i32) {
    %c0_i32 = arith.constant 0 : i32
    %c0_i32_0 = arith.constant 0 : i32
    %c0_i32_1 = arith.constant 0 : i32
    return %c0_i32, %c0_i32_0 : i32, i32
  }
  func.func @transform_6(%arg0: i32) -> (i32, i32) {
    %c0_i32 = arith.constant 0 : i32
    %c0_i32_0 = arith.constant 0 : i32
    %c0_i32_1 = arith.constant 0 : i32
    return %c0_i32, %c0_i32_0 : i32, i32
  }
  func.func @transform_7(%arg0: i32) -> (i32, i32) {
    %c0_i32 = arith.constant 0 : i32
    %c0_i32_0 = arith.constant 0 : i32
    %c0_i32_1 = arith.constant 0 : i32
    return %c0_i32, %c0_i32_0 : i32, i32
  }
  func.func @transform_8(%arg0: i32) -> (i32, i32) {
    %c0_i32 = arith.constant 0 : i32
    %c0_i32_0 = arith.constant 0 : i32
    %c0_i32_1 = arith.constant 0 : i32
    return %c0_i32, %c0_i32_0 : i32, i32
  }
  func.func @transform_9(%arg0: i32) -> (i32, i32) {
    %c0_i32 = arith.constant 0 : i32
    %c0_i32_0 = arith.constant 0 : i32
    %c0_i32_1 = arith.constant 0 : i32
    return %c0_i32, %c0_i32_0 : i32, i32
  }
  func.func @transform_10(%arg0: i32) -> (i32, i32) {
    %c0_i32 = arith.constant 0 : i32
    %c0_i32_0 = arith.constant 0 : i32
    %c0_i32_1 = arith.constant 0 : i32
    return %c0_i32, %c0_i32_0 : i32, i32
  }
  func.func @transform_11(%arg0: i32) -> (i32, i32) {
    %c0_i32 = arith.constant 0 : i32
    %c0_i32_0 = arith.constant 0 : i32
    %c0_i32_1 = arith.constant 0 : i32
    return %c0_i32, %c0_i32_0 : i32, i32
  }
  func.func @transform_12(%arg0: i32) -> (i32, i32) {
    %c0_i32 = arith.constant 0 : i32
    %c0_i32_0 = arith.constant 0 : i32
    %c0_i32_1 = arith.constant 0 : i32
    return %c0_i32, %c0_i32_0 : i32, i32
  }
  func.func @transform_13(%arg0: i32) -> (i32, i32) {
    %c0_i32 = arith.constant 0 : i32
    %c0_i32_0 = arith.constant 0 : i32
    %c0_i32_1 = arith.constant 0 : i32
    return %c0_i32, %c0_i32_0 : i32, i32
  }
  func.func @transform_14(%arg0: i32) -> (i32, i32) {
    %c0_i32 = arith.constant 0 : i32
    %c0_i32_0 = arith.constant 0 : i32
    %c0_i32_1 = arith.constant 0 : i32
    return %c0_i32, %c0_i32_0 : i32, i32
  }
  func.func @transform_15(%arg0: i32) -> (i32, i32, i32) {
    %c0_i32 = arith.constant 0 : i32
    %c0_i32_0 = arith.constant 0 : i32
    %c0_i32_1 = arith.constant 0 : i32
    return %arg0, %c0_i32, %c0_i32_0 : i32, i32, i32
  }
}

</mosaic_0001>

<llo_original>
// kernel: temporal_conv_net.2
$region0: #{temporal_conv_net.2}
  #allocation0 [shape = 'u32[]', space=smem, size = 0x4, offset = 0x4, fixed_abs, tag = 'smem constant byte address 0x4 - core index']
  #allocation1 [shape = 'u32[72,128]{1,0:T(1,128)}', space=vmem, size = 0x9000, scoped, tag = 'internal scratch']
  #allocation2 [shape = 'f32[1,16,8]{2,1,0:T(8,128)}', space=vmem, size = 0x2000, scoped, tag = 'scratch operand']
  #allocation3 [shape = 'f32[1,16,32]{2,1,0:T(8,128)}', space=vmem, size = 0x2000, scoped, tag = 'scratch operand']
  #allocation4 [shape = 'f32[1,16,16]{2,1,0:T(8,128)}', space=vmem, size = 0x2000, scoped, tag = 'scratch operand']
  %s0 = inlined_call_operand.vmem [shape: f32[2,16,4], index: 0, kind: input, shape index: {}]
  %s1 = inlined_call_operand.vmem [shape: bf16[8,16], index: 1, kind: input, shape index: {}]
  %s2 = inlined_call_operand.vmem [shape: f32[1,16], index: 2, kind: input, shape index: {}]
  %s3 = inlined_call_operand.vmem [shape: bf16[32,16], index: 3, kind: input, shape index: {}]
  %s4 = inlined_call_operand.vmem [shape: f32[1,16], index: 4, kind: input, shape index: {}]
  %s5 = inlined_call_operand.vmem [shape: bf16[4,16], index: 5, kind: input, shape index: {}]
  %s6 = inlined_call_operand.vmem [shape: f32[1,16], index: 6, kind: input, shape index: {}]
  %s7 = inlined_call_operand.vmem [shape: bf16[16,16], index: 7, kind: input, shape index: {}]
  %s8 = inlined_call_operand.vmem [shape: bf16[16,16], index: 8, kind: input, shape index: {}]
  %s9 = inlined_call_operand.vmem [shape: bf16[16,16], index: 9, kind: input, shape index: {}]
  %s10 = inlined_call_operand.vmem [shape: f32[1,16], index: 10, kind: input, shape index: {}]
  %s11 = inlined_call_operand.vmem [shape: f32[1,16], index: 11, kind: input, shape index: {}]
  %s12 = inlined_call_operand.vmem [shape: f32[1,16], index: 12, kind: input, shape index: {}]
  %s13 = inlined_call_operand.vmem [shape: bf16[16,16], index: 13, kind: input, shape index: {}]
  %s14 = inlined_call_operand.vmem [shape: f32[1,16], index: 14, kind: input, shape index: {}]
  %s15 = inlined_call_operand.vmem [shape: f32[2,16,16], index: 15, kind: output, shape index: {}]
  %s16 = sld [smem:[#allocation0]]
  $region93: #{temporal_conv_net.2} parent=0
    _
  %s18 = ssub.s32 1, %s16
  %s19 = scalar_select 0, %s18, %s16
  loop: start=0, step=1, limit=4
  $region2: #{temporal_conv_net.2} parent=0 // loop_pre_header
    _
  $region3: #{temporal_conv_net.2} parent=0 // loop_header
    %s21 = sphi 0, %s25
    %p22 = scmp.ge.s32.totalorder %s21, 4
    %s31 = sphi 0, %s33
    %s34 = sphi 0, %s31
    %s35 = sphi 0, %s34
    %s51 = sphi 0, %s35
    %s55 = sphi 0, %s55
    %s57 = sphi 0, %s55
    %s58 = sphi 0, %s57
    %s72 = sphi 0, %s58
    %s76 = sphi 0, %s76
    %s78 = sphi 0, %s76
    %s79 = sphi 0, %s78
    %s93 = sphi 0, %s79
    %s97 = sphi 0, %s97
    %s99 = sphi 0, %s97
    %s100 = sphi 0, %s99
    %s114 = sphi 0, %s100
    %s118 = sphi 0, %s118
    %s120 = sphi 0, %s118
    %s121 = sphi 0, %s120
    %s135 = sphi 0, %s121
    %s139 = sphi 0, %s139
    %s141 = sphi 0, %s139
    %s142 = sphi 0, %s141
    %s156 = sphi 0, %s142
    %s160 = sphi 0, %s160
    %s162 = sphi 0, %s160
    %s163 = sphi 0, %s162
    %s177 = sphi 0, %s163
    %s181 = sphi 0, %s181
    %s183 = sphi 0, %s181
    %s184 = sphi 0, %s183
    %s198 = sphi 0, %s184
    %s202 = sphi 0, %s202
    %s204 = sphi 0, %s202
    %s205 = sphi 0, %s204
    %s219 = sphi 0, %s205
    %s223 = sphi 0, %s223
    %s225 = sphi 0, %s223
    %s226 = sphi 0, %s225
    %s240 = sphi 0, %s226
    %s244 = sphi 0, %s244
    %s246 = sphi 0, %s244
    %s247 = sphi 0, %s246
    %s261 = sphi 0, %s247
    %s265 = sphi 0, %s265
    %s267 = sphi 0, %s265
    %s268 = sphi 0, %s267
    %s282 = sphi 0, %s268
    %s286 = sphi 0, %s286
    %s288 = sphi 0, %s286
    %s289 = sphi 0, %s288
    %s303 = sphi 0, %s289
    %s307 = sphi 0, %s307
    %s309 = sphi 0, %s307
    %s310 = sphi 0, %s309
    %s324 = sphi 0, %s310
    %s328 = sphi 0, %s328
    %s330 = sphi 0, %s328
    %s331 = sphi 0, %s330
    %s345 = sphi 0, %s331
    %s351 = sphi 0, %s353
    %s354 = sphi 0, %s351
    %s355 = sphi 0, %s354
    %s371 = sphi 0, %s355
  $region4: #{temporal_conv_net.2} parent=0 // loop_header_branch
    %24 = sbr.rel (%p22) target = $region8
  $region5: #{temporal_conv_net.2} parent=0 // loop_body
    %s26 = ssub.s32 %s21, 1
    %s27 = ssub.s32 %s21, 2
    %s28 = sadd.s32 %s21, 1
    %s29 = ssub.s32 %s21, %s28
    %p30 = scmp.eq.s32.totalorder %s29, 0
    %s32 = sadd.s32 %s31, 1
    %s33 = scalar_select %p30, %s31, %s32
    %p36 = pneg %p30
    %p37 = scmp.eq.s32.totalorder %s21, 1
    %p38 = por %p36, %p37
    %p39 = scmp.ne.s32.totalorder %s31, %s34
    %p40 = scmp.eq.s32.totalorder %s21, 0
    %p41 = por %p39, %p40
    %p42 = scmp.ne.s32.totalorder %s31, %s34
    %p43 = scmp.eq.s32.totalorder %s26, 1
    %p44 = por %p42, %p43
    %p45 = scmp.ne.s32.totalorder %s34, %s35
    %p46 = scmp.eq.s32.totalorder %s26, 0
    %p47 = por %p45, %p46
    %p48 = scmp.ne.s32.totalorder %s34, %s35
    %p49 = scmp.eq.s32.totalorder %s27, 1
    %p50 = por %p48, %p49
    %p52 = scmp.ne.s32.totalorder %s35, %s51
    %p53 = scmp.eq.s32.totalorder %s27, 0
    %p54 = por %p52, %p53
    %s56 = sadd.s32 %s55, 1
    %p59 = scmp.eq.s32.totalorder %s21, 1
    %p60 = scmp.ne.s32.totalorder %s55, %s57
    %p61 = scmp.eq.s32.totalorder %s21, 0
    %p62 = por %p60, %p61
    %p63 = scmp.ne.s32.totalorder %s55, %s57
    %p64 = scmp.eq.s32.totalorder %s26, 1
    %p65 = por %p63, %p64
    %p66 = scmp.ne.s32.totalorder %s57, %s58
    %p67 = scmp.eq.s32.totalorder %s26, 0
    %p68 = por %p66, %p67
    %p69 = scmp.ne.s32.totalorder %s57, %s58
    %p70 = scmp.eq.s32.totalorder %s27, 1
    %p71 = por %p69, %p70
    %p73 = scmp.ne.s32.totalorder %s58, %s72
    %p74 = scmp.eq.s32.totalorder %s27, 0
    %p75 = por %p73, %p74
    %s77 = sadd.s32 %s76, 1
    %p80 = scmp.eq.s32.totalorder %s21, 1
    %p81 = scmp.ne.s32.totalorder %s76, %s78
    %p82 = scmp.eq.s32.totalorder %s21, 0
    %p83 = por %p81, %p82
    %p84 = scmp.ne.s32.totalorder %s76, %s78
    %p85 = scmp.eq.s32.totalorder %s26, 1
    %p86 = por %p84, %p85
    %p87 = scmp.ne.s32.totalorder %s78, %s79
    %p88 = scmp.eq.s32.totalorder %s26, 0
    %p89 = por %p87, %p88
    %p90 = scmp.ne.s32.totalorder %s78, %s79
    %p91 = scmp.eq.s32.totalorder %s27, 1
    %p92 = por %p90, %p91
    %p94 = scmp.ne.s32.totalorder %s79, %s93
    %p95 = scmp.eq.s32.totalorder %s27, 0
    %p96 = por %p94, %p95
    %s98 = sadd.s32 %s97, 1
    %p101 = scmp.eq.s32.totalorder %s21, 1
    %p102 = scmp.ne.s32.totalorder %s97, %s99
    %p103 = scmp.eq.s32.totalorder %s21, 0
    %p104 = por %p102, %p103
    %p105 = scmp.ne.s32.totalorder %s97, %s99
    %p106 = scmp.eq.s32.totalorder %s26, 1
    %p107 = por %p105, %p106
    %p108 = scmp.ne.s32.totalorder %s99, %s100
    %p109 = scmp.eq.s32.totalorder %s26, 0
    %p110 = por %p108, %p109
    %p111 = scmp.ne.s32.totalorder %s99, %s100
    %p112 = scmp.eq.s32.totalorder %s27, 1
    %p113 = por %p111, %p112
    %p115 = scmp.ne.s32.totalorder %s100, %s114
    %p116 = scmp.eq.s32.totalorder %s27, 0
    %p117 = por %p115, %p116
    %s119 = sadd.s32 %s118, 1
    %p122 = scmp.eq.s32.totalorder %s21, 1
    %p123 = scmp.ne.s32.totalorder %s118, %s120
    %p124 = scmp.eq.s32.totalorder %s21, 0
    %p125 = por %p123, %p124
    %p126 = scmp.ne.s32.totalorder %s118, %s120
    %p127 = scmp.eq.s32.totalorder %s26, 1
    %p128 = por %p126, %p127
    %p129 = scmp.ne.s32.totalorder %s120, %s121
    %p130 = scmp.eq.s32.totalorder %s26, 0
    %p131 = por %p129, %p130
    %p132 = scmp.ne.s32.totalorder %s120, %s121
    %p133 = scmp.eq.s32.totalorder %s27, 1
    %p134 = por %p132, %p133
    %p136 = scmp.ne.s32.totalorder %s121, %s135
    %p137 = scmp.eq.s32.totalorder %s27, 0
    %p138 = por %p136, %p137
    %s140 = sadd.s32 %s139, 1
    %p143 = scmp.eq.s32.totalorder %s21, 1
    %p144 = scmp.ne.s32.totalorder %s139, %s141
    %p145 = scmp.eq.s32.totalorder %s21, 0
    %p146 = por %p144, %p145
    %p147 = scmp.ne.s32.totalorder %s139, %s141
    %p148 = scmp.eq.s32.totalorder %s26, 1
    %p149 = por %p147, %p148
    %p150 = scmp.ne.s32.totalorder %s141, %s142
    %p151 = scmp.eq.s32.totalorder %s26, 0
    %p152 = por %p150, %p151
    %p153 = scmp.ne.s32.totalorder %s141, %s142
    %p154 = scmp.eq.s32.totalorder %s27, 1
    %p155 = por %p153, %p154
    %p157 = scmp.ne.s32.totalorder %s142, %s156
    %p158 = scmp.eq.s32.totalorder %s27, 0
    %p159 = por %p157, %p158
    %s161 = sadd.s32 %s160, 1
    %p164 = scmp.eq.s32.totalorder %s21, 1
    %p165 = scmp.ne.s32.totalorder %s160, %s162
    %p166 = scmp.eq.s32.totalorder %s21, 0
    %p167 = por %p165, %p166
    %p168 = scmp.ne.s32.totalorder %s160, %s162
    %p169 = scmp.eq.s32.totalorder %s26, 1
    %p170 = por %p168, %p169
    %p171 = scmp.ne.s32.totalorder %s162, %s163
    %p172 = scmp.eq.s32.totalorder %s26, 0
    %p173 = por %p171, %p172
    %p174 = scmp.ne.s32.totalorder %s162, %s163
    %p175 = scmp.eq.s32.totalorder %s27, 1
    %p176 = por %p174, %p175
    %p178 = scmp.ne.s32.totalorder %s163, %s177
    %p179 = scmp.eq.s32.totalorder %s27, 0
    %p180 = por %p178, %p179
    %s182 = sadd.s32 %s181, 1
    %p185 = scmp.eq.s32.totalorder %s21, 1
    %p186 = scmp.ne.s32.totalorder %s181, %s183
    %p187 = scmp.eq.s32.totalorder %s21, 0
    %p188 = por %p186, %p187
    %p189 = scmp.ne.s32.totalorder %s181, %s183
    %p190 = scmp.eq.s32.totalorder %s26, 1
    %p191 = por %p189, %p190
    %p192 = scmp.ne.s32.totalorder %s183, %s184
    %p193 = scmp.eq.s32.totalorder %s26, 0
    %p194 = por %p192, %p193
    %p195 = scmp.ne.s32.totalorder %s183, %s184
    %p196 = scmp.eq.s32.totalorder %s27, 1
    %p197 = por %p195, %p196
    %p199 = scmp.ne.s32.totalorder %s184, %s198
    %p200 = scmp.eq.s32.totalorder %s27, 0
    %p201 = por %p199, %p200
    %s203 = sadd.s32 %s202, 1
    %p206 = scmp.eq.s32.totalorder %s21, 1
    %p207 = scmp.ne.s32.totalorder %s202, %s204
    %p208 = scmp.eq.s32.totalorder %s21, 0
    %p209 = por %p207, %p208
    %p210 = scmp.ne.s32.totalorder %s202, %s204
    %p211 = scmp.eq.s32.totalorder %s26, 1
    %p212 = por %p210, %p211
    %p213 = scmp.ne.s32.totalorder %s204, %s205
    %p214 = scmp.eq.s32.totalorder %s26, 0
    %p215 = por %p213, %p214
    %p216 = scmp.ne.s32.totalorder %s204, %s205
    %p217 = scmp.eq.s32.totalorder %s27, 1
    %p218 = por %p216, %p217
    %p220 = scmp.ne.s32.totalorder %s205, %s219
    %p221 = scmp.eq.s32.totalorder %s27, 0
    %p222 = por %p220, %p221
    %s224 = sadd.s32 %s223, 1
    %p227 = scmp.eq.s32.totalorder %s21, 1
    %p228 = scmp.ne.s32.totalorder %s223, %s225
    %p229 = scmp.eq.s32.totalorder %s21, 0
    %p230 = por %p228, %p229
    %p231 = scmp.ne.s32.totalorder %s223, %s225
    %p232 = scmp.eq.s32.totalorder %s26, 1
    %p233 = por %p231, %p232
    %p234 = scmp.ne.s32.totalorder %s225, %s226
    %p235 = scmp.eq.s32.totalorder %s26, 0
    %p236 = por %p234, %p235
    %p237 = scmp.ne.s32.totalorder %s225, %s226
    %p238 = scmp.eq.s32.totalorder %s27, 1
    %p239 = por %p237, %p238
    %p241 = scmp.ne.s32.totalorder %s226, %s240
    %p242 = scmp.eq.s32.totalorder %s27, 0
    %p243 = por %p241, %p242
    %s245 = sadd.s32 %s244, 1
    %p248 = scmp.eq.s32.totalorder %s21, 1
    %p249 = scmp.ne.s32.totalorder %s244, %s246
    %p250 = scmp.eq.s32.totalorder %s21, 0
    %p251 = por %p249, %p250
    %p252 = scmp.ne.s32.totalorder %s244, %s246
    %p253 = scmp.eq.s32.totalorder %s26, 1
    %p254 = por %p252, %p253
    %p255 = scmp.ne.s32.totalorder %s246, %s247
    %p256 = scmp.eq.s32.totalorder %s26, 0
    %p257 = por %p255, %p256
    %p258 = scmp.ne.s32.totalorder %s246, %s247
    %p259 = scmp.eq.s32.totalorder %s27, 1
    %p260 = por %p258, %p259
    %p262 = scmp.ne.s32.totalorder %s247, %s261
    %p263 = scmp.eq.s32.totalorder %s27, 0
    %p264 = por %p262, %p263
    %s266 = sadd.s32 %s265, 1
    %p269 = scmp.eq.s32.totalorder %s21, 1
    %p270 = scmp.ne.s32.totalorder %s265, %s267
    %p271 = scmp.eq.s32.totalorder %s21, 0
    %p272 = por %p270, %p271
    %p273 = scmp.ne.s32.totalorder %s265, %s267
    %p274 = scmp.eq.s32.totalorder %s26, 1
    %p275 = por %p273, %p274
    %p276 = scmp.ne.s32.totalorder %s267, %s268
    %p277 = scmp.eq.s32.totalorder %s26, 0
    %p278 = por %p276, %p277
    %p279 = scmp.ne.s32.totalorder %s267, %s268
    %p280 = scmp.eq.s32.totalorder %s27, 1
    %p281 = por %p279, %p280
    %p283 = scmp.ne.s32.totalorder %s268, %s282
    %p284 = scmp.eq.s32.totalorder %s27, 0
    %p285 = por %p283, %p284
    %s287 = sadd.s32 %s286, 1
    %p290 = scmp.eq.s32.totalorder %s21, 1
    %p291 = scmp.ne.s32.totalorder %s286, %s288
    %p292 = scmp.eq.s32.totalorder %s21, 0
    %p293 = por %p291, %p292
    %p294 = scmp.ne.s32.totalorder %s286, %s288
    %p295 = scmp.eq.s32.totalorder %s26, 1
    %p296 = por %p294, %p295
    %p297 = scmp.ne.s32.totalorder %s288, %s289
    %p298 = scmp.eq.s32.totalorder %s26, 0
    %p299 = por %p297, %p298
    %p300 = scmp.ne.s32.totalorder %s288, %s289
    %p301 = scmp.eq.s32.totalorder %s27, 1
    %p302 = por %p300, %p301
    %p304 = scmp.ne.s32.totalorder %s289, %s303
    %p305 = scmp.eq.s32.totalorder %s27, 0
    %p306 = por %p304, %p305
    %s308 = sadd.s32 %s307, 1
    %p311 = scmp.eq.s32.totalorder %s21, 1
    %p312 = scmp.ne.s32.totalorder %s307, %s309
    %p313 = scmp.eq.s32.totalorder %s21, 0
    %p314 = por %p312, %p313
    %p315 = scmp.ne.s32.totalorder %s307, %s309
    %p316 = scmp.eq.s32.totalorder %s26, 1
    %p317 = por %p315, %p316
    %p318 = scmp.ne.s32.totalorder %s309, %s310
    %p319 = scmp.eq.s32.totalorder %s26, 0
    %p320 = por %p318, %p319
    %p321 = scmp.ne.s32.totalorder %s309, %s310
    %p322 = scmp.eq.s32.totalorder %s27, 1
    %p323 = por %p321, %p322
    %p325 = scmp.ne.s32.totalorder %s310, %s324
    %p326 = scmp.eq.s32.totalorder %s27, 0
    %p327 = por %p325, %p326
    %s329 = sadd.s32 %s328, 1
    %p332 = scmp.eq.s32.totalorder %s21, 1
    %p333 = scmp.ne.s32.totalorder %s328, %s330
    %p334 = scmp.eq.s32.totalorder %s21, 0
    %p335 = por %p333, %p334
    %p336 = scmp.ne.s32.totalorder %s328, %s330
    %p337 = scmp.eq.s32.totalorder %s26, 1
    %p338 = por %p336, %p337
    %p339 = scmp.ne.s32.totalorder %s330, %s331
    %p340 = scmp.eq.s32.totalorder %s26, 0
    %p341 = por %p339, %p340
    %p342 = scmp.ne.s32.totalorder %s330, %s331
    %p343 = scmp.eq.s32.totalorder %s27, 1
    %p344 = por %p342, %p343
    %p346 = scmp.ne.s32.totalorder %s331, %s345
    %p347 = scmp.eq.s32.totalorder %s27, 0
    %p348 = por %p346, %p347
    %s349 = ssub.s32 %s21, %s28
    %p350 = scmp.eq.s32.totalorder %s349, 0
    %s352 = sadd.s32 %s351, 1
    %s353 = scalar_select %p350, %s351, %s352
    %p356 = pneg %p350
    %p357 = scmp.eq.s32.totalorder %s21, 1
    %p358 = por %p356, %p357
    %p359 = scmp.ne.s32.totalorder %s351, %s354
    %p360 = scmp.eq.s32.totalorder %s21, 0
    %p361 = por %p359, %p360
    %p362 = scmp.ne.s32.totalorder %s351, %s354
    %p363 = scmp.eq.s32.totalorder %s26, 1
    %p364 = por %p362, %p363
    %p365 = scmp.ne.s32.totalorder %s354, %s355
    %p366 = scmp.eq.s32.totalorder %s26, 0
    %p367 = por %p365, %p366
    %p368 = scmp.ne.s32.totalorder %s354, %s355
    %p369 = scmp.eq.s32.totalorder %s27, 1
    %p370 = por %p368, %p369
    %p372 = scmp.ne.s32.totalorder %s355, %s371
    %p373 = scmp.eq.s32.totalorder %s27, 0
    %p374 = por %p372, %p373
    %p375 = scmp.le.s32.totalorder 1, %s21
    %p376 = scmp.lt.s32.totalorder %s21, 3
    %p377 = pnand %p375, %p376
    %p378 = pneg %p377
    // Predicated region
    $region9: #{temporal_conv_net.2} parent=5 // pred_check
      _
    $region10: #{temporal_conv_net.2} parent=5 // pred_check_branch
      %380 = sbr.rel (%p377) target = $region12
    $region11: #{temporal_conv_net.2} parent=5 // pred_region
      %s381 = ssub.s32 %s21, 1
      // Predicated region
      $region13: #{temporal_conv_net.2} parent=11 // pred_check
        %p382 = pneg %p68
      $region14: #{temporal_conv_net.2} parent=11 // pred_check_branch
        %384 = sbr.rel (%p382) target = $region16
      $region15: #{temporal_conv_net.2} parent=11 // pred_region
        _
      $region16: #{temporal_conv_net.2} parent=11 // pred_fallthru
        _
      // Predicated region
      $region17: #{temporal_conv_net.2} parent=11 // pred_check
        %p385 = pneg %p89
      $region18: #{temporal_conv_net.2} parent=11 // pred_check_branch
        %387 = sbr.rel (%p385) target = $region20
      $region19: #{temporal_conv_net.2} parent=11 // pred_region
        _
      $region20: #{temporal_conv_net.2} parent=11 // pred_fallthru
        _
      // Predicated region
      $region21: #{temporal_conv_net.2} parent=11 // pred_check
        %p388 = pneg %p110
      $region22: #{temporal_conv_net.2} parent=11 // pred_check_branch
        %390 = sbr.rel (%p388) target = $region24
      $region23: #{temporal_conv_net.2} parent=11 // pred_region
        _
      $region24: #{temporal_conv_net.2} parent=11 // pred_fallthru
        _
      // Predicated region
      $region25: #{temporal_conv_net.2} parent=11 // pred_check
        %p391 = pneg %p131
      $region26: #{temporal_conv_net.2} parent=11 // pred_check_branch
        %393 = sbr.rel (%p391) target = $region28
      $region27: #{temporal_conv_net.2} parent=11 // pred_region
        _
      $region28: #{temporal_conv_net.2} parent=11 // pred_fallthru
        _
      // Predicated region
      $region29: #{temporal_conv_net.2} parent=11 // pred_check
        %p394 = pneg %p152
      $region30: #{temporal_conv_net.2} parent=11 // pred_check_branch
        %396 = sbr.rel (%p394) target = $region32
      $region31: #{temporal_conv_net.2} parent=11 // pred_region
        _
      $region32: #{temporal_conv_net.2} parent=11 // pred_fallthru
        _
      // Predicated region
      $region33: #{temporal_conv_net.2} parent=11 // pred_check
        %p397 = pneg %p173
      $region34: #{temporal_conv_net.2} parent=11 // pred_check_branch
        %399 = sbr.rel (%p397) target = $region36
      $region35: #{temporal_conv_net.2} parent=11 // pred_region
        _
      $region36: #{temporal_conv_net.2} parent=11 // pred_fallthru
        _
      // Predicated region
      $region37: #{temporal_conv_net.2} parent=11 // pred_check
        %p400 = pneg %p194
      $region38: #{temporal_conv_net.2} parent=11 // pred_check_branch
        %402 = sbr.rel (%p400) target = $region40
      $region39: #{temporal_conv_net.2} parent=11 // pred_region
        _
      $region40: #{temporal_conv_net.2} parent=11 // pred_fallthru
        _
      // Predicated region
      $region41: #{temporal_conv_net.2} parent=11 // pred_check
        %p403 = pneg %p215
      $region42: #{temporal_conv_net.2} parent=11 // pred_check_branch
        %405 = sbr.rel (%p403) target = $region44
      $region43: #{temporal_conv_net.2} parent=11 // pred_region
        _
      $region44: #{temporal_conv_net.2} parent=11 // pred_fallthru
        _
      // Predicated region
      $region45: #{temporal_conv_net.2} parent=11 // pred_check
        %p406 = pneg %p236
      $region46: #{temporal_conv_net.2} parent=11 // pred_check_branch
        %408 = sbr.rel (%p406) target = $region48
      $region47: #{temporal_conv_net.2} parent=11 // pred_region
        _
      $region48: #{temporal_conv_net.2} parent=11 // pred_fallthru
        _
      // Predicated region
      $region49: #{temporal_conv_net.2} parent=11 // pred_check
        %p409 = pneg %p257
      $region50: #{temporal_conv_net.2} parent=11 // pred_check_branch
        %411 = sbr.rel (%p409) target = $region52
      $region51: #{temporal_conv_net.2} parent=11 // pred_region
        _
      $region52: #{temporal_conv_net.2} parent=11 // pred_fallthru
        _
      // Predicated region
      $region53: #{temporal_conv_net.2} parent=11 // pred_check
        %p412 = pneg %p278
      $region54: #{temporal_conv_net.2} parent=11 // pred_check_branch
        %414 = sbr.rel (%p412) target = $region56
      $region55: #{temporal_conv_net.2} parent=11 // pred_region
        _
      $region56: #{temporal_conv_net.2} parent=11 // pred_fallthru
        _
      // Predicated region
      $region57: #{temporal_conv_net.2} parent=11 // pred_check
        %p415 = pneg %p299
      $region58: #{temporal_conv_net.2} parent=11 // pred_check_branch
        %417 = sbr.rel (%p415) target = $region60
      $region59: #{temporal_conv_net.2} parent=11 // pred_region
        _
      $region60: #{temporal_conv_net.2} parent=11 // pred_fallthru
        _
      // Predicated region
      $region61: #{temporal_conv_net.2} parent=11 // pred_check
        %p418 = pneg %p320
      $region62: #{temporal_conv_net.2} parent=11 // pred_check_branch
        %420 = sbr.rel (%p418) target = $region64
      $region63: #{temporal_conv_net.2} parent=11 // pred_region
        _
      $region64: #{temporal_conv_net.2} parent=11 // pred_fallthru
        _
      // Predicated region
      $region65: #{temporal_conv_net.2} parent=11 // pred_check
        %p421 = pneg %p341
      $region66: #{temporal_conv_net.2} parent=11 // pred_check_branch
        %423 = sbr.rel (%p421) target = $region68
      $region67: #{temporal_conv_net.2} parent=11 // pred_region
        _
      $region68: #{temporal_conv_net.2} parent=11 // pred_fallthru
        _
    $region12: #{temporal_conv_net.2} parent=5 // pred_fallthru
      _
    %p424 = scmp.lt.s32.totalorder %s21, 2
    // Predicated region
    $region69: #{temporal_conv_net.2} parent=5 // pred_check
      %p425 = pneg %p424
    $region70: #{temporal_conv_net.2} parent=5 // pred_check_branch
      %427 = sbr.rel (%p425) target = $region72
    $region71: #{temporal_conv_net.2} parent=5 // pred_region
      // Predicated region
      $region73: #{temporal_conv_net.2} parent=71 // pred_check
        %p428 = pneg %p41
      $region74: #{temporal_conv_net.2} parent=71 // pred_check_branch
        %430 = sbr.rel (%p428) target = $region76
      $region75: #{temporal_conv_net.2} parent=71 // pred_region
        %p431 = scmp.lt.s32.totalorder %s21, 1
        %s432 = scalar_select %p431, %s21, 1
        %s433 = smul.addr %s432, 2
        %s434 = smul.addr %s433, 8
        %s435 = scalar_lea.vmem %s0, %s434
      $region76: #{temporal_conv_net.2} parent=71 // pred_fallthru
        _
    $region72: #{temporal_conv_net.2} parent=5 // pred_fallthru
      _
    %p436 = scmp.le.s32.totalorder 1, %s21
    %p437 = scmp.lt.s32.totalorder %s21, 3
    %p438 = pnand %p436, %p437
    %p439 = pneg %p438
    // Predicated region
    $region77: #{temporal_conv_net.2} parent=5 // pred_check
      _
    $region78: #{temporal_conv_net.2} parent=5 // pred_check_branch
      %441 = sbr.rel (%p438) target = $region80
    $region79: #{temporal_conv_net.2} parent=5 // pred_region
      %s442 = ssub.s32 %s21, 1
      %p443 = scmp.lt.s32.totalorder %s26, 1
      %s444 = scalar_select %p443, %s26, 1
      %s445 = smul.addr %s444, 2
      %s446 = smul.addr %s445, 8
      %s447 = scalar_lea.vmem %s0, %s446
      %p448 = pneg %p47
      %p449 = pneg %p44
      %p450 = pneg %p68
      %p451 = pneg %p65
      %p452 = pneg %p89
      %p453 = pneg %p86
      %p454 = pneg %p110
      %p455 = pneg %p107
      %p456 = pneg %p131
      %p457 = pneg %p128
      %p458 = pneg %p152
      %p459 = pneg %p149
      %p460 = pneg %p173
      %p461 = pneg %p170
      %p462 = pneg %p194
      %p463 = pneg %p191
      %p464 = pneg %p215
      %p465 = pneg %p212
      %p466 = pneg %p236
      %p467 = pneg %p233
      %p468 = pneg %p257
      %p469 = pneg %p254
      %p470 = pneg %p278
      %p471 = pneg %p275
      %p472 = pneg %p299
      %p473 = pneg %p296
      %p474 = pneg %p320
      %p475 = pneg %p317
      %p476 = pneg %p341
      %p477 = pneg %p338
      %p478 = pneg %p367
      %p479 = pneg %p364
      %p480 = scmp.lt.s32.totalorder %s26, 1
      %s481 = scalar_select %p480, %s26, 1
      %s482 = smul.addr %s481, 2
      %s483 = smul.addr %s482, 8
      %s484 = scalar_lea.vmem %s15, %s483
      %p485 = scmp.lt.s32.totalorder %s26, 1
      %s486 = scalar_select %p485, %s26, 1
      %s487 = smul.addr %s486, 2
      %s488 = smul.addr %s487, 8
      %s489 = scalar_lea.vmem %s0, %s488
      %p490 = scmp.lt.s32.totalorder %s26, 1
      %s491 = scalar_select %p490, %s26, 1
      %s492 = smul.addr %s491, 2
      %s493 = smul.addr %s492, 8
      %s494 = scalar_lea.vmem %s15, %s493
      %v496 = vld [vmem:[%s489] sm:$0xff]
      %v497 = vld [vmem:[%s489 + $0x8] sm:$0xff]
      %vm498 = vcmask 64512
      %499 = vst.msk [vmem:[#allocation2] sm:$0xff] %vm498, 0.0
      %500 = vst.msk [vmem:[#allocation2 + $0x8] sm:$0xff] %vm498, 0.0
      %vm501 = vcmask 31744
      %502 = vst.msk [vmem:[#allocation2 + $0x1] sm:$0xff] %vm501, %v496
      %vm503 = vcmask 30720
      %504 = vst.msk [vmem:[#allocation2 + $0x9] sm:$0x7f] %vm503, %v497
      %507 = vrot.lane.b32.xlu0 %v496, 4
      %v508 = vpop.permute.xlu0 %507
      %509 = vrot.lane.b32.xlu0 %v497, 4
      %v510 = vpop.permute.xlu0 %509
      %vm513 = vcmask 64544
      %514 = vst.msk [vmem:[#allocation2] sm:$0xff] %vm513, %v508
      %515 = vst.msk [vmem:[#allocation2 + $0x8] sm:$0xff] %vm513, %v510
      %v516 = vld [vmem:[#allocation2] sm:$0xff]
      %v517 = vld [vmem:[#allocation2 + $0x8] sm:$0xff]
      %v518 = vpack.c.bf16 %v517, %v516
      %v519 = vld [vmem:[%s1] sm:$0xf]
      %v520 = vld [vmem:[%s2] sm:$0x1]
      %v522 = vperm.slane %v520, 0
      %v525 = vsel %vm498, %v518, 0
      %vm527 = vcmask 1043456
      %v529 = vsel %vm527, %v519, 0
      %531 = vmatpush.bf16.msra.mxu0 0
      %532 = vmatpush.bf16.msra.mxu0 0
      %533 = vmatpush.bf16.msra.mxu0 0
      %534 = vmatpush.bf16.msra.mxu0 0
      %535 = vmatpush.bf16.msra.mxu0 0
      %536 = vmatpush.bf16.msra.mxu0 0
      %537 = vmatpush.bf16.msra.mxu0 0
      %538 = vmatpush.bf16.msra.mxu0 %v529
      %539 = vmatmul.bf16.gmra.mxu0 %v525
      %v540 = vpop.f32.mrf.mxu0
      %v541 = vadd.f32 %v522, %v540
      %v542 = vpop.f32.mrf.mxu0
      %v543 = vadd.f32 %v522, %v542
      %544 = vdwg.mxu0
      %v545 = vmax.f32 %v541, 0.0
      %v546 = vmax.f32 %v543, 0.0
      %vm547 = vcmask 261120
      %548 = vst.msk [vmem:[#allocation3] sm:$0xff] %vm547, 0.0
      %549 = vst.msk [vmem:[#allocation3 + $0x8] sm:$0xff] %vm547, 0.0
      %vm550 = vcmask 130048
      %551 = vst.msk [vmem:[#allocation3 + $0x1] sm:$0xff] %vm550, %v545
      %vm552 = vcmask 129024
      %553 = vst.msk [vmem:[#allocation3 + $0x9] sm:$0x7f] %vm552, %v546
      %556 = vrot.lane.b32.xlu0 %v545, 16
      %v557 = vpop.permute.xlu0 %556
      %558 = vrot.lane.b32.xlu0 %v546, 16
      %v559 = vpop.permute.xlu0 %558
      %vm562 = vcmask 261248
      %563 = vst.msk [vmem:[#allocation3] sm:$0xff] %vm562, %v557
      %564 = vst.msk [vmem:[#allocation3 + $0x8] sm:$0xff] %vm562, %v559
      %v565 = vld [vmem:[#allocation3] sm:$0xff]
      %v566 = vld [vmem:[#allocation3 + $0x8] sm:$0xff]
      %v567 = vpack.c.bf16 %v566, %v565
      %v568 = vld [vmem:[%s3] sm:$0xf]
      %v569 = vld [vmem:[%s3 + $0x4] sm:$0xf]
      %v570 = vld [vmem:[%s3 + $0x8] sm:$0xf]
      %v571 = vld [vmem:[%s3 + $0xc] sm:$0xf]
      %v572 = vld [vmem:[%s4] sm:$0x1]
      %v574 = vperm.slane %v572, 0
      %v580 = vunpack.c.l.b16 %v568
      %v581 = vunpack.c.l.b16 %v569
      %v582 = vunpack.c.l.b16 %v570
      %v583 = vunpack.c.l.b16 %v571
      %v584 = vpack.c.b16 %v581, %v580
      %v585 = vpack.c.b16 %v583, %v582
      %v589 = vsel %vm547, %v567, 0
      %591 = vmatpush.bf16.msra.mxu0 0
      %592 = vmatpush.bf16.msra.mxu0 0
      %593 = vmatpush.bf16.msra.mxu0 0
      %594 = vmatpush.bf16.msra.mxu0 0
      %595 = vmatpush.bf16.msra.mxu0 0
      %596 = vmatpush.bf16.msra.mxu0 0
      %597 = vmatpush.bf16.msra.mxu0 %v585
      %598 = vmatpush.bf16.msra.mxu0 %v584
      %599 = vmatmul.bf16.gmra.mxu0 %v589
      %v600 = vpop.f32.mrf.mxu0
      %v601 = vadd.f32 %v574, %v600
      %v602 = vpop.f32.mrf.mxu0
      %v603 = vadd.f32 %v574, %v602
      %604 = vdwg.mxu0
      %v605 = vmax.f32 %v601, 0.0
      %v606 = vmax.f32 %v603, 0.0
      %v607 = vpack.c.bf16 %v497, %v496
      %v608 = vld [vmem:[%s5] sm:$0x3]
      %v609 = vld [vmem:[%s6] sm:$0x1]
      %v611 = vperm.slane %v609, 0
      %v614 = vsel %vm501, %v607, 0
      %vm616 = vcmask 1041408
      %v618 = vsel %vm616, %v608, 0
      %620 = vmatpush.bf16.msra.mxu0 0
      %621 = vmatpush.bf16.msra.mxu0 0
      %622 = vmatpush.bf16.msra.mxu0 0
      %623 = vmatpush.bf16.msra.mxu0 0
      %624 = vmatpush.bf16.msra.mxu0 0
      %625 = vmatpush.bf16.msra.mxu0 0
      %626 = vmatpush.bf16.msra.mxu0 0
      %627 = vmatpush.bf16.msra.mxu0 %v618
      %628 = vmatmul.bf16.gmra.mxu0 %v614
      %v629 = vpop.f32.mrf.mxu0
      %v630 = vadd.f32 %v611, %v629
      %v631 = vpop.f32.mrf.mxu0
      %v632 = vadd.f32 %v611, %v631
      %633 = vdwg.mxu0
      %v634 = vpack.c.bf16 %v606, %v605
      %v635 = vld [vmem:[%s7] sm:$0xf]
      %v636 = vld [vmem:[%s7 + $0x4] sm:$0xf]
      %v637 = vld [vmem:[%s10] sm:$0x1]
      %v639 = vperm.slane %v637, 0
      %v643 = vunpack.c.l.b16 %v635
      %v644 = vunpack.c.l.b16 %v636
      %v645 = vpack.c.b16 %v644, %v643
      %v648 = vsel %vm550, %v634, 0
      %650 = vmatpush.bf16.msra.mxu0 0
      %651 = vmatpush.bf16.msra.mxu0 0
      %652 = vmatpush.bf16.msra.mxu0 0
      %653 = vmatpush.bf16.msra.mxu0 0
      %654 = vmatpush.bf16.msra.mxu0 0
      %655 = vmatpush.bf16.msra.mxu0 0
      %656 = vmatpush.bf16.msra.mxu0 0
      %657 = vmatpush.bf16.msra.mxu0 %v645
      %658 = vmatmul.bf16.gmra.mxu0 %v648
      %v659 = vpop.f32.mrf.mxu0
      %v660 = vadd.f32 %v639, %v659
      %v661 = vpop.f32.mrf.mxu0
      %v662 = vadd.f32 %v639, %v661
      %663 = vdwg.mxu0
      %v664 = vmul.f32 %v660, 0.5
      %v665 = vmul.f32 %v662, 0.5
      %v666 = vld [vmem:[%s8] sm:$0xf]
      %v667 = vld [vmem:[%s8 + $0x4] sm:$0xf]
      %v668 = vld [vmem:[%s11] sm:$0x1]
      %v670 = vperm.slane %v668, 0
      %v674 = vunpack.c.l.b16 %v666
      %v675 = vunpack.c.l.b16 %v667
      %v676 = vpack.c.b16 %v675, %v674
      %678 = vmatpush.bf16.msra.mxu0 0
      %679 = vmatpush.bf16.msra.mxu0 0
      %680 = vmatpush.bf16.msra.mxu0 0
      %681 = vmatpush.bf16.msra.mxu0 0
      %682 = vmatpush.bf16.msra.mxu0 0
      %683 = vmatpush.bf16.msra.mxu0 0
      %684 = vmatpush.bf16.msra.mxu0 0
      %685 = vmatpush.bf16.msra.mxu0 %v676
      %686 = vmatmul.bf16.gmra.mxu0 %v648
      %v687 = vpop.f32.mrf.mxu0
      %v688 = vadd.f32 %v670, %v687
      %v689 = vpop.f32.mrf.mxu0
      %v690 = vadd.f32 %v670, %v689
      %691 = vdwg.mxu0
      %v692 = vld [vmem:[%s9] sm:$0xf]
      %v693 = vld [vmem:[%s9 + $0x4] sm:$0xf]
      %v694 = vld [vmem:[%s12] sm:$0x1]
      %v696 = vperm.slane %v694, 0
      %v700 = vunpack.c.l.b16 %v692
      %v701 = vunpack.c.l.b16 %v693
      %v702 = vpack.c.b16 %v701, %v700
      %704 = vmatpush.bf16.msra.mxu0 0
      %705 = vmatpush.bf16.msra.mxu0 0
      %706 = vmatpush.bf16.msra.mxu0 0
      %707 = vmatpush.bf16.msra.mxu0 0
      %708 = vmatpush.bf16.msra.mxu0 0
      %709 = vmatpush.bf16.msra.mxu0 0
      %710 = vmatpush.bf16.msra.mxu0 0
      %711 = vmatpush.bf16.msra.mxu0 %v702
      %712 = vmatmul.bf16.gmra.mxu0 %v648
      %v713 = vpop.f32.mrf.mxu0
      %v714 = vadd.f32 %v696, %v713
      %v715 = vpop.f32.mrf.mxu0
      %v716 = vadd.f32 %v696, %v715
      %717 = vdwg.mxu0
      %v718 = vpack.c.bf16 %v664, %v664
      %v719 = vpack.c.bf16 %v665, %v665
      %v720 = vpack.c.bf16 %v688, %v688
      %v721 = vpack.c.bf16 %v690, %v690
      %v722 = vpack.c.bf16 %v714, %v714
      %v723 = vpack.c.bf16 %v716, %v716
      %v726 = vunpack.c.l.b16 %v718
      %v727 = vunpack.c.l.b16 %v719
      %v728 = vpack.c.b16 %v727, %v726
      %v731 = vunpack.c.l.b16 %v720
      %v732 = vunpack.c.l.b16 %v721
      %v733 = vpack.c.b16 %v732, %v731
      %v735 = vsel %vm501, %v728, 0
      %v738 = vsel %vm501, %v733, 0
      %740 = vmatpush.bf16.xpose.msra.mxu0 0
      %741 = vmatpush.bf16.xpose.msra.mxu0 0
      %742 = vmatpush.bf16.xpose.msra.mxu0 0
      %743 = vmatpush.bf16.xpose.msra.mxu0 0
      %744 = vmatpush.bf16.xpose.msra.mxu0 0
      %745 = vmatpush.bf16.xpose.msra.mxu0 0
      %746 = vmatpush.bf16.xpose.msra.mxu0 0
      %747 = vmatpush.bf16.xpose.msra.mxu0 %v738
      %748 = vmatmul.bf16.gmra.mxu0 %v735
      %v749 = vpop.f32.mrf.mxu0
      %v750 = vadd.f32 0.0, %v749
      %v751 = vpop.f32.mrf.mxu0
      %v752 = vadd.f32 0.0, %v751
      %753 = vdwg.mxu0
      %v754 = vsel %vm550, %v750, -inf
      %755 = vmax.xlane.f32.xlu0 %v754
      %v756 = vpop.xlane.xlu0 %755
      %v757 = vsel %vm550, %v752, -inf
      %758 = vmax.xlane.f32.xlu0 %v757
      %v759 = vpop.xlane.xlu0 %758
      %v760 = vsub.f32 %v750, %v756
      %v761 = vsub.f32 %v752, %v759
      %v762 = vmul.f32 %v760, 1.442695
      %v763 = vpow.pop %v762
      %v764 = vmul.f32 %v761, 1.442695
      %v765 = vpow.pop %v764
      %v766 = vsel %vm550, %v763, 0.0
      %767 = vadd.xlane.f32.xlu0 %v766
      %v768 = vpop.xlane.xlu0 %767
      %v769 = vsel %vm550, %v765, 0.0
      %770 = vadd.xlane.f32.xlu0 %v769
      %v771 = vpop.xlane.xlu0 %770
      %v772 = vrcp.pop %v768
      %v773 = vrcp.pop %v771
      %v774 = vmul.f32 %v763, %v772
      %v775 = vmul.f32 %v765, %v773
      %v776 = vpack.c.bf16 %v774, %v774
      %v777 = vpack.c.bf16 %v775, %v775
      %v780 = vunpack.c.l.b16 %v776
      %v781 = vunpack.c.l.b16 %v777
      %v782 = vpack.c.b16 %v781, %v780
      %v785 = vunpack.c.l.b16 %v722
      %v786 = vunpack.c.l.b16 %v723
      %v787 = vpack.c.b16 %v786, %v785
      %v790 = vsel %vm550, %v782, 0
      %792 = vmatpush.bf16.msra.mxu0 0
      %793 = vmatpush.bf16.msra.mxu0 0
      %794 = vmatpush.bf16.msra.mxu0 0
      %795 = vmatpush.bf16.msra.mxu0 0
      %796 = vmatpush.bf16.msra.mxu0 0
      %797 = vmatpush.bf16.msra.mxu0 0
      %798 = vmatpush.bf16.msra.mxu0 0
      %799 = vmatpush.bf16.msra.mxu0 %v787
      %800 = vmatmul.bf16.gmra.mxu0 %v790
      %v801 = vpop.f32.mrf.mxu0
      %v802 = vadd.f32 0.0, %v801
      %v803 = vpop.f32.mrf.mxu0
      %v804 = vadd.f32 0.0, %v803
      %805 = vdwg.mxu0
      %806 = vst.msk [vmem:[#allocation4] sm:$0xff] %vm501, %v802
      %807 = vst.msk [vmem:[#allocation4 + $0x8] sm:$0xff] %vm501, %v804
      %808 = vrot.lane.b32.xlu0 %v728, 124
      %v809 = vpop.permute.xlu0 %808
      %810 = vrot.lane.b32.xlu0 %v733, 124
      %v811 = vpop.permute.xlu0 %810
      %v813 = vsel %vm501, %v809, 0
      %v816 = vsel %vm501, %v811, 0
      %818 = vmatpush.bf16.xpose.msra.mxu0 0
      %819 = vmatpush.bf16.xpose.msra.mxu0 0
      %820 = vmatpush.bf16.xpose.msra.mxu0 0
      %821 = vmatpush.bf16.xpose.msra.mxu0 0
      %822 = vmatpush.bf16.xpose.msra.mxu0 0
      %823 = vmatpush.bf16.xpose.msra.mxu0 0
      %824 = vmatpush.bf16.xpose.msra.mxu0 0
      %825 = vmatpush.bf16.xpose.msra.mxu0 %v816
      %826 = vmatmul.bf16.gmra.mxu0 %v813
      %v827 = vpop.f32.mrf.mxu0
      %v828 = vadd.f32 0.0, %v827
      %v829 = vpop.f32.mrf.mxu0
      %v830 = vadd.f32 0.0, %v829
      %831 = vdwg.mxu0
      %v832 = vsel %vm550, %v828, -inf
      %833 = vmax.xlane.f32.xlu0 %v832
      %v834 = vpop.xlane.xlu0 %833
      %v835 = vsel %vm550, %v830, -inf
      %836 = vmax.xlane.f32.xlu0 %v835
      %v837 = vpop.xlane.xlu0 %836
      %v838 = vsub.f32 %v828, %v834
      %v839 = vsub.f32 %v830, %v837
      %v840 = vmul.f32 %v838, 1.442695
      %v841 = vpow.pop %v840
      %v842 = vmul.f32 %v839, 1.442695
      %v843 = vpow.pop %v842
      %v844 = vsel %vm550, %v841, 0.0
      %845 = vadd.xlane.f32.xlu0 %v844
      %v846 = vpop.xlane.xlu0 %845
      %v847 = vsel %vm550, %v843, 0.0
      %848 = vadd.xlane.f32.xlu0 %v847
      %v849 = vpop.xlane.xlu0 %848
      %v850 = vrcp.pop %v846
      %v851 = vrcp.pop %v849
      %v852 = vmul.f32 %v841, %v850
      %v853 = vmul.f32 %v843, %v851
      %v854 = vpack.c.bf16 %v852, %v852
      %v855 = vpack.c.bf16 %v853, %v853
      %v858 = vunpack.c.l.b16 %v854
      %v859 = vunpack.c.l.b16 %v855
      %v860 = vpack.c.b16 %v859, %v858
      %861 = vrot.lane.b32.xlu0 %v787, 124
      %v862 = vpop.permute.xlu0 %861
      %v865 = vsel %vm550, %v860, 0
      %867 = vmatpush.bf16.msra.mxu0 0
      %868 = vmatpush.bf16.msra.mxu0 0
      %869 = vmatpush.bf16.msra.mxu0 0
      %870 = vmatpush.bf16.msra.mxu0 0
      %871 = vmatpush.bf16.msra.mxu0 0
      %872 = vmatpush.bf16.msra.mxu0 0
      %873 = vmatpush.bf16.msra.mxu0 0
      %874 = vmatpush.bf16.msra.mxu0 %v862
      %875 = vmatmul.bf16.gmra.mxu0 %v865
      %v876 = vpop.f32.mrf.mxu0
      %v877 = vadd.f32 0.0, %v876
      %v878 = vpop.f32.mrf.mxu0
      %v879 = vadd.f32 0.0, %v878
      %880 = vdwg.mxu0
      %883 = vrot.lane.b32.xlu0 %v877, 4
      %v884 = vpop.permute.xlu0 %883
      %885 = vrot.lane.b32.xlu0 %v879, 4
      %v886 = vpop.permute.xlu0 %885
      %889 = vst.msk [vmem:[#allocation4] sm:$0xff] %vm513, %v884
      %890 = vst.msk [vmem:[#allocation4 + $0x8] sm:$0xff] %vm513, %v886
      %891 = vrot.lane.b32.xlu0 %v728, 120
      %v892 = vpop.permute.xlu0 %891
      %893 = vrot.lane.b32.xlu0 %v733, 120
      %v894 = vpop.permute.xlu0 %893
      %v896 = vsel %vm501, %v892, 0
      %v899 = vsel %vm501, %v894, 0
      %901 = vmatpush.bf16.xpose.msra.mxu0 0
      %902 = vmatpush.bf16.xpose.msra.mxu0 0
      %903 = vmatpush.bf16.xpose.msra.mxu0 0
      %904 = vmatpush.bf16.xpose.msra.mxu0 0
      %905 = vmatpush.bf16.xpose.msra.mxu0 0
      %906 = vmatpush.bf16.xpose.msra.mxu0 0
      %907 = vmatpush.bf16.xpose.msra.mxu0 0
      %908 = vmatpush.bf16.xpose.msra.mxu0 %v899
      %909 = vmatmul.bf16.gmra.mxu0 %v896
      %v910 = vpop.f32.mrf.mxu0
      %v911 = vadd.f32 0.0, %v910
      %v912 = vpop.f32.mrf.mxu0
      %v913 = vadd.f32 0.0, %v912
      %914 = vdwg.mxu0
      %v915 = vsel %vm550, %v911, -inf
      %916 = vmax.xlane.f32.xlu0 %v915
      %v917 = vpop.xlane.xlu0 %916
      %v918 = vsel %vm550, %v913, -inf
      %919 = vmax.xlane.f32.xlu0 %v918
      %v920 = vpop.xlane.xlu0 %919
      %v921 = vsub.f32 %v911, %v917
      %v922 = vsub.f32 %v913, %v920
      %v923 = vmul.f32 %v921, 1.442695
      %v924 = vpow.pop %v923
      %v925 = vmul.f32 %v922, 1.442695
      %v926 = vpow.pop %v925
      %v927 = vsel %vm550, %v924, 0.0
      %928 = vadd.xlane.f32.xlu0 %v927
      %v929 = vpop.xlane.xlu0 %928
      %v930 = vsel %vm550, %v926, 0.0
      %931 = vadd.xlane.f32.xlu0 %v930
      %v932 = vpop.xlane.xlu0 %931
      %v933 = vrcp.pop %v929
      %v934 = vrcp.pop %v932
      %v935 = vmul.f32 %v924, %v933
      %v936 = vmul.f32 %v926, %v934
      %v937 = vpack.c.bf16 %v935, %v935
      %v938 = vpack.c.bf16 %v936, %v936
      %v941 = vunpack.c.l.b16 %v937
      %v942 = vunpack.c.l.b16 %v938
      %v943 = vpack.c.b16 %v942, %v941
      %944 = vrot.lane.b32.xlu0 %v787, 120
      %v945 = vpop.permute.xlu0 %944
      %v948 = vsel %vm550, %v943, 0
      %950 = vmatpush.bf16.msra.mxu0 0
      %951 = vmatpush.bf16.msra.mxu0 0
      %952 = vmatpush.bf16.msra.mxu0 0
      %953 = vmatpush.bf16.msra.mxu0 0
      %954 = vmatpush.bf16.msra.mxu0 0
      %955 = vmatpush.bf16.msra.mxu0 0
      %956 = vmatpush.bf16.msra.mxu0 0
      %957 = vmatpush.bf16.msra.mxu0 %v945
      %958 = vmatmul.bf16.gmra.mxu0 %v948
      %v959 = vpop.f32.mrf.mxu0
      %v960 = vadd.f32 0.0, %v959
      %v961 = vpop.f32.mrf.mxu0
      %v962 = vadd.f32 0.0, %v961
      %963 = vdwg.mxu0
      %966 = vrot.lane.b32.xlu0 %v960, 8
      %v967 = vpop.permute.xlu0 %966
      %968 = vrot.lane.b32.xlu0 %v962, 8
      %v969 = vpop.permute.xlu0 %968
      %vm972 = vcmask 97344
      %973 = vst.msk [vmem:[#allocation4] sm:$0xff] %vm972, %v967
      %974 = vst.msk [vmem:[#allocation4 + $0x8] sm:$0xff] %vm972, %v969
      %975 = vrot.lane.b32.xlu0 %v728, 116
      %v976 = vpop.permute.xlu0 %975
      %977 = vrot.lane.b32.xlu0 %v733, 116
      %v978 = vpop.permute.xlu0 %977
      %v980 = vsel %vm501, %v976, 0
      %v983 = vsel %vm501, %v978, 0
      %985 = vmatpush.bf16.xpose.msra.mxu0 0
      %986 = vmatpush.bf16.xpose.msra.mxu0 0
      %987 = vmatpush.bf16.xpose.msra.mxu0 0
      %988 = vmatpush.bf16.xpose.msra.mxu0 0
      %989 = vmatpush.bf16.xpose.msra.mxu0 0
      %990 = vmatpush.bf16.xpose.msra.mxu0 0
      %991 = vmatpush.bf16.xpose.msra.mxu0 0
      %992 = vmatpush.bf16.xpose.msra.mxu0 %v983
      %993 = vmatmul.bf16.gmra.mxu0 %v980
      %v994 = vpop.f32.mrf.mxu0
      %v995 = vadd.f32 0.0, %v994
      %v996 = vpop.f32.mrf.mxu0
      %v997 = vadd.f32 0.0, %v996
      %998 = vdwg.mxu0
      %v999 = vsel %vm550, %v995, -inf
      %1000 = vmax.xlane.f32.xlu0 %v999
      %v1001 = vpop.xlane.xlu0 %1000
      %v1002 = vsel %vm550, %v997, -inf
      %1003 = vmax.xlane.f32.xlu0 %v1002
      %v1004 = vpop.xlane.xlu0 %1003
      %v1005 = vsub.f32 %v995, %v1001
      %v1006 = vsub.f32 %v997, %v1004
      %v1007 = vmul.f32 %v1005, 1.442695
      %v1008 = vpow.pop %v1007
      %v1009 = vmul.f32 %v1006, 1.442695
      %v1010 = vpow.pop %v1009
      %v1011 = vsel %vm550, %v1008, 0.0
      %1012 = vadd.xlane.f32.xlu0 %v1011
      %v1013 = vpop.xlane.xlu0 %1012
      %v1014 = vsel %vm550, %v1010, 0.0
      %1015 = vadd.xlane.f32.xlu0 %v1014
      %v1016 = vpop.xlane.xlu0 %1015
      %v1017 = vrcp.pop %v1013
      %v1018 = vrcp.pop %v1016
      %v1019 = vmul.f32 %v1008, %v1017
      %v1020 = vmul.f32 %v1010, %v1018
      %v1021 = vpack.c.bf16 %v1019, %v1019
      %v1022 = vpack.c.bf16 %v1020, %v1020
      %v1025 = vunpack.c.l.b16 %v1021
      %v1026 = vunpack.c.l.b16 %v1022
      %v1027 = vpack.c.b16 %v1026, %v1025
      %1028 = vrot.lane.b32.xlu0 %v787, 116
      %v1029 = vpop.permute.xlu0 %1028
      %v1032 = vsel %vm550, %v1027, 0
      %1034 = vmatpush.bf16.msra.mxu0 0
      %1035 = vmatpush.bf16.msra.mxu0 0
      %1036 = vmatpush.bf16.msra.mxu0 0
      %1037 = vmatpush.bf16.msra.mxu0 0
      %1038 = vmatpush.bf16.msra.mxu0 0
      %1039 = vmatpush.bf16.msra.mxu0 0
      %1040 = vmatpush.bf16.msra.mxu0 0
      %1041 = vmatpush.bf16.msra.mxu0 %v1029
      %1042 = vmatmul.bf16.gmra.mxu0 %v1032
      %v1043 = vpop.f32.mrf.mxu0
      %v1044 = vadd.f32 0.0, %v1043
      %v1045 = vpop.f32.mrf.mxu0
      %v1046 = vadd.f32 0.0, %v1045
      %1047 = vdwg.mxu0
      %1050 = vrot.lane.b32.xlu0 %v1044, 12
      %v1051 = vpop.permute.xlu0 %1050
      %1052 = vrot.lane.b32.xlu0 %v1046, 12
      %v1053 = vpop.permute.xlu0 %1052
      %vm1056 = vcmask 130144
      %1057 = vst.msk [vmem:[#allocation4] sm:$0xff] %vm1056, %v1051
      %1058 = vst.msk [vmem:[#allocation4 + $0x8] sm:$0xff] %vm1056, %v1053
      %v1059 = vld [vmem:[#allocation4] sm:$0xff]
      %v1060 = vld [vmem:[#allocation4 + $0x8] sm:$0xff]
      %v1061 = vpack.c.bf16 %v1060, %v1059
      %v1062 = vld [vmem:[%s13] sm:$0xf]
      %v1063 = vld [vmem:[%s13 + $0x4] sm:$0xf]
      %v1064 = vld [vmem:[%s14] sm:$0x1]
      %v1066 = vperm.slane %v1064, 0
      %v1070 = vunpack.c.l.b16 %v1062
      %v1071 = vunpack.c.l.b16 %v1063
      %v1072 = vpack.c.b16 %v1071, %v1070
      %v1075 = vsel %vm550, %v1061, 0
      %1077 = vmatpush.bf16.msra.mxu0 0
      %1078 = vmatpush.bf16.msra.mxu0 0
      %1079 = vmatpush.bf16.msra.mxu0 0
      %1080 = vmatpush.bf16.msra.mxu0 0
      %1081 = vmatpush.bf16.msra.mxu0 0
      %1082 = vmatpush.bf16.msra.mxu0 0
      %1083 = vmatpush.bf16.msra.mxu0 0
      %1084 = vmatpush.bf16.msra.mxu0 %v1072
      %1085 = vmatmul.bf16.gmra.mxu0 %v1075
      %v1086 = vpop.f32.mrf.mxu0
      %v1087 = vadd.f32 %v1066, %v1086
      %v1088 = vpop.f32.mrf.mxu0
      %v1089 = vadd.f32 %v1066, %v1088
      %1090 = vdwg.mxu0
      %v1091 = vadd.f32 %v1087, %v630
      %v1092 = vadd.f32 %v1089, %v632
      %v1093 = vmax.f32 %v1091, 0.0
      %v1094 = vmax.f32 %v1092, 0.0
      %1095 = vst.msk [vmem:[%s494] sm:$0xff] %vm550, %v1093
      %1096 = vst.msk [vmem:[%s494 + $0x8] sm:$0xff] %vm550, %v1094
      %p1097 = scmp.lt.s32.totalorder %s26, 1
      %s1098 = scalar_select %p1097, %s26, 1
      %s1099 = smul.addr %s1098, 2
      %s1100 = smul.addr %s1099, 8
      %s1101 = scalar_lea.vmem %s15, %s1100
      // Predicated region
      $region81: #{temporal_conv_net.2} parent=79 // pred_check
        %p1102 = pneg %p364
      $region82: #{temporal_conv_net.2} parent=79 // pred_check_branch
        %1104 = sbr.rel (%p1102) target = $region84
      $region83: #{temporal_conv_net.2} parent=79 // pred_region
        _
      $region84: #{temporal_conv_net.2} parent=79 // pred_fallthru
        _
    $region80: #{temporal_conv_net.2} parent=5 // pred_fallthru
      _
    %p1105 = scmp.le.s32.totalorder 2, %s21
    // Predicated region
    $region85: #{temporal_conv_net.2} parent=5 // pred_check
      %p1106 = pneg %p1105
    $region86: #{temporal_conv_net.2} parent=5 // pred_check_branch
      %1108 = sbr.rel (%p1106) target = $region88
    $region87: #{temporal_conv_net.2} parent=5 // pred_region
      %s1109 = ssub.s32 %s21, 2
      // Predicated region
      $region89: #{temporal_conv_net.2} parent=87 // pred_check
        %p1110 = pneg %p370
      $region90: #{temporal_conv_net.2} parent=87 // pred_check_branch
        %1112 = sbr.rel (%p1110) target = $region92
      $region91: #{temporal_conv_net.2} parent=87 // pred_region
        %p1113 = scmp.lt.s32.totalorder %s27, 1
        %s1114 = scalar_select %p1113, %s27, 1
        %s1115 = smul.addr %s1114, 2
        %s1116 = smul.addr %s1115, 8
        %s1117 = scalar_lea.vmem %s15, %s1116
      $region92: #{temporal_conv_net.2} parent=87 // pred_fallthru
        _
    $region88: #{temporal_conv_net.2} parent=5 // pred_fallthru
      _
  $region6: #{temporal_conv_net.2} parent=0 // loop_footer
    %s25 = sadd.s32 1, %s21
  $region7: #{temporal_conv_net.2} parent=0 // loop_footer_branch
    %20 = sbr.rel target = $region3
  $region8: #{temporal_conv_net.2} parent=0 // loop_exit
    _

// kernel: temporal_conv_net.3
$region0: #{temporal_conv_net.3}
  #allocation0 [shape = 'u32[]', space=smem, size = 0x4, offset = 0x4, fixed_abs, tag = 'smem constant byte address 0x4 - core index']
  #allocation1 [shape = 'u32[72,128]{1,0:T(1,128)}', space=vmem, size = 0x9000, scoped, tag = 'internal scratch']
  #allocation2 [shape = 'f32[1,16,32]{2,1,0:T(8,128)}', space=vmem, size = 0x2000, scoped, tag = 'scratch operand']
  #allocation3 [shape = 'f32[1,16,32]{2,1,0:T(8,128)}', space=vmem, size = 0x2000, scoped, tag = 'scratch operand']
  #allocation4 [shape = 'f32[1,16,16]{2,1,0:T(8,128)}', space=vmem, size = 0x2000, scoped, tag = 'scratch operand']
  %s0 = inlined_call_operand.vmem [shape: f32[2,16,16], index: 0, kind: input, shape index: {}]
  %s1 = inlined_call_operand.vmem [shape: bf16[32,16], index: 1, kind: input, shape index: {}]
  %s2 = inlined_call_operand.vmem [shape: f32[1,16], index: 2, kind: input, shape index: {}]
  %s3 = inlined_call_operand.vmem [shape: bf16[32,16], index: 3, kind: input, shape index: {}]
  %s4 = inlined_call_operand.vmem [shape: f32[1,16], index: 4, kind: input, shape index: {}]
  %s5 = inlined_call_operand.vmem [shape: bf16[16,16], index: 5, kind: input, shape index: {}]
  %s6 = inlined_call_operand.vmem [shape: bf16[16,16], index: 6, kind: input, shape index: {}]
  %s7 = inlined_call_operand.vmem [shape: bf16[16,16], index: 7, kind: input, shape index: {}]
  %s8 = inlined_call_operand.vmem [shape: f32[1,16], index: 8, kind: input, shape index: {}]
  %s9 = inlined_call_operand.vmem [shape: f32[1,16], index: 9, kind: input, shape index: {}]
  %s10 = inlined_call_operand.vmem [shape: f32[1,16], index: 10, kind: input, shape index: {}]
  %s11 = inlined_call_operand.vmem [shape: bf16[16,16], index: 11, kind: input, shape index: {}]
  %s12 = inlined_call_operand.vmem [shape: f32[1,16], index: 12, kind: input, shape index: {}]
  %s13 = inlined_call_operand.vmem [shape: f32[2,16,16], index: 13, kind: output, shape index: {}]
  %s14 = sld [smem:[#allocation0]]
  $region85: #{temporal_conv_net.3} parent=0
    _
  %s16 = ssub.s32 1, %s14
  %s17 = scalar_select 0, %s16, %s14
  loop: start=0, step=1, limit=4
  $region2: #{temporal_conv_net.3} parent=0 // loop_pre_header
    _
  $region3: #{temporal_conv_net.3} parent=0 // loop_header
    %s19 = sphi 0, %s23
    %p20 = scmp.ge.s32.totalorder %s19, 4
    %s29 = sphi 0, %s31
    %s32 = sphi 0, %s29
    %s33 = sphi 0, %s32
    %s49 = sphi 0, %s33
    %s53 = sphi 0, %s53
    %s55 = sphi 0, %s53
    %s56 = sphi 0, %s55
    %s70 = sphi 0, %s56
    %s74 = sphi 0, %s74
    %s76 = sphi 0, %s74
    %s77 = sphi 0, %s76
    %s91 = sphi 0, %s77
    %s95 = sphi 0, %s95
    %s97 = sphi 0, %s95
    %s98 = sphi 0, %s97
    %s112 = sphi 0, %s98
    %s116 = sphi 0, %s116
    %s118 = sphi 0, %s116
    %s119 = sphi 0, %s118
    %s133 = sphi 0, %s119
    %s137 = sphi 0, %s137
    %s139 = sphi 0, %s137
    %s140 = sphi 0, %s139
    %s154 = sphi 0, %s140
    %s158 = sphi 0, %s158
    %s160 = sphi 0, %s158
    %s161 = sphi 0, %s160
    %s175 = sphi 0, %s161
    %s179 = sphi 0, %s179
    %s181 = sphi 0, %s179
    %s182 = sphi 0, %s181
    %s196 = sphi 0, %s182
    %s200 = sphi 0, %s200
    %s202 = sphi 0, %s200
    %s203 = sphi 0, %s202
    %s217 = sphi 0, %s203
    %s221 = sphi 0, %s221
    %s223 = sphi 0, %s221
    %s224 = sphi 0, %s223
    %s238 = sphi 0, %s224
    %s242 = sphi 0, %s242
    %s244 = sphi 0, %s242
    %s245 = sphi 0, %s244
    %s259 = sphi 0, %s245
    %s263 = sphi 0, %s263
    %s265 = sphi 0, %s263
    %s266 = sphi 0, %s265
    %s280 = sphi 0, %s266
    %s284 = sphi 0, %s284
    %s286 = sphi 0, %s284
    %s287 = sphi 0, %s286
    %s301 = sphi 0, %s287
    %s307 = sphi 0, %s309
    %s310 = sphi 0, %s307
    %s311 = sphi 0, %s310
    %s327 = sphi 0, %s311
  $region4: #{temporal_conv_net.3} parent=0 // loop_header_branch
    %22 = sbr.rel (%p20) target = $region8
  $region5: #{temporal_conv_net.3} parent=0 // loop_body
    %s24 = ssub.s32 %s19, 1
    %s25 = ssub.s32 %s19, 2
    %s26 = sadd.s32 %s19, 1
    %s27 = ssub.s32 %s19, %s26
    %p28 = scmp.eq.s32.totalorder %s27, 0
    %s30 = sadd.s32 %s29, 1
    %s31 = scalar_select %p28, %s29, %s30
    %p34 = pneg %p28
    %p35 = scmp.eq.s32.totalorder %s19, 1
    %p36 = por %p34, %p35
    %p37 = scmp.ne.s32.totalorder %s29, %s32
    %p38 = scmp.eq.s32.totalorder %s19, 0
    %p39 = por %p37, %p38
    %p40 = scmp.ne.s32.totalorder %s29, %s32
    %p41 = scmp.eq.s32.totalorder %s24, 1
    %p42 = por %p40, %p41
    %p43 = scmp.ne.s32.totalorder %s32, %s33
    %p44 = scmp.eq.s32.totalorder %s24, 0
    %p45 = por %p43, %p44
    %p46 = scmp.ne.s32.totalorder %s32, %s33
    %p47 = scmp.eq.s32.totalorder %s25, 1
    %p48 = por %p46, %p47
    %p50 = scmp.ne.s32.totalorder %s33, %s49
    %p51 = scmp.eq.s32.totalorder %s25, 0
    %p52 = por %p50, %p51
    %s54 = sadd.s32 %s53, 1
    %p57 = scmp.eq.s32.totalorder %s19, 1
    %p58 = scmp.ne.s32.totalorder %s53, %s55
    %p59 = scmp.eq.s32.totalorder %s19, 0
    %p60 = por %p58, %p59
    %p61 = scmp.ne.s32.totalorder %s53, %s55
    %p62 = scmp.eq.s32.totalorder %s24, 1
    %p63 = por %p61, %p62
    %p64 = scmp.ne.s32.totalorder %s55, %s56
    %p65 = scmp.eq.s32.totalorder %s24, 0
    %p66 = por %p64, %p65
    %p67 = scmp.ne.s32.totalorder %s55, %s56
    %p68 = scmp.eq.s32.totalorder %s25, 1
    %p69 = por %p67, %p68
    %p71 = scmp.ne.s32.totalorder %s56, %s70
    %p72 = scmp.eq.s32.totalorder %s25, 0
    %p73 = por %p71, %p72
    %s75 = sadd.s32 %s74, 1
    %p78 = scmp.eq.s32.totalorder %s19, 1
    %p79 = scmp.ne.s32.totalorder %s74, %s76
    %p80 = scmp.eq.s32.totalorder %s19, 0
    %p81 = por %p79, %p80
    %p82 = scmp.ne.s32.totalorder %s74, %s76
    %p83 = scmp.eq.s32.totalorder %s24, 1
    %p84 = por %p82, %p83
    %p85 = scmp.ne.s32.totalorder %s76, %s77
    %p86 = scmp.eq.s32.totalorder %s24, 0
    %p87 = por %p85, %p86
    %p88 = scmp.ne.s32.totalorder %s76, %s77
    %p89 = scmp.eq.s32.totalorder %s25, 1
    %p90 = por %p88, %p89
    %p92 = scmp.ne.s32.totalorder %s77, %s91
    %p93 = scmp.eq.s32.totalorder %s25, 0
    %p94 = por %p92, %p93
    %s96 = sadd.s32 %s95, 1
    %p99 = scmp.eq.s32.totalorder %s19, 1
    %p100 = scmp.ne.s32.totalorder %s95, %s97
    %p101 = scmp.eq.s32.totalorder %s19, 0
    %p102 = por %p100, %p101
    %p103 = scmp.ne.s32.totalorder %s95, %s97
    %p104 = scmp.eq.s32.totalorder %s24, 1
    %p105 = por %p103, %p104
    %p106 = scmp.ne.s32.totalorder %s97, %s98
    %p107 = scmp.eq.s32.totalorder %s24, 0
    %p108 = por %p106, %p107
    %p109 = scmp.ne.s32.totalorder %s97, %s98
    %p110 = scmp.eq.s32.totalorder %s25, 1
    %p111 = por %p109, %p110
    %p113 = scmp.ne.s32.totalorder %s98, %s112
    %p114 = scmp.eq.s32.totalorder %s25, 0
    %p115 = por %p113, %p114
    %s117 = sadd.s32 %s116, 1
    %p120 = scmp.eq.s32.totalorder %s19, 1
    %p121 = scmp.ne.s32.totalorder %s116, %s118
    %p122 = scmp.eq.s32.totalorder %s19, 0
    %p123 = por %p121, %p122
    %p124 = scmp.ne.s32.totalorder %s116, %s118
    %p125 = scmp.eq.s32.totalorder %s24, 1
    %p126 = por %p124, %p125
    %p127 = scmp.ne.s32.totalorder %s118, %s119
    %p128 = scmp.eq.s32.totalorder %s24, 0
    %p129 = por %p127, %p128
    %p130 = scmp.ne.s32.totalorder %s118, %s119
    %p131 = scmp.eq.s32.totalorder %s25, 1
    %p132 = por %p130, %p131
    %p134 = scmp.ne.s32.totalorder %s119, %s133
    %p135 = scmp.eq.s32.totalorder %s25, 0
    %p136 = por %p134, %p135
    %s138 = sadd.s32 %s137, 1
    %p141 = scmp.eq.s32.totalorder %s19, 1
    %p142 = scmp.ne.s32.totalorder %s137, %s139
    %p143 = scmp.eq.s32.totalorder %s19, 0
    %p144 = por %p142, %p143
    %p145 = scmp.ne.s32.totalorder %s137, %s139
    %p146 = scmp.eq.s32.totalorder %s24, 1
    %p147 = por %p145, %p146
    %p148 = scmp.ne.s32.totalorder %s139, %s140
    %p149 = scmp.eq.s32.totalorder %s24, 0
    %p150 = por %p148, %p149
    %p151 = scmp.ne.s32.totalorder %s139, %s140
    %p152 = scmp.eq.s32.totalorder %s25, 1
    %p153 = por %p151, %p152
    %p155 = scmp.ne.s32.totalorder %s140, %s154
    %p156 = scmp.eq.s32.totalorder %s25, 0
    %p157 = por %p155, %p156
    %s159 = sadd.s32 %s158, 1
    %p162 = scmp.eq.s32.totalorder %s19, 1
    %p163 = scmp.ne.s32.totalorder %s158, %s160
    %p164 = scmp.eq.s32.totalorder %s19, 0
    %p165 = por %p163, %p164
    %p166 = scmp.ne.s32.totalorder %s158, %s160
    %p167 = scmp.eq.s32.totalorder %s24, 1
    %p168 = por %p166, %p167
    %p169 = scmp.ne.s32.totalorder %s160, %s161
    %p170 = scmp.eq.s32.totalorder %s24, 0
    %p171 = por %p169, %p170
    %p172 = scmp.ne.s32.totalorder %s160, %s161
    %p173 = scmp.eq.s32.totalorder %s25, 1
    %p174 = por %p172, %p173
    %p176 = scmp.ne.s32.totalorder %s161, %s175
    %p177 = scmp.eq.s32.totalorder %s25, 0
    %p178 = por %p176, %p177
    %s180 = sadd.s32 %s179, 1
    %p183 = scmp.eq.s32.totalorder %s19, 1
    %p184 = scmp.ne.s32.totalorder %s179, %s181
    %p185 = scmp.eq.s32.totalorder %s19, 0
    %p186 = por %p184, %p185
    %p187 = scmp.ne.s32.totalorder %s179, %s181
    %p188 = scmp.eq.s32.totalorder %s24, 1
    %p189 = por %p187, %p188
    %p190 = scmp.ne.s32.totalorder %s181, %s182
    %p191 = scmp.eq.s32.totalorder %s24, 0
    %p192 = por %p190, %p191
    %p193 = scmp.ne.s32.totalorder %s181, %s182
    %p194 = scmp.eq.s32.totalorder %s25, 1
    %p195 = por %p193, %p194
    %p197 = scmp.ne.s32.totalorder %s182, %s196
    %p198 = scmp.eq.s32.totalorder %s25, 0
    %p199 = por %p197, %p198
    %s201 = sadd.s32 %s200, 1
    %p204 = scmp.eq.s32.totalorder %s19, 1
    %p205 = scmp.ne.s32.totalorder %s200, %s202
    %p206 = scmp.eq.s32.totalorder %s19, 0
    %p207 = por %p205, %p206
    %p208 = scmp.ne.s32.totalorder %s200, %s202
    %p209 = scmp.eq.s32.totalorder %s24, 1
    %p210 = por %p208, %p209
    %p211 = scmp.ne.s32.totalorder %s202, %s203
    %p212 = scmp.eq.s32.totalorder %s24, 0
    %p213 = por %p211, %p212
    %p214 = scmp.ne.s32.totalorder %s202, %s203
    %p215 = scmp.eq.s32.totalorder %s25, 1
    %p216 = por %p214, %p215
    %p218 = scmp.ne.s32.totalorder %s203, %s217
    %p219 = scmp.eq.s32.totalorder %s25, 0
    %p220 = por %p218, %p219
    %s222 = sadd.s32 %s221, 1
    %p225 = scmp.eq.s32.totalorder %s19, 1
    %p226 = scmp.ne.s32.totalorder %s221, %s223
    %p227 = scmp.eq.s32.totalorder %s19, 0
    %p228 = por %p226, %p227
    %p229 = scmp.ne.s32.totalorder %s221, %s223
    %p230 = scmp.eq.s32.totalorder %s24, 1
    %p231 = por %p229, %p230
    %p232 = scmp.ne.s32.totalorder %s223, %s224
    %p233 = scmp.eq.s32.totalorder %s24, 0
    %p234 = por %p232, %p233
    %p235 = scmp.ne.s32.totalorder %s223, %s224
    %p236 = scmp.eq.s32.totalorder %s25, 1
    %p237 = por %p235, %p236
    %p239 = scmp.ne.s32.totalorder %s224, %s238
    %p240 = scmp.eq.s32.totalorder %s25, 0
    %p241 = por %p239, %p240
    %s243 = sadd.s32 %s242, 1
    %p246 = scmp.eq.s32.totalorder %s19, 1
    %p247 = scmp.ne.s32.totalorder %s242, %s244
    %p248 = scmp.eq.s32.totalorder %s19, 0
    %p249 = por %p247, %p248
    %p250 = scmp.ne.s32.totalorder %s242, %s244
    %p251 = scmp.eq.s32.totalorder %s24, 1
    %p252 = por %p250, %p251
    %p253 = scmp.ne.s32.totalorder %s244, %s245
    %p254 = scmp.eq.s32.totalorder %s24, 0
    %p255 = por %p253, %p254
    %p256 = scmp.ne.s32.totalorder %s244, %s245
    %p257 = scmp.eq.s32.totalorder %s25, 1
    %p258 = por %p256, %p257
    %p260 = scmp.ne.s32.totalorder %s245, %s259
    %p261 = scmp.eq.s32.totalorder %s25, 0
    %p262 = por %p260, %p261
    %s264 = sadd.s32 %s263, 1
    %p267 = scmp.eq.s32.totalorder %s19, 1
    %p268 = scmp.ne.s32.totalorder %s263, %s265
    %p269 = scmp.eq.s32.totalorder %s19, 0
    %p270 = por %p268, %p269
    %p271 = scmp.ne.s32.totalorder %s263, %s265
    %p272 = scmp.eq.s32.totalorder %s24, 1
    %p273 = por %p271, %p272
    %p274 = scmp.ne.s32.totalorder %s265, %s266
    %p275 = scmp.eq.s32.totalorder %s24, 0
    %p276 = por %p274, %p275
    %p277 = scmp.ne.s32.totalorder %s265, %s266
    %p278 = scmp.eq.s32.totalorder %s25, 1
    %p279 = por %p277, %p278
    %p281 = scmp.ne.s32.totalorder %s266, %s280
    %p282 = scmp.eq.s32.totalorder %s25, 0
    %p283 = por %p281, %p282
    %s285 = sadd.s32 %s284, 1
    %p288 = scmp.eq.s32.totalorder %s19, 1
    %p289 = scmp.ne.s32.totalorder %s284, %s286
    %p290 = scmp.eq.s32.totalorder %s19, 0
    %p291 = por %p289, %p290
    %p292 = scmp.ne.s32.totalorder %s284, %s286
    %p293 = scmp.eq.s32.totalorder %s24, 1
    %p294 = por %p292, %p293
    %p295 = scmp.ne.s32.totalorder %s286, %s287
    %p296 = scmp.eq.s32.totalorder %s24, 0
    %p297 = por %p295, %p296
    %p298 = scmp.ne.s32.totalorder %s286, %s287
    %p299 = scmp.eq.s32.totalorder %s25, 1
    %p300 = por %p298, %p299
    %p302 = scmp.ne.s32.totalorder %s287, %s301
    %p303 = scmp.eq.s32.totalorder %s25, 0
    %p304 = por %p302, %p303
    %s305 = ssub.s32 %s19, %s26
    %p306 = scmp.eq.s32.totalorder %s305, 0
    %s308 = sadd.s32 %s307, 1
    %s309 = scalar_select %p306, %s307, %s308
    %p312 = pneg %p306
    %p313 = scmp.eq.s32.totalorder %s19, 1
    %p314 = por %p312, %p313
    %p315 = scmp.ne.s32.totalorder %s307, %s310
    %p316 = scmp.eq.s32.totalorder %s19, 0
    %p317 = por %p315, %p316
    %p318 = scmp.ne.s32.totalorder %s307, %s310
    %p319 = scmp.eq.s32.totalorder %s24, 1
    %p320 = por %p318, %p319
    %p321 = scmp.ne.s32.totalorder %s310, %s311
    %p322 = scmp.eq.s32.totalorder %s24, 0
    %p323 = por %p321, %p322
    %p324 = scmp.ne.s32.totalorder %s310, %s311
    %p325 = scmp.eq.s32.totalorder %s25, 1
    %p326 = por %p324, %p325
    %p328 = scmp.ne.s32.totalorder %s311, %s327
    %p329 = scmp.eq.s32.totalorder %s25, 0
    %p330 = por %p328, %p329
    %p331 = scmp.le.s32.totalorder 1, %s19
    %p332 = scmp.lt.s32.totalorder %s19, 3
    %p333 = pnand %p331, %p332
    %p334 = pneg %p333
    // Predicated region
    $region9: #{temporal_conv_net.3} parent=5 // pred_check
      _
    $region10: #{temporal_conv_net.3} parent=5 // pred_check_branch
      %336 = sbr.rel (%p333) target = $region12
    $region11: #{temporal_conv_net.3} parent=5 // pred_region
      %s337 = ssub.s32 %s19, 1
      // Predicated region
      $region13: #{temporal_conv_net.3} parent=11 // pred_check
        %p338 = pneg %p66
      $region14: #{temporal_conv_net.3} parent=11 // pred_check_branch
        %340 = sbr.rel (%p338) target = $region16
      $region15: #{temporal_conv_net.3} parent=11 // pred_region
        _
      $region16: #{temporal_conv_net.3} parent=11 // pred_fallthru
        _
      // Predicated region
      $region17: #{temporal_conv_net.3} parent=11 // pred_check
        %p341 = pneg %p87
      $region18: #{temporal_conv_net.3} parent=11 // pred_check_branch
        %343 = sbr.rel (%p341) target = $region20
      $region19: #{temporal_conv_net.3} parent=11 // pred_region
        _
      $region20: #{temporal_conv_net.3} parent=11 // pred_fallthru
        _
      // Predicated region
      $region21: #{temporal_conv_net.3} parent=11 // pred_check
        %p344 = pneg %p108
      $region22: #{temporal_conv_net.3} parent=11 // pred_check_branch
        %346 = sbr.rel (%p344) target = $region24
      $region23: #{temporal_conv_net.3} parent=11 // pred_region
        _
      $region24: #{temporal_conv_net.3} parent=11 // pred_fallthru
        _
      // Predicated region
      $region25: #{temporal_conv_net.3} parent=11 // pred_check
        %p347 = pneg %p129
      $region26: #{temporal_conv_net.3} parent=11 // pred_check_branch
        %349 = sbr.rel (%p347) target = $region28
      $region27: #{temporal_conv_net.3} parent=11 // pred_region
        _
      $region28: #{temporal_conv_net.3} parent=11 // pred_fallthru
        _
      // Predicated region
      $region29: #{temporal_conv_net.3} parent=11 // pred_check
        %p350 = pneg %p150
      $region30: #{temporal_conv_net.3} parent=11 // pred_check_branch
        %352 = sbr.rel (%p350) target = $region32
      $region31: #{temporal_conv_net.3} parent=11 // pred_region
        _
      $region32: #{temporal_conv_net.3} parent=11 // pred_fallthru
        _
      // Predicated region
      $region33: #{temporal_conv_net.3} parent=11 // pred_check
        %p353 = pneg %p171
      $region34: #{temporal_conv_net.3} parent=11 // pred_check_branch
        %355 = sbr.rel (%p353) target = $region36
      $region35: #{temporal_conv_net.3} parent=11 // pred_region
        _
      $region36: #{temporal_conv_net.3} parent=11 // pred_fallthru
        _
      // Predicated region
      $region37: #{temporal_conv_net.3} parent=11 // pred_check
        %p356 = pneg %p192
      $region38: #{temporal_conv_net.3} parent=11 // pred_check_branch
        %358 = sbr.rel (%p356) target = $region40
      $region39: #{temporal_conv_net.3} parent=11 // pred_region
        _
      $region40: #{temporal_conv_net.3} parent=11 // pred_fallthru
        _
      // Predicated region
      $region41: #{temporal_conv_net.3} parent=11 // pred_check
        %p359 = pneg %p213
      $region42: #{temporal_conv_net.3} parent=11 // pred_check_branch
        %361 = sbr.rel (%p359) target = $region44
      $region43: #{temporal_conv_net.3} parent=11 // pred_region
        _
      $region44: #{temporal_conv_net.3} parent=11 // pred_fallthru
        _
      // Predicated region
      $region45: #{temporal_conv_net.3} parent=11 // pred_check
        %p362 = pneg %p234
      $region46: #{temporal_conv_net.3} parent=11 // pred_check_branch
        %364 = sbr.rel (%p362) target = $region48
      $region47: #{temporal_conv_net.3} parent=11 // pred_region
        _
      $region48: #{temporal_conv_net.3} parent=11 // pred_fallthru
        _
      // Predicated region
      $region49: #{temporal_conv_net.3} parent=11 // pred_check
        %p365 = pneg %p255
      $region50: #{temporal_conv_net.3} parent=11 // pred_check_branch
        %367 = sbr.rel (%p365) target = $region52
      $region51: #{temporal_conv_net.3} parent=11 // pred_region
        _
      $region52: #{temporal_conv_net.3} parent=11 // pred_fallthru
        _
      // Predicated region
      $region53: #{temporal_conv_net.3} parent=11 // pred_check
        %p368 = pneg %p276
      $region54: #{temporal_conv_net.3} parent=11 // pred_check_branch
        %370 = sbr.rel (%p368) target = $region56
      $region55: #{temporal_conv_net.3} parent=11 // pred_region
        _
      $region56: #{temporal_conv_net.3} parent=11 // pred_fallthru
        _
      // Predicated region
      $region57: #{temporal_conv_net.3} parent=11 // pred_check
        %p371 = pneg %p297
      $region58: #{temporal_conv_net.3} parent=11 // pred_check_branch
        %373 = sbr.rel (%p371) target = $region60
      $region59: #{temporal_conv_net.3} parent=11 // pred_region
        _
      $region60: #{temporal_conv_net.3} parent=11 // pred_fallthru
        _
    $region12: #{temporal_conv_net.3} parent=5 // pred_fallthru
      _
    %p374 = scmp.lt.s32.totalorder %s19, 2
    // Predicated region
    $region61: #{temporal_conv_net.3} parent=5 // pred_check
      %p375 = pneg %p374
    $region62: #{temporal_conv_net.3} parent=5 // pred_check_branch
      %377 = sbr.rel (%p375) target = $region64
    $region63: #{temporal_conv_net.3} parent=5 // pred_region
      // Predicated region
      $region65: #{temporal_conv_net.3} parent=63 // pred_check
        %p378 = pneg %p39
      $region66: #{temporal_conv_net.3} parent=63 // pred_check_branch
        %380 = sbr.rel (%p378) target = $region68
      $region67: #{temporal_conv_net.3} parent=63 // pred_region
        %p381 = scmp.lt.s32.totalorder %s19, 1
        %s382 = scalar_select %p381, %s19, 1
        %s383 = smul.addr %s382, 2
        %s384 = smul.addr %s383, 8
        %s385 = scalar_lea.vmem %s0, %s384
      $region68: #{temporal_conv_net.3} parent=63 // pred_fallthru
        _
    $region64: #{temporal_conv_net.3} parent=5 // pred_fallthru
      _
    %p386 = scmp.le.s32.totalorder 1, %s19
    %p387 = scmp.lt.s32.totalorder %s19, 3
    %p388 = pnand %p386, %p387
    %p389 = pneg %p388
    // Predicated region
    $region69: #{temporal_conv_net.3} parent=5 // pred_check
      _
    $region70: #{temporal_conv_net.3} parent=5 // pred_check_branch
      %391 = sbr.rel (%p388) target = $region72
    $region71: #{temporal_conv_net.3} parent=5 // pred_region
      %s392 = ssub.s32 %s19, 1
      %p393 = scmp.lt.s32.totalorder %s24, 1
      %s394 = scalar_select %p393, %s24, 1
      %s395 = smul.addr %s394, 2
      %s396 = smul.addr %s395, 8
      %s397 = scalar_lea.vmem %s0, %s396
      %p398 = pneg %p45
      %p399 = pneg %p42
      %p400 = pneg %p66
      %p401 = pneg %p63
      %p402 = pneg %p87
      %p403 = pneg %p84
      %p404 = pneg %p108
      %p405 = pneg %p105
      %p406 = pneg %p129
      %p407 = pneg %p126
      %p408 = pneg %p150
      %p409 = pneg %p147
      %p410 = pneg %p171
      %p411 = pneg %p168
      %p412 = pneg %p192
      %p413 = pneg %p189
      %p414 = pneg %p213
      %p415 = pneg %p210
      %p416 = pneg %p234
      %p417 = pneg %p231
      %p418 = pneg %p255
      %p419 = pneg %p252
      %p420 = pneg %p276
      %p421 = pneg %p273
      %p422 = pneg %p297
      %p423 = pneg %p294
      %p424 = pneg %p323
      %p425 = pneg %p320
      %p426 = scmp.lt.s32.totalorder %s24, 1
      %s427 = scalar_select %p426, %s24, 1
      %s428 = smul.addr %s427, 2
      %s429 = smul.addr %s428, 8
      %s430 = scalar_lea.vmem %s13, %s429
      %p431 = scmp.lt.s32.totalorder %s24, 1
      %s432 = scalar_select %p431, %s24, 1
      %s433 = smul.addr %s432, 2
      %s434 = smul.addr %s433, 8
      %s435 = scalar_lea.vmem %s0, %s434
      %p436 = scmp.lt.s32.totalorder %s24, 1
      %s437 = scalar_select %p436, %s24, 1
      %s438 = smul.addr %s437, 2
      %s439 = smul.addr %s438, 8
      %s440 = scalar_lea.vmem %s13, %s439
      %v442 = vld [vmem:[%s435] sm:$0xff]
      %v443 = vld [vmem:[%s435 + $0x8] sm:$0xff]
      %vm444 = vcmask 261120
      %445 = vst.msk [vmem:[#allocation2] sm:$0xff] %vm444, 0.0
      %446 = vst.msk [vmem:[#allocation2 + $0x8] sm:$0xff] %vm444, 0.0
      %vm447 = vcmask 130048
      %448 = vst.msk [vmem:[#allocation2 + $0x2] sm:$0xff] %vm447, %v442
      %vm449 = vcmask 128000
      %450 = vst.msk [vmem:[#allocation2 + $0xa] sm:$0x3f] %vm449, %v443
      %453 = vrot.lane.b32.xlu0 %v442, 16
      %v454 = vpop.permute.xlu0 %453
      %455 = vrot.lane.b32.xlu0 %v443, 16
      %v456 = vpop.permute.xlu0 %455
      %vm459 = vcmask 261248
      %460 = vst.msk [vmem:[#allocation2] sm:$0xff] %vm459, %v454
      %461 = vst.msk [vmem:[#allocation2 + $0x8] sm:$0xff] %vm459, %v456
      %v462 = vld [vmem:[#allocation2] sm:$0xff]
      %v463 = vld [vmem:[#allocation2 + $0x8] sm:$0xff]
      %v464 = vpack.c.bf16 %v463, %v462
      %v465 = vld [vmem:[%s1] sm:$0xf]
      %v466 = vld [vmem:[%s1 + $0x4] sm:$0xf]
      %v467 = vld [vmem:[%s1 + $0x8] sm:$0xf]
      %v468 = vld [vmem:[%s1 + $0xc] sm:$0xf]
      %v469 = vld [vmem:[%s2] sm:$0x1]
      %v471 = vperm.slane %v469, 0
      %v477 = vunpack.c.l.b16 %v465
      %v478 = vunpack.c.l.b16 %v466
      %v479 = vunpack.c.l.b16 %v467
      %v480 = vunpack.c.l.b16 %v468
      %v481 = vpack.c.b16 %v478, %v477
      %v482 = vpack.c.b16 %v480, %v479
      %v486 = vsel %vm444, %v464, 0
      %488 = vmatpush.bf16.msra.mxu0 0
      %489 = vmatpush.bf16.msra.mxu0 0
      %490 = vmatpush.bf16.msra.mxu0 0
      %491 = vmatpush.bf16.msra.mxu0 0
      %492 = vmatpush.bf16.msra.mxu0 0
      %493 = vmatpush.bf16.msra.mxu0 0
      %494 = vmatpush.bf16.msra.mxu0 %v482
      %495 = vmatpush.bf16.msra.mxu0 %v481
      %496 = vmatmul.bf16.gmra.mxu0 %v486
      %v497 = vpop.f32.mrf.mxu0
      %v498 = vadd.f32 %v471, %v497
      %v499 = vpop.f32.mrf.mxu0
      %v500 = vadd.f32 %v471, %v499
      %501 = vdwg.mxu0
      %v502 = vmax.f32 %v498, 0.0
      %v503 = vmax.f32 %v500, 0.0
      %504 = vst.msk [vmem:[#allocation3] sm:$0xff] %vm444, 0.0
      %505 = vst.msk [vmem:[#allocation3 + $0x8] sm:$0xff] %vm444, 0.0
      %506 = vst.msk [vmem:[#allocation3 + $0x2] sm:$0xff] %vm447, %v502
      %507 = vst.msk [vmem:[#allocation3 + $0xa] sm:$0x3f] %vm449, %v503
      %510 = vrot.lane.b32.xlu0 %v502, 16
      %v511 = vpop.permute.xlu0 %510
      %512 = vrot.lane.b32.xlu0 %v503, 16
      %v513 = vpop.permute.xlu0 %512
      %516 = vst.msk [vmem:[#allocation3] sm:$0xff] %vm459, %v511
      %517 = vst.msk [vmem:[#allocation3 + $0x8] sm:$0xff] %vm459, %v513
      %v518 = vld [vmem:[#allocation3] sm:$0xff]
      %v519 = vld [vmem:[#allocation3 + $0x8] sm:$0xff]
      %v520 = vpack.c.bf16 %v519, %v518
      %v521 = vld [vmem:[%s3] sm:$0xf]
      %v522 = vld [vmem:[%s3 + $0x4] sm:$0xf]
      %v523 = vld [vmem:[%s3 + $0x8] sm:$0xf]
      %v524 = vld [vmem:[%s3 + $0xc] sm:$0xf]
      %v525 = vld [vmem:[%s4] sm:$0x1]
      %v527 = vperm.slane %v525, 0
      %v533 = vunpack.c.l.b16 %v521
      %v534 = vunpack.c.l.b16 %v522
      %v535 = vunpack.c.l.b16 %v523
      %v536 = vunpack.c.l.b16 %v524
      %v537 = vpack.c.b16 %v534, %v533
      %v538 = vpack.c.b16 %v536, %v535
      %v542 = vsel %vm444, %v520, 0
      %544 = vmatpush.bf16.msra.mxu0 0
      %545 = vmatpush.bf16.msra.mxu0 0
      %546 = vmatpush.bf16.msra.mxu0 0
      %547 = vmatpush.bf16.msra.mxu0 0
      %548 = vmatpush.bf16.msra.mxu0 0
      %549 = vmatpush.bf16.msra.mxu0 0
      %550 = vmatpush.bf16.msra.mxu0 %v538
      %551 = vmatpush.bf16.msra.mxu0 %v537
      %552 = vmatmul.bf16.gmra.mxu0 %v542
      %v553 = vpop.f32.mrf.mxu0
      %v554 = vadd.f32 %v527, %v553
      %v555 = vpop.f32.mrf.mxu0
      %v556 = vadd.f32 %v527, %v555
      %557 = vdwg.mxu0
      %v558 = vmax.f32 %v554, 0.0
      %v559 = vmax.f32 %v556, 0.0
      %v560 = vpack.c.bf16 %v559, %v558
      %v561 = vld [vmem:[%s5] sm:$0xf]
      %v562 = vld [vmem:[%s5 + $0x4] sm:$0xf]
      %v563 = vld [vmem:[%s8] sm:$0x1]
      %v565 = vperm.slane %v563, 0
      %v569 = vunpack.c.l.b16 %v561
      %v570 = vunpack.c.l.b16 %v562
      %v571 = vpack.c.b16 %v570, %v569
      %v574 = vsel %vm447, %v560, 0
      %576 = vmatpush.bf16.msra.mxu0 0
      %577 = vmatpush.bf16.msra.mxu0 0
      %578 = vmatpush.bf16.msra.mxu0 0
      %579 = vmatpush.bf16.msra.mxu0 0
      %580 = vmatpush.bf16.msra.mxu0 0
      %581 = vmatpush.bf16.msra.mxu0 0
      %582 = vmatpush.bf16.msra.mxu0 0
      %583 = vmatpush.bf16.msra.mxu0 %v571
      %584 = vmatmul.bf16.gmra.mxu0 %v574
      %v585 = vpop.f32.mrf.mxu0
      %v586 = vadd.f32 %v565, %v585
      %v587 = vpop.f32.mrf.mxu0
      %v588 = vadd.f32 %v565, %v587
      %589 = vdwg.mxu0
      %v590 = vmul.f32 %v586, 0.5
      %v591 = vmul.f32 %v588, 0.5
      %v592 = vld [vmem:[%s6] sm:$0xf]
      %v593 = vld [vmem:[%s6 + $0x4] sm:$0xf]
      %v594 = vld [vmem:[%s9] sm:$0x1]
      %v596 = vperm.slane %v594, 0
      %v600 = vunpack.c.l.b16 %v592
      %v601 = vunpack.c.l.b16 %v593
      %v602 = vpack.c.b16 %v601, %v600
      %604 = vmatpush.bf16.msra.mxu0 0
      %605 = vmatpush.bf16.msra.mxu0 0
      %606 = vmatpush.bf16.msra.mxu0 0
      %607 = vmatpush.bf16.msra.mxu0 0
      %608 = vmatpush.bf16.msra.mxu0 0
      %609 = vmatpush.bf16.msra.mxu0 0
      %610 = vmatpush.bf16.msra.mxu0 0
      %611 = vmatpush.bf16.msra.mxu0 %v602
      %612 = vmatmul.bf16.gmra.mxu0 %v574
      %v613 = vpop.f32.mrf.mxu0
      %v614 = vadd.f32 %v596, %v613
      %v615 = vpop.f32.mrf.mxu0
      %v616 = vadd.f32 %v596, %v615
      %617 = vdwg.mxu0
      %v618 = vld [vmem:[%s7] sm:$0xf]
      %v619 = vld [vmem:[%s7 + $0x4] sm:$0xf]
      %v620 = vld [vmem:[%s10] sm:$0x1]
      %v622 = vperm.slane %v620, 0
      %v626 = vunpack.c.l.b16 %v618
      %v627 = vunpack.c.l.b16 %v619
      %v628 = vpack.c.b16 %v627, %v626
      %630 = vmatpush.bf16.msra.mxu0 0
      %631 = vmatpush.bf16.msra.mxu0 0
      %632 = vmatpush.bf16.msra.mxu0 0
      %633 = vmatpush.bf16.msra.mxu0 0
      %634 = vmatpush.bf16.msra.mxu0 0
      %635 = vmatpush.bf16.msra.mxu0 0
      %636 = vmatpush.bf16.msra.mxu0 0
      %637 = vmatpush.bf16.msra.mxu0 %v628
      %638 = vmatmul.bf16.gmra.mxu0 %v574
      %v639 = vpop.f32.mrf.mxu0
      %v640 = vadd.f32 %v622, %v639
      %v641 = vpop.f32.mrf.mxu0
      %v642 = vadd.f32 %v622, %v641
      %643 = vdwg.mxu0
      %v644 = vpack.c.bf16 %v590, %v590
      %v645 = vpack.c.bf16 %v591, %v591
      %v646 = vpack.c.bf16 %v614, %v614
      %v647 = vpack.c.bf16 %v616, %v616
      %v648 = vpack.c.bf16 %v640, %v640
      %v649 = vpack.c.bf16 %v642, %v642
      %v652 = vunpack.c.l.b16 %v644
      %v653 = vunpack.c.l.b16 %v645
      %v654 = vpack.c.b16 %v653, %v652
      %v657 = vunpack.c.l.b16 %v646
      %v658 = vunpack.c.l.b16 %v647
      %v659 = vpack.c.b16 %v658, %v657
      %vm660 = vcmask 31744
      %v662 = vsel %vm660, %v654, 0
      %v665 = vsel %vm660, %v659, 0
      %667 = vmatpush.bf16.xpose.msra.mxu0 0
      %668 = vmatpush.bf16.xpose.msra.mxu0 0
      %669 = vmatpush.bf16.xpose.msra.mxu0 0
      %670 = vmatpush.bf16.xpose.msra.mxu0 0
      %671 = vmatpush.bf16.xpose.msra.mxu0 0
      %672 = vmatpush.bf16.xpose.msra.mxu0 0
      %673 = vmatpush.bf16.xpose.msra.mxu0 0
      %674 = vmatpush.bf16.xpose.msra.mxu0 %v665
      %675 = vmatmul.bf16.gmra.mxu0 %v662
      %v676 = vpop.f32.mrf.mxu0
      %v677 = vadd.f32 0.0, %v676
      %v678 = vpop.f32.mrf.mxu0
      %v679 = vadd.f32 0.0, %v678
      %680 = vdwg.mxu0
      %v681 = vsel %vm447, %v677, -inf
      %682 = vmax.xlane.f32.xlu0 %v681
      %v683 = vpop.xlane.xlu0 %682
      %v684 = vsel %vm447, %v679, -inf
      %685 = vmax.xlane.f32.xlu0 %v684
      %v686 = vpop.xlane.xlu0 %685
      %v687 = vsub.f32 %v677, %v683
      %v688 = vsub.f32 %v679, %v686
      %v689 = vmul.f32 %v687, 1.442695
      %v690 = vpow.pop %v689
      %v691 = vmul.f32 %v688, 1.442695
      %v692 = vpow.pop %v691
      %v693 = vsel %vm447, %v690, 0.0
      %694 = vadd.xlane.f32.xlu0 %v693
      %v695 = vpop.xlane.xlu0 %694
      %v696 = vsel %vm447, %v692, 0.0
      %697 = vadd.xlane.f32.xlu0 %v696
      %v698 = vpop.xlane.xlu0 %697
      %v699 = vrcp.pop %v695
      %v700 = vrcp.pop %v698
      %v701 = vmul.f32 %v690, %v699
      %v702 = vmul.f32 %v692, %v700
      %v703 = vpack.c.bf16 %v701, %v701
      %v704 = vpack.c.bf16 %v702, %v702
      %v707 = vunpack.c.l.b16 %v703
      %v708 = vunpack.c.l.b16 %v704
      %v709 = vpack.c.b16 %v708, %v707
      %v712 = vunpack.c.l.b16 %v648
      %v713 = vunpack.c.l.b16 %v649
      %v714 = vpack.c.b16 %v713, %v712
      %v717 = vsel %vm447, %v709, 0
      %719 = vmatpush.bf16.msra.mxu0 0
      %720 = vmatpush.bf16.msra.mxu0 0
      %721 = vmatpush.bf16.msra.mxu0 0
      %722 = vmatpush.bf16.msra.mxu0 0
      %723 = vmatpush.bf16.msra.mxu0 0
      %724 = vmatpush.bf16.msra.mxu0 0
      %725 = vmatpush.bf16.msra.mxu0 0
      %726 = vmatpush.bf16.msra.mxu0 %v714
      %727 = vmatmul.bf16.gmra.mxu0 %v717
      %v728 = vpop.f32.mrf.mxu0
      %v729 = vadd.f32 0.0, %v728
      %v730 = vpop.f32.mrf.mxu0
      %v731 = vadd.f32 0.0, %v730
      %732 = vdwg.mxu0
      %733 = vst.msk [vmem:[#allocation4] sm:$0xff] %vm660, %v729
      %734 = vst.msk [vmem:[#allocation4 + $0x8] sm:$0xff] %vm660, %v731
      %735 = vrot.lane.b32.xlu0 %v654, 124
      %v736 = vpop.permute.xlu0 %735
      %737 = vrot.lane.b32.xlu0 %v659, 124
      %v738 = vpop.permute.xlu0 %737
      %v740 = vsel %vm660, %v736, 0
      %v743 = vsel %vm660, %v738, 0
      %745 = vmatpush.bf16.xpose.msra.mxu0 0
      %746 = vmatpush.bf16.xpose.msra.mxu0 0
      %747 = vmatpush.bf16.xpose.msra.mxu0 0
      %748 = vmatpush.bf16.xpose.msra.mxu0 0
      %749 = vmatpush.bf16.xpose.msra.mxu0 0
      %750 = vmatpush.bf16.xpose.msra.mxu0 0
      %751 = vmatpush.bf16.xpose.msra.mxu0 0
      %752 = vmatpush.bf16.xpose.msra.mxu0 %v743
      %753 = vmatmul.bf16.gmra.mxu0 %v740
      %v754 = vpop.f32.mrf.mxu0
      %v755 = vadd.f32 0.0, %v754
      %v756 = vpop.f32.mrf.mxu0
      %v757 = vadd.f32 0.0, %v756
      %758 = vdwg.mxu0
      %v759 = vsel %vm447, %v755, -inf
      %760 = vmax.xlane.f32.xlu0 %v759
      %v761 = vpop.xlane.xlu0 %760
      %v762 = vsel %vm447, %v757, -inf
      %763 = vmax.xlane.f32.xlu0 %v762
      %v764 = vpop.xlane.xlu0 %763
      %v765 = vsub.f32 %v755, %v761
      %v766 = vsub.f32 %v757, %v764
      %v767 = vmul.f32 %v765, 1.442695
      %v768 = vpow.pop %v767
      %v769 = vmul.f32 %v766, 1.442695
      %v770 = vpow.pop %v769
      %v771 = vsel %vm447, %v768, 0.0
      %772 = vadd.xlane.f32.xlu0 %v771
      %v773 = vpop.xlane.xlu0 %772
      %v774 = vsel %vm447, %v770, 0.0
      %775 = vadd.xlane.f32.xlu0 %v774
      %v776 = vpop.xlane.xlu0 %775
      %v777 = vrcp.pop %v773
      %v778 = vrcp.pop %v776
      %v779 = vmul.f32 %v768, %v777
      %v780 = vmul.f32 %v770, %v778
      %v781 = vpack.c.bf16 %v779, %v779
      %v782 = vpack.c.bf16 %v780, %v780
      %v785 = vunpack.c.l.b16 %v781
      %v786 = vunpack.c.l.b16 %v782
      %v787 = vpack.c.b16 %v786, %v785
      %788 = vrot.lane.b32.xlu0 %v714, 124
      %v789 = vpop.permute.xlu0 %788
      %v792 = vsel %vm447, %v787, 0
      %794 = vmatpush.bf16.msra.mxu0 0
      %795 = vmatpush.bf16.msra.mxu0 0
      %796 = vmatpush.bf16.msra.mxu0 0
      %797 = vmatpush.bf16.msra.mxu0 0
      %798 = vmatpush.bf16.msra.mxu0 0
      %799 = vmatpush.bf16.msra.mxu0 0
      %800 = vmatpush.bf16.msra.mxu0 0
      %801 = vmatpush.bf16.msra.mxu0 %v789
      %802 = vmatmul.bf16.gmra.mxu0 %v792
      %v803 = vpop.f32.mrf.mxu0
      %v804 = vadd.f32 0.0, %v803
      %v805 = vpop.f32.mrf.mxu0
      %v806 = vadd.f32 0.0, %v805
      %807 = vdwg.mxu0
      %810 = vrot.lane.b32.xlu0 %v804, 4
      %v811 = vpop.permute.xlu0 %810
      %812 = vrot.lane.b32.xlu0 %v806, 4
      %v813 = vpop.permute.xlu0 %812
      %vm816 = vcmask 64544
      %817 = vst.msk [vmem:[#allocation4] sm:$0xff] %vm816, %v811
      %818 = vst.msk [vmem:[#allocation4 + $0x8] sm:$0xff] %vm816, %v813
      %819 = vrot.lane.b32.xlu0 %v654, 120
      %v820 = vpop.permute.xlu0 %819
      %821 = vrot.lane.b32.xlu0 %v659, 120
      %v822 = vpop.permute.xlu0 %821
      %v824 = vsel %vm660, %v820, 0
      %v827 = vsel %vm660, %v822, 0
      %829 = vmatpush.bf16.xpose.msra.mxu0 0
      %830 = vmatpush.bf16.xpose.msra.mxu0 0
      %831 = vmatpush.bf16.xpose.msra.mxu0 0
      %832 = vmatpush.bf16.xpose.msra.mxu0 0
      %833 = vmatpush.bf16.xpose.msra.mxu0 0
      %834 = vmatpush.bf16.xpose.msra.mxu0 0
      %835 = vmatpush.bf16.xpose.msra.mxu0 0
      %836 = vmatpush.bf16.xpose.msra.mxu0 %v827
      %837 = vmatmul.bf16.gmra.mxu0 %v824
      %v838 = vpop.f32.mrf.mxu0
      %v839 = vadd.f32 0.0, %v838
      %v840 = vpop.f32.mrf.mxu0
      %v841 = vadd.f32 0.0, %v840
      %842 = vdwg.mxu0
      %v843 = vsel %vm447, %v839, -inf
      %844 = vmax.xlane.f32.xlu0 %v843
      %v845 = vpop.xlane.xlu0 %844
      %v846 = vsel %vm447, %v841, -inf
      %847 = vmax.xlane.f32.xlu0 %v846
      %v848 = vpop.xlane.xlu0 %847
      %v849 = vsub.f32 %v839, %v845
      %v850 = vsub.f32 %v841, %v848
      %v851 = vmul.f32 %v849, 1.442695
      %v852 = vpow.pop %v851
      %v853 = vmul.f32 %v850, 1.442695
      %v854 = vpow.pop %v853
      %v855 = vsel %vm447, %v852, 0.0
      %856 = vadd.xlane.f32.xlu0 %v855
      %v857 = vpop.xlane.xlu0 %856
      %v858 = vsel %vm447, %v854, 0.0
      %859 = vadd.xlane.f32.xlu0 %v858
      %v860 = vpop.xlane.xlu0 %859
      %v861 = vrcp.pop %v857
      %v862 = vrcp.pop %v860
      %v863 = vmul.f32 %v852, %v861
      %v864 = vmul.f32 %v854, %v862
      %v865 = vpack.c.bf16 %v863, %v863
      %v866 = vpack.c.bf16 %v864, %v864
      %v869 = vunpack.c.l.b16 %v865
      %v870 = vunpack.c.l.b16 %v866
      %v871 = vpack.c.b16 %v870, %v869
      %872 = vrot.lane.b32.xlu0 %v714, 120
      %v873 = vpop.permute.xlu0 %872
      %v876 = vsel %vm447, %v871, 0
      %878 = vmatpush.bf16.msra.mxu0 0
      %879 = vmatpush.bf16.msra.mxu0 0
      %880 = vmatpush.bf16.msra.mxu0 0
      %881 = vmatpush.bf16.msra.mxu0 0
      %882 = vmatpush.bf16.msra.mxu0 0
      %883 = vmatpush.bf16.msra.mxu0 0
      %884 = vmatpush.bf16.msra.mxu0 0
      %885 = vmatpush.bf16.msra.mxu0 %v873
      %886 = vmatmul.bf16.gmra.mxu0 %v876
      %v887 = vpop.f32.mrf.mxu0
      %v888 = vadd.f32 0.0, %v887
      %v889 = vpop.f32.mrf.mxu0
      %v890 = vadd.f32 0.0, %v889
      %891 = vdwg.mxu0
      %894 = vrot.lane.b32.xlu0 %v888, 8
      %v895 = vpop.permute.xlu0 %894
      %896 = vrot.lane.b32.xlu0 %v890, 8
      %v897 = vpop.permute.xlu0 %896
      %vm900 = vcmask 97344
      %901 = vst.msk [vmem:[#allocation4] sm:$0xff] %vm900, %v895
      %902 = vst.msk [vmem:[#allocation4 + $0x8] sm:$0xff] %vm900, %v897
      %903 = vrot.lane.b32.xlu0 %v654, 116
      %v904 = vpop.permute.xlu0 %903
      %905 = vrot.lane.b32.xlu0 %v659, 116
      %v906 = vpop.permute.xlu0 %905
      %v908 = vsel %vm660, %v904, 0
      %v911 = vsel %vm660, %v906, 0
      %913 = vmatpush.bf16.xpose.msra.mxu0 0
      %914 = vmatpush.bf16.xpose.msra.mxu0 0
      %915 = vmatpush.bf16.xpose.msra.mxu0 0
      %916 = vmatpush.bf16.xpose.msra.mxu0 0
      %917 = vmatpush.bf16.xpose.msra.mxu0 0
      %918 = vmatpush.bf16.xpose.msra.mxu0 0
      %919 = vmatpush.bf16.xpose.msra.mxu0 0
      %920 = vmatpush.bf16.xpose.msra.mxu0 %v911
      %921 = vmatmul.bf16.gmra.mxu0 %v908
      %v922 = vpop.f32.mrf.mxu0
      %v923 = vadd.f32 0.0, %v922
      %v924 = vpop.f32.mrf.mxu0
      %v925 = vadd.f32 0.0, %v924
      %926 = vdwg.mxu0
      %v927 = vsel %vm447, %v923, -inf
      %928 = vmax.xlane.f32.xlu0 %v927
      %v929 = vpop.xlane.xlu0 %928
      %v930 = vsel %vm447, %v925, -inf
      %931 = vmax.xlane.f32.xlu0 %v930
      %v932 = vpop.xlane.xlu0 %931
      %v933 = vsub.f32 %v923, %v929
      %v934 = vsub.f32 %v925, %v932
      %v935 = vmul.f32 %v933, 1.442695
      %v936 = vpow.pop %v935
      %v937 = vmul.f32 %v934, 1.442695
      %v938 = vpow.pop %v937
      %v939 = vsel %vm447, %v936, 0.0
      %940 = vadd.xlane.f32.xlu0 %v939
      %v941 = vpop.xlane.xlu0 %940
      %v942 = vsel %vm447, %v938, 0.0
      %943 = vadd.xlane.f32.xlu0 %v942
      %v944 = vpop.xlane.xlu0 %943
      %v945 = vrcp.pop %v941
      %v946 = vrcp.pop %v944
      %v947 = vmul.f32 %v936, %v945
      %v948 = vmul.f32 %v938, %v946
      %v949 = vpack.c.bf16 %v947, %v947
      %v950 = vpack.c.bf16 %v948, %v948
      %v953 = vunpack.c.l.b16 %v949
      %v954 = vunpack.c.l.b16 %v950
      %v955 = vpack.c.b16 %v954, %v953
      %956 = vrot.lane.b32.xlu0 %v714, 116
      %v957 = vpop.permute.xlu0 %956
      %v960 = vsel %vm447, %v955, 0
      %962 = vmatpush.bf16.msra.mxu0 0
      %963 = vmatpush.bf16.msra.mxu0 0
      %964 = vmatpush.bf16.msra.mxu0 0
      %965 = vmatpush.bf16.msra.mxu0 0
      %966 = vmatpush.bf16.msra.mxu0 0
      %967 = vmatpush.bf16.msra.mxu0 0
      %968 = vmatpush.bf16.msra.mxu0 0
      %969 = vmatpush.bf16.msra.mxu0 %v957
      %970 = vmatmul.bf16.gmra.mxu0 %v960
      %v971 = vpop.f32.mrf.mxu0
      %v972 = vadd.f32 0.0, %v971
      %v973 = vpop.f32.mrf.mxu0
      %v974 = vadd.f32 0.0, %v973
      %975 = vdwg.mxu0
      %978 = vrot.lane.b32.xlu0 %v972, 12
      %v979 = vpop.permute.xlu0 %978
      %980 = vrot.lane.b32.xlu0 %v974, 12
      %v981 = vpop.permute.xlu0 %980
      %vm984 = vcmask 130144
      %985 = vst.msk [vmem:[#allocation4] sm:$0xff] %vm984, %v979
      %986 = vst.msk [vmem:[#allocation4 + $0x8] sm:$0xff] %vm984, %v981
      %v987 = vld [vmem:[#allocation4] sm:$0xff]
      %v988 = vld [vmem:[#allocation4 + $0x8] sm:$0xff]
      %v989 = vpack.c.bf16 %v988, %v987
      %v990 = vld [vmem:[%s11] sm:$0xf]
      %v991 = vld [vmem:[%s11 + $0x4] sm:$0xf]
      %v992 = vld [vmem:[%s12] sm:$0x1]
      %v994 = vperm.slane %v992, 0
      %v998 = vunpack.c.l.b16 %v990
      %v999 = vunpack.c.l.b16 %v991
      %v1000 = vpack.c.b16 %v999, %v998
      %v1003 = vsel %vm447, %v989, 0
      %1005 = vmatpush.bf16.msra.mxu0 0
      %1006 = vmatpush.bf16.msra.mxu0 0
      %1007 = vmatpush.bf16.msra.mxu0 0
      %1008 = vmatpush.bf16.msra.mxu0 0
      %1009 = vmatpush.bf16.msra.mxu0 0
      %1010 = vmatpush.bf16.msra.mxu0 0
      %1011 = vmatpush.bf16.msra.mxu0 0
      %1012 = vmatpush.bf16.msra.mxu0 %v1000
      %1013 = vmatmul.bf16.gmra.mxu0 %v1003
      %v1014 = vpop.f32.mrf.mxu0
      %v1015 = vadd.f32 %v994, %v1014
      %v1016 = vpop.f32.mrf.mxu0
      %v1017 = vadd.f32 %v994, %v1016
      %1018 = vdwg.mxu0
      %v1019 = vadd.f32 %v1015, %v442
      %v1020 = vadd.f32 %v1017, %v443
      %v1021 = vmax.f32 %v1019, 0.0
      %v1022 = vmax.f32 %v1020, 0.0
      %1023 = vst.msk [vmem:[%s440] sm:$0xff] %vm447, %v1021
      %1024 = vst.msk [vmem:[%s440 + $0x8] sm:$0xff] %vm447, %v1022
      %p1025 = scmp.lt.s32.totalorder %s24, 1
      %s1026 = scalar_select %p1025, %s24, 1
      %s1027 = smul.addr %s1026, 2
      %s1028 = smul.addr %s1027, 8
      %s1029 = scalar_lea.vmem %s13, %s1028
      // Predicated region
      $region73: #{temporal_conv_net.3} parent=71 // pred_check
        %p1030 = pneg %p320
      $region74: #{temporal_conv_net.3} parent=71 // pred_check_branch
        %1032 = sbr.rel (%p1030) target = $region76
      $region75: #{temporal_conv_net.3} parent=71 // pred_region
        _
      $region76: #{temporal_conv_net.3} parent=71 // pred_fallthru
        _
    $region72: #{temporal_conv_net.3} parent=5 // pred_fallthru
      _
    %p1033 = scmp.le.s32.totalorder 2, %s19
    // Predicated region
    $region77: #{temporal_conv_net.3} parent=5 // pred_check
      %p1034 = pneg %p1033
    $region78: #{temporal_conv_net.3} parent=5 // pred_check_branch
      %1036 = sbr.rel (%p1034) target = $region80
    $region79: #{temporal_conv_net.3} parent=5 // pred_region
      %s1037 = ssub.s32 %s19, 2
      // Predicated region
      $region81: #{temporal_conv_net.3} parent=79 // pred_check
        %p1038 = pneg %p326
      $region82: #{temporal_conv_net.3} parent=79 // pred_check_branch
        %1040 = sbr.rel (%p1038) target = $region84
      $region83: #{temporal_conv_net.3} parent=79 // pred_region
        %p1041 = scmp.lt.s32.totalorder %s25, 1
        %s1042 = scalar_select %p1041, %s25, 1
        %s1043 = smul.addr %s1042, 2
        %s1044 = smul.addr %s1043, 8
        %s1045 = scalar_lea.vmem %s13, %s1044
      $region84: #{temporal_conv_net.3} parent=79 // pred_fallthru
        _
    $region80: #{temporal_conv_net.3} parent=5 // pred_fallthru
      _
  $region6: #{temporal_conv_net.3} parent=0 // loop_footer
    %s23 = sadd.s32 1, %s19
  $region7: #{temporal_conv_net.3} parent=0 // loop_footer_branch
    %18 = sbr.rel target = $region3
  $region8: #{temporal_conv_net.3} parent=0 // loop_exit
    _

</llo_original>
